<compile_context>
chip_gen: v7x
topology: tpu7x:2x2x1
jax: 0.10.0
libtpu: 0.0.40
codegen_flags: <defaults>
</compile_context>

<pallas_src>
import functools

import jax
import jax.numpy as jnp
from jax.experimental import pallas as pl
from jax.experimental.pallas import tpu as pltpu

# mirrors config['p'], config['d_latent'], config['num_layer'], config['future']
CFG = dict(p=16, d_latent=32, num_layer=2, future=4, timesteps=8)


def _round_up(x, m):
    return ((x + m - 1) // m) * m


# ------------------------- elementwise helpers (in-kernel) --------------------
def _elu(x):
    # torch.nn.ELU(alpha=1.0)
    return jnp.where(x > 0.0, x, jnp.exp(jnp.minimum(x, 0.0)) - 1.0)


def _softplus(x):
    # torch.nn.Softplus(beta=1, threshold=20); overflow-safe and accurate for
    # negative x: softplus(x) = max(x,0) + log(1 + exp(-|x|)).
    return jnp.maximum(x, 0.0) + jnp.log(1.0 + jnp.exp(-jnp.abs(x)))


# --------------------------- fully fused TLAE kernel --------------------------
def tlae_fused_kernel(ctx_ref, noise_ref,
                      ew1, eb1, ew2, eb2, ew3, eb3,
                      lw, lb,
                      dw1, db1, dw2, db2, dw3, db3,
                      xhat_ref, fmu_ref, fz_ref,
                      *, T, L, future, d, deterministic):
    # ctx_ref:   (T, B_pad, p)        time-major, sublane-padded context
    # noise_ref: (future, B_pad, d)   pre-sampled Gaussian noise
    # e*/d*:     encoder/decoder Linear weights (bf16) and biases (f32)
    # lw:        (L, 2d, 4d) bf16     fused [W_ih.T ; W_hh.T], gates i,f,g,o on lanes
    # lb:        (L, 1, 4d)  f32      folded b_ih + b_hh
    # xhat_ref:  ((T+future)*B_pad, P_PAD)
    # fmu_ref / fz_ref: (B_pad, future*d)
    f32 = jnp.float32
    B_pad = ctx_ref.shape[1]
    p_in = ctx_ref.shape[2]

    def mxu(a, w):
        # bf16 operands, f32 accumulation (MXU-native on v5e/v6e/v7x).
        return jnp.dot(a.astype(jnp.bfloat16), w, preferred_element_type=f32)

    # ---------------- encoder MLP: (T*B_pad, p) -> (T*B_pad, d) ----------------
    x = ctx_ref[...].reshape(T * B_pad, p_in)
    hdn = _elu(mxu(x, ew1[...]) + eb1[...])
    hdn = _elu(mxu(hdn, ew2[...]) + eb2[...])
    z_flat = mxu(hdn, ew3[...]) + eb3[...]                     # (T*B_pad, d) f32

    # ---------------- LSTM: fused-gate cell -----------------------------------
    w = [lw[l] for l in range(L)]                              # (2d, 4d) bf16
    b = [lb[l] for l in range(L)]                              # (1, 4d)  f32

    # One sigmoid pass over all 4 gate blocks (128 lanes); g-gate lanes are
    # pre-scaled by 2 so tanh(g) = 2*sigmoid(2g) - 1 falls out of the same pass.
    lane = jax.lax.broadcasted_iota(jnp.int32, (1, 4 * d), 1)
    g_scale = jnp.where((lane >= 2 * d) & (lane < 3 * d), 2.0, 1.0).astype(f32)

    def gates_to_hc(gates, c_prev):
        s = jax.nn.sigmoid(gates * g_scale)                    # one EUP pass
        i_g = s[:, 0:d]
        f_g = s[:, d:2 * d]
        g_g = 2.0 * s[:, 2 * d:3 * d] - 1.0                    # == tanh(raw g)
        o_g = s[:, 3 * d:4 * d]
        c_new = f_g * c_prev + i_g * g_g
        h_new = o_g * jnp.tanh(c_new)
        return h_new, c_new

    zero = jnp.zeros((B_pad, d), f32)
    h = [zero] * L
    c = [zero] * L

    # Context window: hoist ALL layer-0 input projections out of the serial
    # chain into one batched (T*B_pad, d) @ (d, 4d) matmul.
    xproj = (mxu(z_flat, w[0][:d, :]) + b[0]).reshape(T, B_pad, 4 * d)
    w0_hh = w[0][d:, :]                                        # recurrent part
    for t in range(T):                                         # T static: unrolled
        g0 = xproj[t] + mxu(h[0], w0_hh)
        h[0], c[0] = gates_to_hc(g0, c[0])
        xl = h[0]
        for l in range(1, L):
            gl = mxu(jnp.concatenate([xl, h[l]], axis=-1), w[l]) + b[l]
            h[l], c[l] = gates_to_hc(gl, c[l])
            xl = h[l]
    top = h[L - 1]

    # Autoregressive roll-out: exactly mirrors get_prior(); h/c stay resident.
    mu_list = [top]
    z_prev = top + noise_ref[0]
    z_list = [z_prev]
    mu_prev = top
    for s in range(1, future):                                 # future static
        xl = mu_prev if deterministic else z_prev
        for l in range(L):
            gl = mxu(jnp.concatenate([xl, h[l]], axis=-1), w[l]) + b[l]
            h[l], c[l] = gates_to_hc(gl, c[l])
            xl = h[l]
        mu_list.append(xl)
        mu_prev = xl
        z_prev = xl + noise_ref[s]
        z_list.append(z_prev)

    # Lane-dense (B_pad, future*d) stores instead of 2*future masked 32-lane stores.
    fmu_ref[...] = jnp.concatenate(mu_list, axis=-1)
    fz_ref[...] = jnp.concatenate(z_list, axis=-1)

    # ---------------- decoder MLP (+ Softplus) over [z ; future_z] -------------
    dec_in = jnp.concatenate([z_flat] + z_list, axis=0)        # ((T+future)*B_pad, d)
    hdn = _elu(mxu(dec_in, dw1[...]) + db1[...])
    hdn = _elu(mxu(hdn, dw2[...]) + db2[...])
    xhat_ref[...] = _softplus(mxu(hdn, dw3[...]) + db3[...])   # lane-dense (.., 128)


# ------------------------- deterministic parameter init -----------------------
def init_params(key, cfg):
    p, d, L = cfg['p'], cfg['d_latent'], cfg['num_layer']
    keys = iter(jax.random.split(key, 64))

    def _uniform(shape, fan_in):
        k = 1.0 / float(fan_in) ** 0.5
        return jax.random.uniform(next(keys), shape, jnp.float32, -k, k)

    def linear(din, dout):
        # stored as (din, dout) so kernels do x @ W (PyTorch stores (dout, din))
        return _uniform((din, dout), din), _uniform((1, dout), din)

    enc = [linear(p, d), linear(d, d), linear(d, d)]
    dec = [linear(d, d), linear(d, d), linear(d, p)]

    # Fused LSTM weights: per layer, rows = [W_ih.T ; W_hh.T] (2d rows), columns
    # = all 4 gates in PyTorch nn.LSTM order [i, f, g, o] (4d lanes).
    lstm_w = _uniform((L, 2 * d, 4 * d), d)
    lstm_b = _uniform((L, 1, 4 * d), d) + _uniform((L, 1, 4 * d), d)  # b_ih + b_hh
    return dict(enc=enc, dec=dec, lstm_w=lstm_w, lstm_b=lstm_b)


# ------------------------- TLAE forward (get_prior + decoder) ------------------
def tlae_forward(params, context, key, cfg, deterministic=False):
    B, T, p = context.shape
    d, future, L = cfg['d_latent'], cfg['future'], cfg['num_layer']
    B_pad = _round_up(max(B, 8), 8)          # pad batch to a full sublane group
    P_PAD = _round_up(p, 128)                # lane-dense decoder output slab

    # Tiny wrapper glue: time-major sublane-padded context + pre-sampled noise.
    ctx_tm = jnp.pad(jnp.transpose(context, (1, 0, 2)),
                     ((0, 0), (0, B_pad - B), (0, 0)))
    noise = jax.random.normal(key, (future, B_pad, d), jnp.float32)

    (ew1, eb1), (ew2, eb2), (ew3, eb3) = params['enc']
    (dw1, db1), (dw2, db2), (dw3, db3) = params['dec']
    dw3p = jnp.pad(dw3, ((0, 0), (0, P_PAD - p)))
    db3p = jnp.pad(db3, ((0, 0), (0, P_PAD - p)))

    bf = lambda a: a.astype(jnp.bfloat16)    # MXU operands; biases stay f32

    kern = functools.partial(tlae_fused_kernel, T=T, L=L, future=future, d=d,
                             deterministic=deterministic)
    vmem = pl.BlockSpec(memory_space=pltpu.MemorySpace.VMEM)

    xhat_flat, fmu, fz = pl.pallas_call(
        kern,
        out_shape=(jax.ShapeDtypeStruct(((T + future) * B_pad, P_PAD), jnp.float32),
                   jax.ShapeDtypeStruct((B_pad, future * d), jnp.float32),
                   jax.ShapeDtypeStruct((B_pad, future * d), jnp.float32)),
        in_specs=[vmem] * 16,
        out_specs=(vmem, vmem, vmem),
    )(ctx_tm, noise,
      bf(ew1), eb1, bf(ew2), eb2, bf(ew3), eb3,
      bf(params['lstm_w']), params['lstm_b'],
      bf(dw1), db1, bf(dw2), db2, bf(dw3p), db3p)

    xhat = jnp.transpose(xhat_flat.reshape(T + future, B_pad, P_PAD),
                         (1, 0, 2))[:B, :, :p]                 # (B, T+future, p)
    future_mu = fmu.reshape(B_pad, future, d)[:B]              # (B, future, d)
    future_z = fz.reshape(B_pad, future, d)[:B]                # (B, future, d)
    return xhat, future_mu, future_z


if __name__ == "__main__":
    key = jax.random.PRNGKey(0)
    pkey, xkey, nkey = jax.random.split(key, 3)

    params = init_params(pkey, CFG)

    B, T, p = 2, CFG['timesteps'], CFG['p']
    context = jax.random.normal(xkey, (B, T, p), jnp.float32)

    fwd = jax.jit(functools.partial(tlae_forward, cfg=CFG, deterministic=False))
    xhat, future_mu, future_z = fwd(params, context, nkey)
    jax.block_until_ready((xhat, future_mu, future_z))

    assert xhat.shape == (B, T + CFG['future'], p)
    assert future_mu.shape == (B, CFG['future'], CFG['d_latent'])
    assert future_z.shape == (B, CFG['future'], CFG['d_latent'])
    assert bool(jnp.all(xhat >= 0.0))          # Softplus output is non-negative
    assert bool(jnp.all(jnp.isfinite(xhat)))
    assert bool(jnp.all(jnp.isfinite(future_mu)))
    assert bool(jnp.all(jnp.isfinite(future_z)))

    print("KERNEL_OK")
</pallas_src>

<mosaic_0001>
module attributes {stable_mosaic.version = 11 : i64} {
  func.func @tlae_fused_kernel(%arg0: memref<8x8x16xf32, #tpu.memory_space<vmem>>, %arg1: memref<4x8x32xf32, #tpu.memory_space<vmem>>, %arg2: memref<16x32xbf16, #tpu.memory_space<vmem>>, %arg3: memref<1x32xf32, #tpu.memory_space<vmem>>, %arg4: memref<32x32xbf16, #tpu.memory_space<vmem>>, %arg5: memref<1x32xf32, #tpu.memory_space<vmem>>, %arg6: memref<32x32xbf16, #tpu.memory_space<vmem>>, %arg7: memref<1x32xf32, #tpu.memory_space<vmem>>, %arg8: memref<2x64x128xbf16, #tpu.memory_space<vmem>>, %arg9: memref<2x1x128xf32, #tpu.memory_space<vmem>>, %arg10: memref<32x32xbf16, #tpu.memory_space<vmem>>, %arg11: memref<1x32xf32, #tpu.memory_space<vmem>>, %arg12: memref<32x32xbf16, #tpu.memory_space<vmem>>, %arg13: memref<1x32xf32, #tpu.memory_space<vmem>>, %arg14: memref<32x128xbf16, #tpu.memory_space<vmem>>, %arg15: memref<1x128xf32, #tpu.memory_space<vmem>>, %arg16: memref<96x128xf32, #tpu.memory_space<vmem>>, %arg17: memref<8x128xf32, #tpu.memory_space<vmem>>, %arg18: memref<8x128xf32, #tpu.memory_space<vmem>>) attributes {dimension_semantics = [], scalar_prefetch = 0 : i64, scratch_operands = 0 : i64, tpu.core_type = #tpu.core_type<tc>} {
    %c0 = arith.constant 0 : index
    %c0_0 = arith.constant 0 : index
    %c0_1 = arith.constant 0 : index
    %0 = vector.load %arg0[%c0, %c0_0, %c0_1] : memref<8x8x16xf32, #tpu.memory_space<vmem>>, vector<8x8x16xf32>
    %1 = vector.shape_cast %0 : vector<8x8x16xf32> to vector<64x16xf32>
    %c0_2 = arith.constant 0 : index
    %c0_3 = arith.constant 0 : index
    %2 = vector.load %arg2[%c0_2, %c0_3] : memref<16x32xbf16, #tpu.memory_space<vmem>>, vector<16x32xbf16>
    %3 = arith.truncf %1 : vector<64x16xf32> to vector<64x16xbf16>
    %cst = arith.constant dense<0.000000e+00> : vector<64x32xf32>
    %4 = tpu.matmul %3, %2, %cst {dimension_numbers = #tpu.dot_dimension_numbers<[1], [0], [0], [1], [0, 0, 1, 1], [], []>} : vector<64x16xbf16>, vector<16x32xbf16>, vector<64x32xf32> -> vector<64x32xf32>
    %c0_4 = arith.constant 0 : index
    %c0_5 = arith.constant 0 : index
    %5 = vector.load %arg3[%c0_4, %c0_5] : memref<1x32xf32, #tpu.memory_space<vmem>>, vector<1x32xf32>
    %6 = vector.broadcast %5 : vector<1x32xf32> to vector<64x32xf32>
    %7 = arith.addf %4, %6 : vector<64x32xf32>
    %cst_6 = arith.constant 0.000000e+00 : f32
    %8 = vector.broadcast %cst_6 : f32 to vector<64x32xf32>
    %9 = arith.cmpf ogt, %7, %8 : vector<64x32xf32>
    %cst_7 = arith.constant 0.000000e+00 : f32
    %10 = vector.broadcast %cst_7 : f32 to vector<64x32xf32>
    %11 = arith.minimumf %7, %10 : vector<64x32xf32>
    %12 = math.exp %11 : vector<64x32xf32>
    %cst_8 = arith.constant 1.000000e+00 : f32
    %13 = vector.broadcast %cst_8 : f32 to vector<64x32xf32>
    %14 = arith.subf %12, %13 : vector<64x32xf32>
    %15 = arith.select %9, %7, %14 : vector<64x32xi1>, vector<64x32xf32>
    %c0_9 = arith.constant 0 : index
    %c0_10 = arith.constant 0 : index
    %16 = vector.load %arg4[%c0_9, %c0_10] : memref<32x32xbf16, #tpu.memory_space<vmem>>, vector<32x32xbf16>
    %17 = arith.truncf %15 : vector<64x32xf32> to vector<64x32xbf16>
    %cst_11 = arith.constant dense<0.000000e+00> : vector<64x32xf32>
    %18 = tpu.matmul %17, %16, %cst_11 {dimension_numbers = #tpu.dot_dimension_numbers<[1], [0], [0], [1], [0, 0, 1, 1], [], []>} : vector<64x32xbf16>, vector<32x32xbf16>, vector<64x32xf32> -> vector<64x32xf32>
    %c0_12 = arith.constant 0 : index
    %c0_13 = arith.constant 0 : index
    %19 = vector.load %arg5[%c0_12, %c0_13] : memref<1x32xf32, #tpu.memory_space<vmem>>, vector<1x32xf32>
    %20 = vector.broadcast %19 : vector<1x32xf32> to vector<64x32xf32>
    %21 = arith.addf %18, %20 : vector<64x32xf32>
    %cst_14 = arith.constant 0.000000e+00 : f32
    %22 = vector.broadcast %cst_14 : f32 to vector<64x32xf32>
    %23 = arith.cmpf ogt, %21, %22 : vector<64x32xf32>
    %cst_15 = arith.constant 0.000000e+00 : f32
    %24 = vector.broadcast %cst_15 : f32 to vector<64x32xf32>
    %25 = arith.minimumf %21, %24 : vector<64x32xf32>
    %26 = math.exp %25 : vector<64x32xf32>
    %cst_16 = arith.constant 1.000000e+00 : f32
    %27 = vector.broadcast %cst_16 : f32 to vector<64x32xf32>
    %28 = arith.subf %26, %27 : vector<64x32xf32>
    %29 = arith.select %23, %21, %28 : vector<64x32xi1>, vector<64x32xf32>
    %c0_17 = arith.constant 0 : index
    %c0_18 = arith.constant 0 : index
    %30 = vector.load %arg6[%c0_17, %c0_18] : memref<32x32xbf16, #tpu.memory_space<vmem>>, vector<32x32xbf16>
    %31 = arith.truncf %29 : vector<64x32xf32> to vector<64x32xbf16>
    %cst_19 = arith.constant dense<0.000000e+00> : vector<64x32xf32>
    %32 = tpu.matmul %31, %30, %cst_19 {dimension_numbers = #tpu.dot_dimension_numbers<[1], [0], [0], [1], [0, 0, 1, 1], [], []>} : vector<64x32xbf16>, vector<32x32xbf16>, vector<64x32xf32> -> vector<64x32xf32>
    %c0_20 = arith.constant 0 : index
    %c0_21 = arith.constant 0 : index
    %33 = vector.load %arg7[%c0_20, %c0_21] : memref<1x32xf32, #tpu.memory_space<vmem>>, vector<1x32xf32>
    %34 = vector.broadcast %33 : vector<1x32xf32> to vector<64x32xf32>
    %35 = arith.addf %32, %34 : vector<64x32xf32>
    %c0_22 = arith.constant 0 : index
    %c0_23 = arith.constant 0 : index
    %c0_24 = arith.constant 0 : index
    %36 = vector.load %arg8[%c0_22, %c0_23, %c0_24] : memref<2x64x128xbf16, #tpu.memory_space<vmem>>, vector<1x64x128xbf16>
    %37 = vector.shape_cast %36 : vector<1x64x128xbf16> to vector<64x128xbf16>
    %c1 = arith.constant 1 : index
    %c0_25 = arith.constant 0 : index
    %c0_26 = arith.constant 0 : index
    %38 = vector.load %arg8[%c1, %c0_25, %c0_26] : memref<2x64x128xbf16, #tpu.memory_space<vmem>>, vector<1x64x128xbf16>
    %39 = vector.shape_cast %38 : vector<1x64x128xbf16> to vector<64x128xbf16>
    %c0_27 = arith.constant 0 : index
    %c0_28 = arith.constant 0 : index
    %c0_29 = arith.constant 0 : index
    %40 = vector.load %arg9[%c0_27, %c0_28, %c0_29] : memref<2x1x128xf32, #tpu.memory_space<vmem>>, vector<1x1x128xf32>
    %41 = vector.shape_cast %40 : vector<1x1x128xf32> to vector<1x128xf32>
    %c1_30 = arith.constant 1 : index
    %c0_31 = arith.constant 0 : index
    %c0_32 = arith.constant 0 : index
    %42 = vector.load %arg9[%c1_30, %c0_31, %c0_32] : memref<2x1x128xf32, #tpu.memory_space<vmem>>, vector<1x1x128xf32>
    %43 = vector.shape_cast %42 : vector<1x1x128xf32> to vector<1x128xf32>
    %44 = tpu.iota {dimensions = array<i32: 1>} : vector<1x128xi32>
    %c64_i32 = arith.constant 64 : i32
    %45 = vector.broadcast %c64_i32 : i32 to vector<1x128xi32>
    %46 = arith.cmpi sge, %44, %45 : vector<1x128xi32>
    %c96_i32 = arith.constant 96 : i32
    %47 = vector.broadcast %c96_i32 : i32 to vector<1x128xi32>
    %48 = arith.cmpi slt, %44, %47 : vector<1x128xi32>
    %49 = arith.andi %46, %48 : vector<1x128xi1>
    %cst_33 = arith.constant 2.000000e+00 : f32
    %cst_34 = arith.constant 1.000000e+00 : f32
    %50 = vector.broadcast %cst_33 : f32 to vector<1x128xf32>
    %51 = vector.broadcast %cst_34 : f32 to vector<1x128xf32>
    %52 = arith.select %49, %50, %51 : vector<1x128xi1>, vector<1x128xf32>
    %cst_35 = arith.constant 0.000000e+00 : f32
    %53 = vector.broadcast %cst_35 : f32 to vector<8x32xf32>
    %54 = vector.extract_strided_slice %37 {offsets = [0, 0], sizes = [32, 128], strides = [1, 1]} : vector<64x128xbf16> to vector<32x128xbf16>
    %55 = arith.truncf %35 : vector<64x32xf32> to vector<64x32xbf16>
    %cst_36 = arith.constant dense<0.000000e+00> : vector<64x128xf32>
    %56 = tpu.matmul %55, %54, %cst_36 {dimension_numbers = #tpu.dot_dimension_numbers<[1], [0], [0], [1], [0, 0, 1, 1], [], []>} : vector<64x32xbf16>, vector<32x128xbf16>, vector<64x128xf32> -> vector<64x128xf32>
    %57 = vector.broadcast %41 : vector<1x128xf32> to vector<64x128xf32>
    %58 = arith.addf %56, %57 : vector<64x128xf32>
    %59 = vector.shape_cast %58 : vector<64x128xf32> to vector<8x8x128xf32>
    %60 = vector.extract_strided_slice %37 {offsets = [32, 0], sizes = [32, 128], strides = [1, 1]} : vector<64x128xbf16> to vector<32x128xbf16>
    %61 = vector.extract_strided_slice %59 {offsets = [0, 0, 0], sizes = [1, 8, 128], strides = [1, 1, 1]} : vector<8x8x128xf32> to vector<1x8x128xf32>
    %62 = vector.shape_cast %61 : vector<1x8x128xf32> to vector<8x128xf32>
    %63 = arith.truncf %53 : vector<8x32xf32> to vector<8x32xbf16>
    %cst_37 = arith.constant dense<0.000000e+00> : vector<8x128xf32>
    %64 = tpu.matmul %63, %60, %cst_37 {dimension_numbers = #tpu.dot_dimension_numbers<[1], [0], [0], [1], [0, 0, 1, 1], [], []>} : vector<8x32xbf16>, vector<32x128xbf16>, vector<8x128xf32> -> vector<8x128xf32>
    %65 = arith.addf %62, %64 : vector<8x128xf32>
    %66 = vector.broadcast %52 : vector<1x128xf32> to vector<8x128xf32>
    %67 = arith.mulf %65, %66 : vector<8x128xf32>
    %68 = arith.negf %67 : vector<8x128xf32>
    %69 = math.exp %68 : vector<8x128xf32>
    %cst_38 = arith.constant 1.000000e+00 : f32
    %70 = vector.broadcast %cst_38 : f32 to vector<8x128xf32>
    %71 = arith.addf %70, %69 : vector<8x128xf32>
    %72 = arith.divf %70, %71 : vector<8x128xf32>
    %73 = vector.extract_strided_slice %72 {offsets = [0, 0], sizes = [8, 32], strides = [1, 1]} : vector<8x128xf32> to vector<8x32xf32>
    %74 = vector.extract_strided_slice %72 {offsets = [0, 32], sizes = [8, 32], strides = [1, 1]} : vector<8x128xf32> to vector<8x32xf32>
    %75 = vector.extract_strided_slice %72 {offsets = [0, 64], sizes = [8, 32], strides = [1, 1]} : vector<8x128xf32> to vector<8x32xf32>
    %cst_39 = arith.constant 2.000000e+00 : f32
    %76 = vector.broadcast %cst_39 : f32 to vector<8x32xf32>
    %77 = arith.mulf %76, %75 : vector<8x32xf32>
    %cst_40 = arith.constant 1.000000e+00 : f32
    %78 = vector.broadcast %cst_40 : f32 to vector<8x32xf32>
    %79 = arith.subf %77, %78 : vector<8x32xf32>
    %80 = vector.extract_strided_slice %72 {offsets = [0, 96], sizes = [8, 32], strides = [1, 1]} : vector<8x128xf32> to vector<8x32xf32>
    %81 = arith.mulf %74, %53 : vector<8x32xf32>
    %82 = arith.mulf %73, %79 : vector<8x32xf32>
    %83 = arith.addf %81, %82 : vector<8x32xf32>
    %84 = math.tanh %83 : vector<8x32xf32>
    %85 = arith.mulf %80, %84 : vector<8x32xf32>
    %86 = tpu.concatenate %85, %53 in 1 : vector<8x32xf32>, vector<8x32xf32> -> vector<8x64xf32>
    %87 = arith.truncf %86 : vector<8x64xf32> to vector<8x64xbf16>
    %cst_41 = arith.constant dense<0.000000e+00> : vector<8x128xf32>
    %88 = tpu.matmul %87, %39, %cst_41 {dimension_numbers = #tpu.dot_dimension_numbers<[1], [0], [0], [1], [0, 0, 1, 1], [], []>} : vector<8x64xbf16>, vector<64x128xbf16>, vector<8x128xf32> -> vector<8x128xf32>
    %89 = vector.broadcast %43 : vector<1x128xf32> to vector<8x128xf32>
    %90 = arith.addf %88, %89 : vector<8x128xf32>
    %91 = vector.broadcast %52 : vector<1x128xf32> to vector<8x128xf32>
    %92 = arith.mulf %90, %91 : vector<8x128xf32>
    %93 = arith.negf %92 : vector<8x128xf32>
    %94 = math.exp %93 : vector<8x128xf32>
    %cst_42 = arith.constant 1.000000e+00 : f32
    %95 = vector.broadcast %cst_42 : f32 to vector<8x128xf32>
    %96 = arith.addf %95, %94 : vector<8x128xf32>
    %97 = arith.divf %95, %96 : vector<8x128xf32>
    %98 = vector.extract_strided_slice %97 {offsets = [0, 0], sizes = [8, 32], strides = [1, 1]} : vector<8x128xf32> to vector<8x32xf32>
    %99 = vector.extract_strided_slice %97 {offsets = [0, 32], sizes = [8, 32], strides = [1, 1]} : vector<8x128xf32> to vector<8x32xf32>
    %100 = vector.extract_strided_slice %97 {offsets = [0, 64], sizes = [8, 32], strides = [1, 1]} : vector<8x128xf32> to vector<8x32xf32>
    %cst_43 = arith.constant 2.000000e+00 : f32
    %101 = vector.broadcast %cst_43 : f32 to vector<8x32xf32>
    %102 = arith.mulf %101, %100 : vector<8x32xf32>
    %cst_44 = arith.constant 1.000000e+00 : f32
    %103 = vector.broadcast %cst_44 : f32 to vector<8x32xf32>
    %104 = arith.subf %102, %103 : vector<8x32xf32>
    %105 = vector.extract_strided_slice %97 {offsets = [0, 96], sizes = [8, 32], strides = [1, 1]} : vector<8x128xf32> to vector<8x32xf32>
    %106 = arith.mulf %99, %53 : vector<8x32xf32>
    %107 = arith.mulf %98, %104 : vector<8x32xf32>
    %108 = arith.addf %106, %107 : vector<8x32xf32>
    %109 = math.tanh %108 : vector<8x32xf32>
    %110 = arith.mulf %105, %109 : vector<8x32xf32>
    %111 = vector.extract_strided_slice %59 {offsets = [1, 0, 0], sizes = [1, 8, 128], strides = [1, 1, 1]} : vector<8x8x128xf32> to vector<1x8x128xf32>
    %112 = vector.shape_cast %111 : vector<1x8x128xf32> to vector<8x128xf32>
    %113 = arith.truncf %85 : vector<8x32xf32> to vector<8x32xbf16>
    %cst_45 = arith.constant dense<0.000000e+00> : vector<8x128xf32>
    %114 = tpu.matmul %113, %60, %cst_45 {dimension_numbers = #tpu.dot_dimension_numbers<[1], [0], [0], [1], [0, 0, 1, 1], [], []>} : vector<8x32xbf16>, vector<32x128xbf16>, vector<8x128xf32> -> vector<8x128xf32>
    %115 = arith.addf %112, %114 : vector<8x128xf32>
    %116 = vector.broadcast %52 : vector<1x128xf32> to vector<8x128xf32>
    %117 = arith.mulf %115, %116 : vector<8x128xf32>
    %118 = arith.negf %117 : vector<8x128xf32>
    %119 = math.exp %118 : vector<8x128xf32>
    %cst_46 = arith.constant 1.000000e+00 : f32
    %120 = vector.broadcast %cst_46 : f32 to vector<8x128xf32>
    %121 = arith.addf %120, %119 : vector<8x128xf32>
    %122 = arith.divf %120, %121 : vector<8x128xf32>
    %123 = vector.extract_strided_slice %122 {offsets = [0, 0], sizes = [8, 32], strides = [1, 1]} : vector<8x128xf32> to vector<8x32xf32>
    %124 = vector.extract_strided_slice %122 {offsets = [0, 32], sizes = [8, 32], strides = [1, 1]} : vector<8x128xf32> to vector<8x32xf32>
    %125 = vector.extract_strided_slice %122 {offsets = [0, 64], sizes = [8, 32], strides = [1, 1]} : vector<8x128xf32> to vector<8x32xf32>
    %cst_47 = arith.constant 2.000000e+00 : f32
    %126 = vector.broadcast %cst_47 : f32 to vector<8x32xf32>
    %127 = arith.mulf %126, %125 : vector<8x32xf32>
    %cst_48 = arith.constant 1.000000e+00 : f32
    %128 = vector.broadcast %cst_48 : f32 to vector<8x32xf32>
    %129 = arith.subf %127, %128 : vector<8x32xf32>
    %130 = vector.extract_strided_slice %122 {offsets = [0, 96], sizes = [8, 32], strides = [1, 1]} : vector<8x128xf32> to vector<8x32xf32>
    %131 = arith.mulf %124, %83 : vector<8x32xf32>
    %132 = arith.mulf %123, %129 : vector<8x32xf32>
    %133 = arith.addf %131, %132 : vector<8x32xf32>
    %134 = math.tanh %133 : vector<8x32xf32>
    %135 = arith.mulf %130, %134 : vector<8x32xf32>
    %136 = tpu.concatenate %135, %110 in 1 : vector<8x32xf32>, vector<8x32xf32> -> vector<8x64xf32>
    %137 = arith.truncf %136 : vector<8x64xf32> to vector<8x64xbf16>
    %cst_49 = arith.constant dense<0.000000e+00> : vector<8x128xf32>
    %138 = tpu.matmul %137, %39, %cst_49 {dimension_numbers = #tpu.dot_dimension_numbers<[1], [0], [0], [1], [0, 0, 1, 1], [], []>} : vector<8x64xbf16>, vector<64x128xbf16>, vector<8x128xf32> -> vector<8x128xf32>
    %139 = vector.broadcast %43 : vector<1x128xf32> to vector<8x128xf32>
    %140 = arith.addf %138, %139 : vector<8x128xf32>
    %141 = vector.broadcast %52 : vector<1x128xf32> to vector<8x128xf32>
    %142 = arith.mulf %140, %141 : vector<8x128xf32>
    %143 = arith.negf %142 : vector<8x128xf32>
    %144 = math.exp %143 : vector<8x128xf32>
    %cst_50 = arith.constant 1.000000e+00 : f32
    %145 = vector.broadcast %cst_50 : f32 to vector<8x128xf32>
    %146 = arith.addf %145, %144 : vector<8x128xf32>
    %147 = arith.divf %145, %146 : vector<8x128xf32>
    %148 = vector.extract_strided_slice %147 {offsets = [0, 0], sizes = [8, 32], strides = [1, 1]} : vector<8x128xf32> to vector<8x32xf32>
    %149 = vector.extract_strided_slice %147 {offsets = [0, 32], sizes = [8, 32], strides = [1, 1]} : vector<8x128xf32> to vector<8x32xf32>
    %150 = vector.extract_strided_slice %147 {offsets = [0, 64], sizes = [8, 32], strides = [1, 1]} : vector<8x128xf32> to vector<8x32xf32>
    %cst_51 = arith.constant 2.000000e+00 : f32
    %151 = vector.broadcast %cst_51 : f32 to vector<8x32xf32>
    %152 = arith.mulf %151, %150 : vector<8x32xf32>
    %cst_52 = arith.constant 1.000000e+00 : f32
    %153 = vector.broadcast %cst_52 : f32 to vector<8x32xf32>
    %154 = arith.subf %152, %153 : vector<8x32xf32>
    %155 = vector.extract_strided_slice %147 {offsets = [0, 96], sizes = [8, 32], strides = [1, 1]} : vector<8x128xf32> to vector<8x32xf32>
    %156 = arith.mulf %149, %108 : vector<8x32xf32>
    %157 = arith.mulf %148, %154 : vector<8x32xf32>
    %158 = arith.addf %156, %157 : vector<8x32xf32>
    %159 = math.tanh %158 : vector<8x32xf32>
    %160 = arith.mulf %155, %159 : vector<8x32xf32>
    %161 = vector.extract_strided_slice %59 {offsets = [2, 0, 0], sizes = [1, 8, 128], strides = [1, 1, 1]} : vector<8x8x128xf32> to vector<1x8x128xf32>
    %162 = vector.shape_cast %161 : vector<1x8x128xf32> to vector<8x128xf32>
    %163 = arith.truncf %135 : vector<8x32xf32> to vector<8x32xbf16>
    %cst_53 = arith.constant dense<0.000000e+00> : vector<8x128xf32>
    %164 = tpu.matmul %163, %60, %cst_53 {dimension_numbers = #tpu.dot_dimension_numbers<[1], [0], [0], [1], [0, 0, 1, 1], [], []>} : vector<8x32xbf16>, vector<32x128xbf16>, vector<8x128xf32> -> vector<8x128xf32>
    %165 = arith.addf %162, %164 : vector<8x128xf32>
    %166 = vector.broadcast %52 : vector<1x128xf32> to vector<8x128xf32>
    %167 = arith.mulf %165, %166 : vector<8x128xf32>
    %168 = arith.negf %167 : vector<8x128xf32>
    %169 = math.exp %168 : vector<8x128xf32>
    %cst_54 = arith.constant 1.000000e+00 : f32
    %170 = vector.broadcast %cst_54 : f32 to vector<8x128xf32>
    %171 = arith.addf %170, %169 : vector<8x128xf32>
    %172 = arith.divf %170, %171 : vector<8x128xf32>
    %173 = vector.extract_strided_slice %172 {offsets = [0, 0], sizes = [8, 32], strides = [1, 1]} : vector<8x128xf32> to vector<8x32xf32>
    %174 = vector.extract_strided_slice %172 {offsets = [0, 32], sizes = [8, 32], strides = [1, 1]} : vector<8x128xf32> to vector<8x32xf32>
    %175 = vector.extract_strided_slice %172 {offsets = [0, 64], sizes = [8, 32], strides = [1, 1]} : vector<8x128xf32> to vector<8x32xf32>
    %cst_55 = arith.constant 2.000000e+00 : f32
    %176 = vector.broadcast %cst_55 : f32 to vector<8x32xf32>
    %177 = arith.mulf %176, %175 : vector<8x32xf32>
    %cst_56 = arith.constant 1.000000e+00 : f32
    %178 = vector.broadcast %cst_56 : f32 to vector<8x32xf32>
    %179 = arith.subf %177, %178 : vector<8x32xf32>
    %180 = vector.extract_strided_slice %172 {offsets = [0, 96], sizes = [8, 32], strides = [1, 1]} : vector<8x128xf32> to vector<8x32xf32>
    %181 = arith.mulf %174, %133 : vector<8x32xf32>
    %182 = arith.mulf %173, %179 : vector<8x32xf32>
    %183 = arith.addf %181, %182 : vector<8x32xf32>
    %184 = math.tanh %183 : vector<8x32xf32>
    %185 = arith.mulf %180, %184 : vector<8x32xf32>
    %186 = tpu.concatenate %185, %160 in 1 : vector<8x32xf32>, vector<8x32xf32> -> vector<8x64xf32>
    %187 = arith.truncf %186 : vector<8x64xf32> to vector<8x64xbf16>
    %cst_57 = arith.constant dense<0.000000e+00> : vector<8x128xf32>
    %188 = tpu.matmul %187, %39, %cst_57 {dimension_numbers = #tpu.dot_dimension_numbers<[1], [0], [0], [1], [0, 0, 1, 1], [], []>} : vector<8x64xbf16>, vector<64x128xbf16>, vector<8x128xf32> -> vector<8x128xf32>
    %189 = vector.broadcast %43 : vector<1x128xf32> to vector<8x128xf32>
    %190 = arith.addf %188, %189 : vector<8x128xf32>
    %191 = vector.broadcast %52 : vector<1x128xf32> to vector<8x128xf32>
    %192 = arith.mulf %190, %191 : vector<8x128xf32>
    %193 = arith.negf %192 : vector<8x128xf32>
    %194 = math.exp %193 : vector<8x128xf32>
    %cst_58 = arith.constant 1.000000e+00 : f32
    %195 = vector.broadcast %cst_58 : f32 to vector<8x128xf32>
    %196 = arith.addf %195, %194 : vector<8x128xf32>
    %197 = arith.divf %195, %196 : vector<8x128xf32>
    %198 = vector.extract_strided_slice %197 {offsets = [0, 0], sizes = [8, 32], strides = [1, 1]} : vector<8x128xf32> to vector<8x32xf32>
    %199 = vector.extract_strided_slice %197 {offsets = [0, 32], sizes = [8, 32], strides = [1, 1]} : vector<8x128xf32> to vector<8x32xf32>
    %200 = vector.extract_strided_slice %197 {offsets = [0, 64], sizes = [8, 32], strides = [1, 1]} : vector<8x128xf32> to vector<8x32xf32>
    %cst_59 = arith.constant 2.000000e+00 : f32
    %201 = vector.broadcast %cst_59 : f32 to vector<8x32xf32>
    %202 = arith.mulf %201, %200 : vector<8x32xf32>
    %cst_60 = arith.constant 1.000000e+00 : f32
    %203 = vector.broadcast %cst_60 : f32 to vector<8x32xf32>
    %204 = arith.subf %202, %203 : vector<8x32xf32>
    %205 = vector.extract_strided_slice %197 {offsets = [0, 96], sizes = [8, 32], strides = [1, 1]} : vector<8x128xf32> to vector<8x32xf32>
    %206 = arith.mulf %199, %158 : vector<8x32xf32>
    %207 = arith.mulf %198, %204 : vector<8x32xf32>
    %208 = arith.addf %206, %207 : vector<8x32xf32>
    %209 = math.tanh %208 : vector<8x32xf32>
    %210 = arith.mulf %205, %209 : vector<8x32xf32>
    %211 = vector.extract_strided_slice %59 {offsets = [3, 0, 0], sizes = [1, 8, 128], strides = [1, 1, 1]} : vector<8x8x128xf32> to vector<1x8x128xf32>
    %212 = vector.shape_cast %211 : vector<1x8x128xf32> to vector<8x128xf32>
    %213 = arith.truncf %185 : vector<8x32xf32> to vector<8x32xbf16>
    %cst_61 = arith.constant dense<0.000000e+00> : vector<8x128xf32>
    %214 = tpu.matmul %213, %60, %cst_61 {dimension_numbers = #tpu.dot_dimension_numbers<[1], [0], [0], [1], [0, 0, 1, 1], [], []>} : vector<8x32xbf16>, vector<32x128xbf16>, vector<8x128xf32> -> vector<8x128xf32>
    %215 = arith.addf %212, %214 : vector<8x128xf32>
    %216 = vector.broadcast %52 : vector<1x128xf32> to vector<8x128xf32>
    %217 = arith.mulf %215, %216 : vector<8x128xf32>
    %218 = arith.negf %217 : vector<8x128xf32>
    %219 = math.exp %218 : vector<8x128xf32>
    %cst_62 = arith.constant 1.000000e+00 : f32
    %220 = vector.broadcast %cst_62 : f32 to vector<8x128xf32>
    %221 = arith.addf %220, %219 : vector<8x128xf32>
    %222 = arith.divf %220, %221 : vector<8x128xf32>
    %223 = vector.extract_strided_slice %222 {offsets = [0, 0], sizes = [8, 32], strides = [1, 1]} : vector<8x128xf32> to vector<8x32xf32>
    %224 = vector.extract_strided_slice %222 {offsets = [0, 32], sizes = [8, 32], strides = [1, 1]} : vector<8x128xf32> to vector<8x32xf32>
    %225 = vector.extract_strided_slice %222 {offsets = [0, 64], sizes = [8, 32], strides = [1, 1]} : vector<8x128xf32> to vector<8x32xf32>
    %cst_63 = arith.constant 2.000000e+00 : f32
    %226 = vector.broadcast %cst_63 : f32 to vector<8x32xf32>
    %227 = arith.mulf %226, %225 : vector<8x32xf32>
    %cst_64 = arith.constant 1.000000e+00 : f32
    %228 = vector.broadcast %cst_64 : f32 to vector<8x32xf32>
    %229 = arith.subf %227, %228 : vector<8x32xf32>
    %230 = vector.extract_strided_slice %222 {offsets = [0, 96], sizes = [8, 32], strides = [1, 1]} : vector<8x128xf32> to vector<8x32xf32>
    %231 = arith.mulf %224, %183 : vector<8x32xf32>
    %232 = arith.mulf %223, %229 : vector<8x32xf32>
    %233 = arith.addf %231, %232 : vector<8x32xf32>
    %234 = math.tanh %233 : vector<8x32xf32>
    %235 = arith.mulf %230, %234 : vector<8x32xf32>
    %236 = tpu.concatenate %235, %210 in 1 : vector<8x32xf32>, vector<8x32xf32> -> vector<8x64xf32>
    %237 = arith.truncf %236 : vector<8x64xf32> to vector<8x64xbf16>
    %cst_65 = arith.constant dense<0.000000e+00> : vector<8x128xf32>
    %238 = tpu.matmul %237, %39, %cst_65 {dimension_numbers = #tpu.dot_dimension_numbers<[1], [0], [0], [1], [0, 0, 1, 1], [], []>} : vector<8x64xbf16>, vector<64x128xbf16>, vector<8x128xf32> -> vector<8x128xf32>
    %239 = vector.broadcast %43 : vector<1x128xf32> to vector<8x128xf32>
    %240 = arith.addf %238, %239 : vector<8x128xf32>
    %241 = vector.broadcast %52 : vector<1x128xf32> to vector<8x128xf32>
    %242 = arith.mulf %240, %241 : vector<8x128xf32>
    %243 = arith.negf %242 : vector<8x128xf32>
    %244 = math.exp %243 : vector<8x128xf32>
    %cst_66 = arith.constant 1.000000e+00 : f32
    %245 = vector.broadcast %cst_66 : f32 to vector<8x128xf32>
    %246 = arith.addf %245, %244 : vector<8x128xf32>
    %247 = arith.divf %245, %246 : vector<8x128xf32>
    %248 = vector.extract_strided_slice %247 {offsets = [0, 0], sizes = [8, 32], strides = [1, 1]} : vector<8x128xf32> to vector<8x32xf32>
    %249 = vector.extract_strided_slice %247 {offsets = [0, 32], sizes = [8, 32], strides = [1, 1]} : vector<8x128xf32> to vector<8x32xf32>
    %250 = vector.extract_strided_slice %247 {offsets = [0, 64], sizes = [8, 32], strides = [1, 1]} : vector<8x128xf32> to vector<8x32xf32>
    %cst_67 = arith.constant 2.000000e+00 : f32
    %251 = vector.broadcast %cst_67 : f32 to vector<8x32xf32>
    %252 = arith.mulf %251, %250 : vector<8x32xf32>
    %cst_68 = arith.constant 1.000000e+00 : f32
    %253 = vector.broadcast %cst_68 : f32 to vector<8x32xf32>
    %254 = arith.subf %252, %253 : vector<8x32xf32>
    %255 = vector.extract_strided_slice %247 {offsets = [0, 96], sizes = [8, 32], strides = [1, 1]} : vector<8x128xf32> to vector<8x32xf32>
    %256 = arith.mulf %249, %208 : vector<8x32xf32>
    %257 = arith.mulf %248, %254 : vector<8x32xf32>
    %258 = arith.addf %256, %257 : vector<8x32xf32>
    %259 = math.tanh %258 : vector<8x32xf32>
    %260 = arith.mulf %255, %259 : vector<8x32xf32>
    %261 = vector.extract_strided_slice %59 {offsets = [4, 0, 0], sizes = [1, 8, 128], strides = [1, 1, 1]} : vector<8x8x128xf32> to vector<1x8x128xf32>
    %262 = vector.shape_cast %261 : vector<1x8x128xf32> to vector<8x128xf32>
    %263 = arith.truncf %235 : vector<8x32xf32> to vector<8x32xbf16>
    %cst_69 = arith.constant dense<0.000000e+00> : vector<8x128xf32>
    %264 = tpu.matmul %263, %60, %cst_69 {dimension_numbers = #tpu.dot_dimension_numbers<[1], [0], [0], [1], [0, 0, 1, 1], [], []>} : vector<8x32xbf16>, vector<32x128xbf16>, vector<8x128xf32> -> vector<8x128xf32>
    %265 = arith.addf %262, %264 : vector<8x128xf32>
    %266 = vector.broadcast %52 : vector<1x128xf32> to vector<8x128xf32>
    %267 = arith.mulf %265, %266 : vector<8x128xf32>
    %268 = arith.negf %267 : vector<8x128xf32>
    %269 = math.exp %268 : vector<8x128xf32>
    %cst_70 = arith.constant 1.000000e+00 : f32
    %270 = vector.broadcast %cst_70 : f32 to vector<8x128xf32>
    %271 = arith.addf %270, %269 : vector<8x128xf32>
    %272 = arith.divf %270, %271 : vector<8x128xf32>
    %273 = vector.extract_strided_slice %272 {offsets = [0, 0], sizes = [8, 32], strides = [1, 1]} : vector<8x128xf32> to vector<8x32xf32>
    %274 = vector.extract_strided_slice %272 {offsets = [0, 32], sizes = [8, 32], strides = [1, 1]} : vector<8x128xf32> to vector<8x32xf32>
    %275 = vector.extract_strided_slice %272 {offsets = [0, 64], sizes = [8, 32], strides = [1, 1]} : vector<8x128xf32> to vector<8x32xf32>
    %cst_71 = arith.constant 2.000000e+00 : f32
    %276 = vector.broadcast %cst_71 : f32 to vector<8x32xf32>
    %277 = arith.mulf %276, %275 : vector<8x32xf32>
    %cst_72 = arith.constant 1.000000e+00 : f32
    %278 = vector.broadcast %cst_72 : f32 to vector<8x32xf32>
    %279 = arith.subf %277, %278 : vector<8x32xf32>
    %280 = vector.extract_strided_slice %272 {offsets = [0, 96], sizes = [8, 32], strides = [1, 1]} : vector<8x128xf32> to vector<8x32xf32>
    %281 = arith.mulf %274, %233 : vector<8x32xf32>
    %282 = arith.mulf %273, %279 : vector<8x32xf32>
    %283 = arith.addf %281, %282 : vector<8x32xf32>
    %284 = math.tanh %283 : vector<8x32xf32>
    %285 = arith.mulf %280, %284 : vector<8x32xf32>
    %286 = tpu.concatenate %285, %260 in 1 : vector<8x32xf32>, vector<8x32xf32> -> vector<8x64xf32>
    %287 = arith.truncf %286 : vector<8x64xf32> to vector<8x64xbf16>
    %cst_73 = arith.constant dense<0.000000e+00> : vector<8x128xf32>
    %288 = tpu.matmul %287, %39, %cst_73 {dimension_numbers = #tpu.dot_dimension_numbers<[1], [0], [0], [1], [0, 0, 1, 1], [], []>} : vector<8x64xbf16>, vector<64x128xbf16>, vector<8x128xf32> -> vector<8x128xf32>
    %289 = vector.broadcast %43 : vector<1x128xf32> to vector<8x128xf32>
    %290 = arith.addf %288, %289 : vector<8x128xf32>
    %291 = vector.broadcast %52 : vector<1x128xf32> to vector<8x128xf32>
    %292 = arith.mulf %290, %291 : vector<8x128xf32>
    %293 = arith.negf %292 : vector<8x128xf32>
    %294 = math.exp %293 : vector<8x128xf32>
    %cst_74 = arith.constant 1.000000e+00 : f32
    %295 = vector.broadcast %cst_74 : f32 to vector<8x128xf32>
    %296 = arith.addf %295, %294 : vector<8x128xf32>
    %297 = arith.divf %295, %296 : vector<8x128xf32>
    %298 = vector.extract_strided_slice %297 {offsets = [0, 0], sizes = [8, 32], strides = [1, 1]} : vector<8x128xf32> to vector<8x32xf32>
    %299 = vector.extract_strided_slice %297 {offsets = [0, 32], sizes = [8, 32], strides = [1, 1]} : vector<8x128xf32> to vector<8x32xf32>
    %300 = vector.extract_strided_slice %297 {offsets = [0, 64], sizes = [8, 32], strides = [1, 1]} : vector<8x128xf32> to vector<8x32xf32>
    %cst_75 = arith.constant 2.000000e+00 : f32
    %301 = vector.broadcast %cst_75 : f32 to vector<8x32xf32>
    %302 = arith.mulf %301, %300 : vector<8x32xf32>
    %cst_76 = arith.constant 1.000000e+00 : f32
    %303 = vector.broadcast %cst_76 : f32 to vector<8x32xf32>
    %304 = arith.subf %302, %303 : vector<8x32xf32>
    %305 = vector.extract_strided_slice %297 {offsets = [0, 96], sizes = [8, 32], strides = [1, 1]} : vector<8x128xf32> to vector<8x32xf32>
    %306 = arith.mulf %299, %258 : vector<8x32xf32>
    %307 = arith.mulf %298, %304 : vector<8x32xf32>
    %308 = arith.addf %306, %307 : vector<8x32xf32>
    %309 = math.tanh %308 : vector<8x32xf32>
    %310 = arith.mulf %305, %309 : vector<8x32xf32>
    %311 = vector.extract_strided_slice %59 {offsets = [5, 0, 0], sizes = [1, 8, 128], strides = [1, 1, 1]} : vector<8x8x128xf32> to vector<1x8x128xf32>
    %312 = vector.shape_cast %311 : vector<1x8x128xf32> to vector<8x128xf32>
    %313 = arith.truncf %285 : vector<8x32xf32> to vector<8x32xbf16>
    %cst_77 = arith.constant dense<0.000000e+00> : vector<8x128xf32>
    %314 = tpu.matmul %313, %60, %cst_77 {dimension_numbers = #tpu.dot_dimension_numbers<[1], [0], [0], [1], [0, 0, 1, 1], [], []>} : vector<8x32xbf16>, vector<32x128xbf16>, vector<8x128xf32> -> vector<8x128xf32>
    %315 = arith.addf %312, %314 : vector<8x128xf32>
    %316 = vector.broadcast %52 : vector<1x128xf32> to vector<8x128xf32>
    %317 = arith.mulf %315, %316 : vector<8x128xf32>
    %318 = arith.negf %317 : vector<8x128xf32>
    %319 = math.exp %318 : vector<8x128xf32>
    %cst_78 = arith.constant 1.000000e+00 : f32
    %320 = vector.broadcast %cst_78 : f32 to vector<8x128xf32>
    %321 = arith.addf %320, %319 : vector<8x128xf32>
    %322 = arith.divf %320, %321 : vector<8x128xf32>
    %323 = vector.extract_strided_slice %322 {offsets = [0, 0], sizes = [8, 32], strides = [1, 1]} : vector<8x128xf32> to vector<8x32xf32>
    %324 = vector.extract_strided_slice %322 {offsets = [0, 32], sizes = [8, 32], strides = [1, 1]} : vector<8x128xf32> to vector<8x32xf32>
    %325 = vector.extract_strided_slice %322 {offsets = [0, 64], sizes = [8, 32], strides = [1, 1]} : vector<8x128xf32> to vector<8x32xf32>
    %cst_79 = arith.constant 2.000000e+00 : f32
    %326 = vector.broadcast %cst_79 : f32 to vector<8x32xf32>
    %327 = arith.mulf %326, %325 : vector<8x32xf32>
    %cst_80 = arith.constant 1.000000e+00 : f32
    %328 = vector.broadcast %cst_80 : f32 to vector<8x32xf32>
    %329 = arith.subf %327, %328 : vector<8x32xf32>
    %330 = vector.extract_strided_slice %322 {offsets = [0, 96], sizes = [8, 32], strides = [1, 1]} : vector<8x128xf32> to vector<8x32xf32>
    %331 = arith.mulf %324, %283 : vector<8x32xf32>
    %332 = arith.mulf %323, %329 : vector<8x32xf32>
    %333 = arith.addf %331, %332 : vector<8x32xf32>
    %334 = math.tanh %333 : vector<8x32xf32>
    %335 = arith.mulf %330, %334 : vector<8x32xf32>
    %336 = tpu.concatenate %335, %310 in 1 : vector<8x32xf32>, vector<8x32xf32> -> vector<8x64xf32>
    %337 = arith.truncf %336 : vector<8x64xf32> to vector<8x64xbf16>
    %cst_81 = arith.constant dense<0.000000e+00> : vector<8x128xf32>
    %338 = tpu.matmul %337, %39, %cst_81 {dimension_numbers = #tpu.dot_dimension_numbers<[1], [0], [0], [1], [0, 0, 1, 1], [], []>} : vector<8x64xbf16>, vector<64x128xbf16>, vector<8x128xf32> -> vector<8x128xf32>
    %339 = vector.broadcast %43 : vector<1x128xf32> to vector<8x128xf32>
    %340 = arith.addf %338, %339 : vector<8x128xf32>
    %341 = vector.broadcast %52 : vector<1x128xf32> to vector<8x128xf32>
    %342 = arith.mulf %340, %341 : vector<8x128xf32>
    %343 = arith.negf %342 : vector<8x128xf32>
    %344 = math.exp %343 : vector<8x128xf32>
    %cst_82 = arith.constant 1.000000e+00 : f32
    %345 = vector.broadcast %cst_82 : f32 to vector<8x128xf32>
    %346 = arith.addf %345, %344 : vector<8x128xf32>
    %347 = arith.divf %345, %346 : vector<8x128xf32>
    %348 = vector.extract_strided_slice %347 {offsets = [0, 0], sizes = [8, 32], strides = [1, 1]} : vector<8x128xf32> to vector<8x32xf32>
    %349 = vector.extract_strided_slice %347 {offsets = [0, 32], sizes = [8, 32], strides = [1, 1]} : vector<8x128xf32> to vector<8x32xf32>
    %350 = vector.extract_strided_slice %347 {offsets = [0, 64], sizes = [8, 32], strides = [1, 1]} : vector<8x128xf32> to vector<8x32xf32>
    %cst_83 = arith.constant 2.000000e+00 : f32
    %351 = vector.broadcast %cst_83 : f32 to vector<8x32xf32>
    %352 = arith.mulf %351, %350 : vector<8x32xf32>
    %cst_84 = arith.constant 1.000000e+00 : f32
    %353 = vector.broadcast %cst_84 : f32 to vector<8x32xf32>
    %354 = arith.subf %352, %353 : vector<8x32xf32>
    %355 = vector.extract_strided_slice %347 {offsets = [0, 96], sizes = [8, 32], strides = [1, 1]} : vector<8x128xf32> to vector<8x32xf32>
    %356 = arith.mulf %349, %308 : vector<8x32xf32>
    %357 = arith.mulf %348, %354 : vector<8x32xf32>
    %358 = arith.addf %356, %357 : vector<8x32xf32>
    %359 = math.tanh %358 : vector<8x32xf32>
    %360 = arith.mulf %355, %359 : vector<8x32xf32>
    %361 = vector.extract_strided_slice %59 {offsets = [6, 0, 0], sizes = [1, 8, 128], strides = [1, 1, 1]} : vector<8x8x128xf32> to vector<1x8x128xf32>
    %362 = vector.shape_cast %361 : vector<1x8x128xf32> to vector<8x128xf32>
    %363 = arith.truncf %335 : vector<8x32xf32> to vector<8x32xbf16>
    %cst_85 = arith.constant dense<0.000000e+00> : vector<8x128xf32>
    %364 = tpu.matmul %363, %60, %cst_85 {dimension_numbers = #tpu.dot_dimension_numbers<[1], [0], [0], [1], [0, 0, 1, 1], [], []>} : vector<8x32xbf16>, vector<32x128xbf16>, vector<8x128xf32> -> vector<8x128xf32>
    %365 = arith.addf %362, %364 : vector<8x128xf32>
    %366 = vector.broadcast %52 : vector<1x128xf32> to vector<8x128xf32>
    %367 = arith.mulf %365, %366 : vector<8x128xf32>
    %368 = arith.negf %367 : vector<8x128xf32>
    %369 = math.exp %368 : vector<8x128xf32>
    %cst_86 = arith.constant 1.000000e+00 : f32
    %370 = vector.broadcast %cst_86 : f32 to vector<8x128xf32>
    %371 = arith.addf %370, %369 : vector<8x128xf32>
    %372 = arith.divf %370, %371 : vector<8x128xf32>
    %373 = vector.extract_strided_slice %372 {offsets = [0, 0], sizes = [8, 32], strides = [1, 1]} : vector<8x128xf32> to vector<8x32xf32>
    %374 = vector.extract_strided_slice %372 {offsets = [0, 32], sizes = [8, 32], strides = [1, 1]} : vector<8x128xf32> to vector<8x32xf32>
    %375 = vector.extract_strided_slice %372 {offsets = [0, 64], sizes = [8, 32], strides = [1, 1]} : vector<8x128xf32> to vector<8x32xf32>
    %cst_87 = arith.constant 2.000000e+00 : f32
    %376 = vector.broadcast %cst_87 : f32 to vector<8x32xf32>
    %377 = arith.mulf %376, %375 : vector<8x32xf32>
    %cst_88 = arith.constant 1.000000e+00 : f32
    %378 = vector.broadcast %cst_88 : f32 to vector<8x32xf32>
    %379 = arith.subf %377, %378 : vector<8x32xf32>
    %380 = vector.extract_strided_slice %372 {offsets = [0, 96], sizes = [8, 32], strides = [1, 1]} : vector<8x128xf32> to vector<8x32xf32>
    %381 = arith.mulf %374, %333 : vector<8x32xf32>
    %382 = arith.mulf %373, %379 : vector<8x32xf32>
    %383 = arith.addf %381, %382 : vector<8x32xf32>
    %384 = math.tanh %383 : vector<8x32xf32>
    %385 = arith.mulf %380, %384 : vector<8x32xf32>
    %386 = tpu.concatenate %385, %360 in 1 : vector<8x32xf32>, vector<8x32xf32> -> vector<8x64xf32>
    %387 = arith.truncf %386 : vector<8x64xf32> to vector<8x64xbf16>
    %cst_89 = arith.constant dense<0.000000e+00> : vector<8x128xf32>
    %388 = tpu.matmul %387, %39, %cst_89 {dimension_numbers = #tpu.dot_dimension_numbers<[1], [0], [0], [1], [0, 0, 1, 1], [], []>} : vector<8x64xbf16>, vector<64x128xbf16>, vector<8x128xf32> -> vector<8x128xf32>
    %389 = vector.broadcast %43 : vector<1x128xf32> to vector<8x128xf32>
    %390 = arith.addf %388, %389 : vector<8x128xf32>
    %391 = vector.broadcast %52 : vector<1x128xf32> to vector<8x128xf32>
    %392 = arith.mulf %390, %391 : vector<8x128xf32>
    %393 = arith.negf %392 : vector<8x128xf32>
    %394 = math.exp %393 : vector<8x128xf32>
    %cst_90 = arith.constant 1.000000e+00 : f32
    %395 = vector.broadcast %cst_90 : f32 to vector<8x128xf32>
    %396 = arith.addf %395, %394 : vector<8x128xf32>
    %397 = arith.divf %395, %396 : vector<8x128xf32>
    %398 = vector.extract_strided_slice %397 {offsets = [0, 0], sizes = [8, 32], strides = [1, 1]} : vector<8x128xf32> to vector<8x32xf32>
    %399 = vector.extract_strided_slice %397 {offsets = [0, 32], sizes = [8, 32], strides = [1, 1]} : vector<8x128xf32> to vector<8x32xf32>
    %400 = vector.extract_strided_slice %397 {offsets = [0, 64], sizes = [8, 32], strides = [1, 1]} : vector<8x128xf32> to vector<8x32xf32>
    %cst_91 = arith.constant 2.000000e+00 : f32
    %401 = vector.broadcast %cst_91 : f32 to vector<8x32xf32>
    %402 = arith.mulf %401, %400 : vector<8x32xf32>
    %cst_92 = arith.constant 1.000000e+00 : f32
    %403 = vector.broadcast %cst_92 : f32 to vector<8x32xf32>
    %404 = arith.subf %402, %403 : vector<8x32xf32>
    %405 = vector.extract_strided_slice %397 {offsets = [0, 96], sizes = [8, 32], strides = [1, 1]} : vector<8x128xf32> to vector<8x32xf32>
    %406 = arith.mulf %399, %358 : vector<8x32xf32>
    %407 = arith.mulf %398, %404 : vector<8x32xf32>
    %408 = arith.addf %406, %407 : vector<8x32xf32>
    %409 = math.tanh %408 : vector<8x32xf32>
    %410 = arith.mulf %405, %409 : vector<8x32xf32>
    %411 = vector.extract_strided_slice %59 {offsets = [7, 0, 0], sizes = [1, 8, 128], strides = [1, 1, 1]} : vector<8x8x128xf32> to vector<1x8x128xf32>
    %412 = vector.shape_cast %411 : vector<1x8x128xf32> to vector<8x128xf32>
    %413 = arith.truncf %385 : vector<8x32xf32> to vector<8x32xbf16>
    %cst_93 = arith.constant dense<0.000000e+00> : vector<8x128xf32>
    %414 = tpu.matmul %413, %60, %cst_93 {dimension_numbers = #tpu.dot_dimension_numbers<[1], [0], [0], [1], [0, 0, 1, 1], [], []>} : vector<8x32xbf16>, vector<32x128xbf16>, vector<8x128xf32> -> vector<8x128xf32>
    %415 = arith.addf %412, %414 : vector<8x128xf32>
    %416 = vector.broadcast %52 : vector<1x128xf32> to vector<8x128xf32>
    %417 = arith.mulf %415, %416 : vector<8x128xf32>
    %418 = arith.negf %417 : vector<8x128xf32>
    %419 = math.exp %418 : vector<8x128xf32>
    %cst_94 = arith.constant 1.000000e+00 : f32
    %420 = vector.broadcast %cst_94 : f32 to vector<8x128xf32>
    %421 = arith.addf %420, %419 : vector<8x128xf32>
    %422 = arith.divf %420, %421 : vector<8x128xf32>
    %423 = vector.extract_strided_slice %422 {offsets = [0, 0], sizes = [8, 32], strides = [1, 1]} : vector<8x128xf32> to vector<8x32xf32>
    %424 = vector.extract_strided_slice %422 {offsets = [0, 32], sizes = [8, 32], strides = [1, 1]} : vector<8x128xf32> to vector<8x32xf32>
    %425 = vector.extract_strided_slice %422 {offsets = [0, 64], sizes = [8, 32], strides = [1, 1]} : vector<8x128xf32> to vector<8x32xf32>
    %cst_95 = arith.constant 2.000000e+00 : f32
    %426 = vector.broadcast %cst_95 : f32 to vector<8x32xf32>
    %427 = arith.mulf %426, %425 : vector<8x32xf32>
    %cst_96 = arith.constant 1.000000e+00 : f32
    %428 = vector.broadcast %cst_96 : f32 to vector<8x32xf32>
    %429 = arith.subf %427, %428 : vector<8x32xf32>
    %430 = vector.extract_strided_slice %422 {offsets = [0, 96], sizes = [8, 32], strides = [1, 1]} : vector<8x128xf32> to vector<8x32xf32>
    %431 = arith.mulf %424, %383 : vector<8x32xf32>
    %432 = arith.mulf %423, %429 : vector<8x32xf32>
    %433 = arith.addf %431, %432 : vector<8x32xf32>
    %434 = math.tanh %433 : vector<8x32xf32>
    %435 = arith.mulf %430, %434 : vector<8x32xf32>
    %436 = tpu.concatenate %435, %410 in 1 : vector<8x32xf32>, vector<8x32xf32> -> vector<8x64xf32>
    %437 = arith.truncf %436 : vector<8x64xf32> to vector<8x64xbf16>
    %cst_97 = arith.constant dense<0.000000e+00> : vector<8x128xf32>
    %438 = tpu.matmul %437, %39, %cst_97 {dimension_numbers = #tpu.dot_dimension_numbers<[1], [0], [0], [1], [0, 0, 1, 1], [], []>} : vector<8x64xbf16>, vector<64x128xbf16>, vector<8x128xf32> -> vector<8x128xf32>
    %439 = vector.broadcast %43 : vector<1x128xf32> to vector<8x128xf32>
    %440 = arith.addf %438, %439 : vector<8x128xf32>
    %441 = vector.broadcast %52 : vector<1x128xf32> to vector<8x128xf32>
    %442 = arith.mulf %440, %441 : vector<8x128xf32>
    %443 = arith.negf %442 : vector<8x128xf32>
    %444 = math.exp %443 : vector<8x128xf32>
    %cst_98 = arith.constant 1.000000e+00 : f32
    %445 = vector.broadcast %cst_98 : f32 to vector<8x128xf32>
    %446 = arith.addf %445, %444 : vector<8x128xf32>
    %447 = arith.divf %445, %446 : vector<8x128xf32>
    %448 = vector.extract_strided_slice %447 {offsets = [0, 0], sizes = [8, 32], strides = [1, 1]} : vector<8x128xf32> to vector<8x32xf32>
    %449 = vector.extract_strided_slice %447 {offsets = [0, 32], sizes = [8, 32], strides = [1, 1]} : vector<8x128xf32> to vector<8x32xf32>
    %450 = vector.extract_strided_slice %447 {offsets = [0, 64], sizes = [8, 32], strides = [1, 1]} : vector<8x128xf32> to vector<8x32xf32>
    %cst_99 = arith.constant 2.000000e+00 : f32
    %451 = vector.broadcast %cst_99 : f32 to vector<8x32xf32>
    %452 = arith.mulf %451, %450 : vector<8x32xf32>
    %cst_100 = arith.constant 1.000000e+00 : f32
    %453 = vector.broadcast %cst_100 : f32 to vector<8x32xf32>
    %454 = arith.subf %452, %453 : vector<8x32xf32>
    %455 = vector.extract_strided_slice %447 {offsets = [0, 96], sizes = [8, 32], strides = [1, 1]} : vector<8x128xf32> to vector<8x32xf32>
    %456 = arith.mulf %449, %408 : vector<8x32xf32>
    %457 = arith.mulf %448, %454 : vector<8x32xf32>
    %458 = arith.addf %456, %457 : vector<8x32xf32>
    %459 = math.tanh %458 : vector<8x32xf32>
    %460 = arith.mulf %455, %459 : vector<8x32xf32>
    %c0_101 = arith.constant 0 : index
    %c0_102 = arith.constant 0 : index
    %c0_103 = arith.constant 0 : index
    %461 = vector.load %arg1[%c0_101, %c0_102, %c0_103] : memref<4x8x32xf32, #tpu.memory_space<vmem>>, vector<1x8x32xf32>
    %462 = vector.shape_cast %461 : vector<1x8x32xf32> to vector<8x32xf32>
    %463 = arith.addf %460, %462 : vector<8x32xf32>
    %464 = tpu.concatenate %463, %435 in 1 : vector<8x32xf32>, vector<8x32xf32> -> vector<8x64xf32>
    %465 = arith.truncf %464 : vector<8x64xf32> to vector<8x64xbf16>
    %cst_104 = arith.constant dense<0.000000e+00> : vector<8x128xf32>
    %466 = tpu.matmul %465, %37, %cst_104 {dimension_numbers = #tpu.dot_dimension_numbers<[1], [0], [0], [1], [0, 0, 1, 1], [], []>} : vector<8x64xbf16>, vector<64x128xbf16>, vector<8x128xf32> -> vector<8x128xf32>
    %467 = vector.broadcast %41 : vector<1x128xf32> to vector<8x128xf32>
    %468 = arith.addf %466, %467 : vector<8x128xf32>
    %469 = vector.broadcast %52 : vector<1x128xf32> to vector<8x128xf32>
    %470 = arith.mulf %468, %469 : vector<8x128xf32>
    %471 = arith.negf %470 : vector<8x128xf32>
    %472 = math.exp %471 : vector<8x128xf32>
    %cst_105 = arith.constant 1.000000e+00 : f32
    %473 = vector.broadcast %cst_105 : f32 to vector<8x128xf32>
    %474 = arith.addf %473, %472 : vector<8x128xf32>
    %475 = arith.divf %473, %474 : vector<8x128xf32>
    %476 = vector.extract_strided_slice %475 {offsets = [0, 0], sizes = [8, 32], strides = [1, 1]} : vector<8x128xf32> to vector<8x32xf32>
    %477 = vector.extract_strided_slice %475 {offsets = [0, 32], sizes = [8, 32], strides = [1, 1]} : vector<8x128xf32> to vector<8x32xf32>
    %478 = vector.extract_strided_slice %475 {offsets = [0, 64], sizes = [8, 32], strides = [1, 1]} : vector<8x128xf32> to vector<8x32xf32>
    %cst_106 = arith.constant 2.000000e+00 : f32
    %479 = vector.broadcast %cst_106 : f32 to vector<8x32xf32>
    %480 = arith.mulf %479, %478 : vector<8x32xf32>
    %cst_107 = arith.constant 1.000000e+00 : f32
    %481 = vector.broadcast %cst_107 : f32 to vector<8x32xf32>
    %482 = arith.subf %480, %481 : vector<8x32xf32>
    %483 = vector.extract_strided_slice %475 {offsets = [0, 96], sizes = [8, 32], strides = [1, 1]} : vector<8x128xf32> to vector<8x32xf32>
    %484 = arith.mulf %477, %433 : vector<8x32xf32>
    %485 = arith.mulf %476, %482 : vector<8x32xf32>
    %486 = arith.addf %484, %485 : vector<8x32xf32>
    %487 = math.tanh %486 : vector<8x32xf32>
    %488 = arith.mulf %483, %487 : vector<8x32xf32>
    %489 = tpu.concatenate %488, %460 in 1 : vector<8x32xf32>, vector<8x32xf32> -> vector<8x64xf32>
    %490 = arith.truncf %489 : vector<8x64xf32> to vector<8x64xbf16>
    %cst_108 = arith.constant dense<0.000000e+00> : vector<8x128xf32>
    %491 = tpu.matmul %490, %39, %cst_108 {dimension_numbers = #tpu.dot_dimension_numbers<[1], [0], [0], [1], [0, 0, 1, 1], [], []>} : vector<8x64xbf16>, vector<64x128xbf16>, vector<8x128xf32> -> vector<8x128xf32>
    %492 = vector.broadcast %43 : vector<1x128xf32> to vector<8x128xf32>
    %493 = arith.addf %491, %492 : vector<8x128xf32>
    %494 = vector.broadcast %52 : vector<1x128xf32> to vector<8x128xf32>
    %495 = arith.mulf %493, %494 : vector<8x128xf32>
    %496 = arith.negf %495 : vector<8x128xf32>
    %497 = math.exp %496 : vector<8x128xf32>
    %cst_109 = arith.constant 1.000000e+00 : f32
    %498 = vector.broadcast %cst_109 : f32 to vector<8x128xf32>
    %499 = arith.addf %498, %497 : vector<8x128xf32>
    %500 = arith.divf %498, %499 : vector<8x128xf32>
    %501 = vector.extract_strided_slice %500 {offsets = [0, 0], sizes = [8, 32], strides = [1, 1]} : vector<8x128xf32> to vector<8x32xf32>
    %502 = vector.extract_strided_slice %500 {offsets = [0, 32], sizes = [8, 32], strides = [1, 1]} : vector<8x128xf32> to vector<8x32xf32>
    %503 = vector.extract_strided_slice %500 {offsets = [0, 64], sizes = [8, 32], strides = [1, 1]} : vector<8x128xf32> to vector<8x32xf32>
    %cst_110 = arith.constant 2.000000e+00 : f32
    %504 = vector.broadcast %cst_110 : f32 to vector<8x32xf32>
    %505 = arith.mulf %504, %503 : vector<8x32xf32>
    %cst_111 = arith.constant 1.000000e+00 : f32
    %506 = vector.broadcast %cst_111 : f32 to vector<8x32xf32>
    %507 = arith.subf %505, %506 : vector<8x32xf32>
    %508 = vector.extract_strided_slice %500 {offsets = [0, 96], sizes = [8, 32], strides = [1, 1]} : vector<8x128xf32> to vector<8x32xf32>
    %509 = arith.mulf %502, %458 : vector<8x32xf32>
    %510 = arith.mulf %501, %507 : vector<8x32xf32>
    %511 = arith.addf %509, %510 : vector<8x32xf32>
    %512 = math.tanh %511 : vector<8x32xf32>
    %513 = arith.mulf %508, %512 : vector<8x32xf32>
    %c1_112 = arith.constant 1 : index
    %c0_113 = arith.constant 0 : index
    %c0_114 = arith.constant 0 : index
    %514 = vector.load %arg1[%c1_112, %c0_113, %c0_114] : memref<4x8x32xf32, #tpu.memory_space<vmem>>, vector<1x8x32xf32>
    %515 = vector.shape_cast %514 : vector<1x8x32xf32> to vector<8x32xf32>
    %516 = arith.addf %513, %515 : vector<8x32xf32>
    %517 = tpu.concatenate %516, %488 in 1 : vector<8x32xf32>, vector<8x32xf32> -> vector<8x64xf32>
    %518 = arith.truncf %517 : vector<8x64xf32> to vector<8x64xbf16>
    %cst_115 = arith.constant dense<0.000000e+00> : vector<8x128xf32>
    %519 = tpu.matmul %518, %37, %cst_115 {dimension_numbers = #tpu.dot_dimension_numbers<[1], [0], [0], [1], [0, 0, 1, 1], [], []>} : vector<8x64xbf16>, vector<64x128xbf16>, vector<8x128xf32> -> vector<8x128xf32>
    %520 = vector.broadcast %41 : vector<1x128xf32> to vector<8x128xf32>
    %521 = arith.addf %519, %520 : vector<8x128xf32>
    %522 = vector.broadcast %52 : vector<1x128xf32> to vector<8x128xf32>
    %523 = arith.mulf %521, %522 : vector<8x128xf32>
    %524 = arith.negf %523 : vector<8x128xf32>
    %525 = math.exp %524 : vector<8x128xf32>
    %cst_116 = arith.constant 1.000000e+00 : f32
    %526 = vector.broadcast %cst_116 : f32 to vector<8x128xf32>
    %527 = arith.addf %526, %525 : vector<8x128xf32>
    %528 = arith.divf %526, %527 : vector<8x128xf32>
    %529 = vector.extract_strided_slice %528 {offsets = [0, 0], sizes = [8, 32], strides = [1, 1]} : vector<8x128xf32> to vector<8x32xf32>
    %530 = vector.extract_strided_slice %528 {offsets = [0, 32], sizes = [8, 32], strides = [1, 1]} : vector<8x128xf32> to vector<8x32xf32>
    %531 = vector.extract_strided_slice %528 {offsets = [0, 64], sizes = [8, 32], strides = [1, 1]} : vector<8x128xf32> to vector<8x32xf32>
    %cst_117 = arith.constant 2.000000e+00 : f32
    %532 = vector.broadcast %cst_117 : f32 to vector<8x32xf32>
    %533 = arith.mulf %532, %531 : vector<8x32xf32>
    %cst_118 = arith.constant 1.000000e+00 : f32
    %534 = vector.broadcast %cst_118 : f32 to vector<8x32xf32>
    %535 = arith.subf %533, %534 : vector<8x32xf32>
    %536 = vector.extract_strided_slice %528 {offsets = [0, 96], sizes = [8, 32], strides = [1, 1]} : vector<8x128xf32> to vector<8x32xf32>
    %537 = arith.mulf %530, %486 : vector<8x32xf32>
    %538 = arith.mulf %529, %535 : vector<8x32xf32>
    %539 = arith.addf %537, %538 : vector<8x32xf32>
    %540 = math.tanh %539 : vector<8x32xf32>
    %541 = arith.mulf %536, %540 : vector<8x32xf32>
    %542 = tpu.concatenate %541, %513 in 1 : vector<8x32xf32>, vector<8x32xf32> -> vector<8x64xf32>
    %543 = arith.truncf %542 : vector<8x64xf32> to vector<8x64xbf16>
    %cst_119 = arith.constant dense<0.000000e+00> : vector<8x128xf32>
    %544 = tpu.matmul %543, %39, %cst_119 {dimension_numbers = #tpu.dot_dimension_numbers<[1], [0], [0], [1], [0, 0, 1, 1], [], []>} : vector<8x64xbf16>, vector<64x128xbf16>, vector<8x128xf32> -> vector<8x128xf32>
    %545 = vector.broadcast %43 : vector<1x128xf32> to vector<8x128xf32>
    %546 = arith.addf %544, %545 : vector<8x128xf32>
    %547 = vector.broadcast %52 : vector<1x128xf32> to vector<8x128xf32>
    %548 = arith.mulf %546, %547 : vector<8x128xf32>
    %549 = arith.negf %548 : vector<8x128xf32>
    %550 = math.exp %549 : vector<8x128xf32>
    %cst_120 = arith.constant 1.000000e+00 : f32
    %551 = vector.broadcast %cst_120 : f32 to vector<8x128xf32>
    %552 = arith.addf %551, %550 : vector<8x128xf32>
    %553 = arith.divf %551, %552 : vector<8x128xf32>
    %554 = vector.extract_strided_slice %553 {offsets = [0, 0], sizes = [8, 32], strides = [1, 1]} : vector<8x128xf32> to vector<8x32xf32>
    %555 = vector.extract_strided_slice %553 {offsets = [0, 32], sizes = [8, 32], strides = [1, 1]} : vector<8x128xf32> to vector<8x32xf32>
    %556 = vector.extract_strided_slice %553 {offsets = [0, 64], sizes = [8, 32], strides = [1, 1]} : vector<8x128xf32> to vector<8x32xf32>
    %cst_121 = arith.constant 2.000000e+00 : f32
    %557 = vector.broadcast %cst_121 : f32 to vector<8x32xf32>
    %558 = arith.mulf %557, %556 : vector<8x32xf32>
    %cst_122 = arith.constant 1.000000e+00 : f32
    %559 = vector.broadcast %cst_122 : f32 to vector<8x32xf32>
    %560 = arith.subf %558, %559 : vector<8x32xf32>
    %561 = vector.extract_strided_slice %553 {offsets = [0, 96], sizes = [8, 32], strides = [1, 1]} : vector<8x128xf32> to vector<8x32xf32>
    %562 = arith.mulf %555, %511 : vector<8x32xf32>
    %563 = arith.mulf %554, %560 : vector<8x32xf32>
    %564 = arith.addf %562, %563 : vector<8x32xf32>
    %565 = math.tanh %564 : vector<8x32xf32>
    %566 = arith.mulf %561, %565 : vector<8x32xf32>
    %c2 = arith.constant 2 : index
    %c0_123 = arith.constant 0 : index
    %c0_124 = arith.constant 0 : index
    %567 = vector.load %arg1[%c2, %c0_123, %c0_124] : memref<4x8x32xf32, #tpu.memory_space<vmem>>, vector<1x8x32xf32>
    %568 = vector.shape_cast %567 : vector<1x8x32xf32> to vector<8x32xf32>
    %569 = arith.addf %566, %568 : vector<8x32xf32>
    %570 = tpu.concatenate %569, %541 in 1 : vector<8x32xf32>, vector<8x32xf32> -> vector<8x64xf32>
    %571 = arith.truncf %570 : vector<8x64xf32> to vector<8x64xbf16>
    %cst_125 = arith.constant dense<0.000000e+00> : vector<8x128xf32>
    %572 = tpu.matmul %571, %37, %cst_125 {dimension_numbers = #tpu.dot_dimension_numbers<[1], [0], [0], [1], [0, 0, 1, 1], [], []>} : vector<8x64xbf16>, vector<64x128xbf16>, vector<8x128xf32> -> vector<8x128xf32>
    %573 = vector.broadcast %41 : vector<1x128xf32> to vector<8x128xf32>
    %574 = arith.addf %572, %573 : vector<8x128xf32>
    %575 = vector.broadcast %52 : vector<1x128xf32> to vector<8x128xf32>
    %576 = arith.mulf %574, %575 : vector<8x128xf32>
    %577 = arith.negf %576 : vector<8x128xf32>
    %578 = math.exp %577 : vector<8x128xf32>
    %cst_126 = arith.constant 1.000000e+00 : f32
    %579 = vector.broadcast %cst_126 : f32 to vector<8x128xf32>
    %580 = arith.addf %579, %578 : vector<8x128xf32>
    %581 = arith.divf %579, %580 : vector<8x128xf32>
    %582 = vector.extract_strided_slice %581 {offsets = [0, 0], sizes = [8, 32], strides = [1, 1]} : vector<8x128xf32> to vector<8x32xf32>
    %583 = vector.extract_strided_slice %581 {offsets = [0, 32], sizes = [8, 32], strides = [1, 1]} : vector<8x128xf32> to vector<8x32xf32>
    %584 = vector.extract_strided_slice %581 {offsets = [0, 64], sizes = [8, 32], strides = [1, 1]} : vector<8x128xf32> to vector<8x32xf32>
    %cst_127 = arith.constant 2.000000e+00 : f32
    %585 = vector.broadcast %cst_127 : f32 to vector<8x32xf32>
    %586 = arith.mulf %585, %584 : vector<8x32xf32>
    %cst_128 = arith.constant 1.000000e+00 : f32
    %587 = vector.broadcast %cst_128 : f32 to vector<8x32xf32>
    %588 = arith.subf %586, %587 : vector<8x32xf32>
    %589 = vector.extract_strided_slice %581 {offsets = [0, 96], sizes = [8, 32], strides = [1, 1]} : vector<8x128xf32> to vector<8x32xf32>
    %590 = arith.mulf %583, %539 : vector<8x32xf32>
    %591 = arith.mulf %582, %588 : vector<8x32xf32>
    %592 = arith.addf %590, %591 : vector<8x32xf32>
    %593 = math.tanh %592 : vector<8x32xf32>
    %594 = arith.mulf %589, %593 : vector<8x32xf32>
    %595 = tpu.concatenate %594, %566 in 1 : vector<8x32xf32>, vector<8x32xf32> -> vector<8x64xf32>
    %596 = arith.truncf %595 : vector<8x64xf32> to vector<8x64xbf16>
    %cst_129 = arith.constant dense<0.000000e+00> : vector<8x128xf32>
    %597 = tpu.matmul %596, %39, %cst_129 {dimension_numbers = #tpu.dot_dimension_numbers<[1], [0], [0], [1], [0, 0, 1, 1], [], []>} : vector<8x64xbf16>, vector<64x128xbf16>, vector<8x128xf32> -> vector<8x128xf32>
    %598 = vector.broadcast %43 : vector<1x128xf32> to vector<8x128xf32>
    %599 = arith.addf %597, %598 : vector<8x128xf32>
    %600 = vector.broadcast %52 : vector<1x128xf32> to vector<8x128xf32>
    %601 = arith.mulf %599, %600 : vector<8x128xf32>
    %602 = arith.negf %601 : vector<8x128xf32>
    %603 = math.exp %602 : vector<8x128xf32>
    %cst_130 = arith.constant 1.000000e+00 : f32
    %604 = vector.broadcast %cst_130 : f32 to vector<8x128xf32>
    %605 = arith.addf %604, %603 : vector<8x128xf32>
    %606 = arith.divf %604, %605 : vector<8x128xf32>
    %607 = vector.extract_strided_slice %606 {offsets = [0, 0], sizes = [8, 32], strides = [1, 1]} : vector<8x128xf32> to vector<8x32xf32>
    %608 = vector.extract_strided_slice %606 {offsets = [0, 32], sizes = [8, 32], strides = [1, 1]} : vector<8x128xf32> to vector<8x32xf32>
    %609 = vector.extract_strided_slice %606 {offsets = [0, 64], sizes = [8, 32], strides = [1, 1]} : vector<8x128xf32> to vector<8x32xf32>
    %cst_131 = arith.constant 2.000000e+00 : f32
    %610 = vector.broadcast %cst_131 : f32 to vector<8x32xf32>
    %611 = arith.mulf %610, %609 : vector<8x32xf32>
    %cst_132 = arith.constant 1.000000e+00 : f32
    %612 = vector.broadcast %cst_132 : f32 to vector<8x32xf32>
    %613 = arith.subf %611, %612 : vector<8x32xf32>
    %614 = vector.extract_strided_slice %606 {offsets = [0, 96], sizes = [8, 32], strides = [1, 1]} : vector<8x128xf32> to vector<8x32xf32>
    %615 = arith.mulf %608, %564 : vector<8x32xf32>
    %616 = arith.mulf %607, %613 : vector<8x32xf32>
    %617 = arith.addf %615, %616 : vector<8x32xf32>
    %618 = math.tanh %617 : vector<8x32xf32>
    %619 = arith.mulf %614, %618 : vector<8x32xf32>
    %c3 = arith.constant 3 : index
    %c0_133 = arith.constant 0 : index
    %c0_134 = arith.constant 0 : index
    %620 = vector.load %arg1[%c3, %c0_133, %c0_134] : memref<4x8x32xf32, #tpu.memory_space<vmem>>, vector<1x8x32xf32>
    %621 = vector.shape_cast %620 : vector<1x8x32xf32> to vector<8x32xf32>
    %622 = arith.addf %619, %621 : vector<8x32xf32>
    %623 = tpu.concatenate %460, %513, %566, %619 in 1 : vector<8x32xf32>, vector<8x32xf32>, vector<8x32xf32>, vector<8x32xf32> -> vector<8x128xf32>
    %c0_135 = arith.constant 0 : index
    %c0_136 = arith.constant 0 : index
    %624 = vector.load %arg17[%c0_135, %c0_136] : memref<8x128xf32, #tpu.memory_space<vmem>>, vector<8x128xf32>
    tpu.vector_store %arg17[%c0_135, %c0_136], %623 {strides = array<i32>} : memref<8x128xf32, #tpu.memory_space<vmem>>, vector<8x128xf32>,
    %625 = tpu.concatenate %463, %516, %569, %622 in 1 : vector<8x32xf32>, vector<8x32xf32>, vector<8x32xf32>, vector<8x32xf32> -> vector<8x128xf32>
    %c0_137 = arith.constant 0 : index
    %c0_138 = arith.constant 0 : index
    %626 = vector.load %arg18[%c0_137, %c0_138] : memref<8x128xf32, #tpu.memory_space<vmem>>, vector<8x128xf32>
    tpu.vector_store %arg18[%c0_137, %c0_138], %625 {strides = array<i32>} : memref<8x128xf32, #tpu.memory_space<vmem>>, vector<8x128xf32>,
    %627 = tpu.concatenate %35, %463, %516, %569, %622 in 0 : vector<64x32xf32>, vector<8x32xf32>, vector<8x32xf32>, vector<8x32xf32>, vector<8x32xf32> -> vector<96x32xf32>
    %c0_139 = arith.constant 0 : index
    %c0_140 = arith.constant 0 : index
    %628 = vector.load %arg10[%c0_139, %c0_140] : memref<32x32xbf16, #tpu.memory_space<vmem>>, vector<32x32xbf16>
    %629 = arith.truncf %627 : vector<96x32xf32> to vector<96x32xbf16>
    %cst_141 = arith.constant dense<0.000000e+00> : vector<96x32xf32>
    %630 = tpu.matmul %629, %628, %cst_141 {dimension_numbers = #tpu.dot_dimension_numbers<[1], [0], [0], [1], [0, 0, 1, 1], [], []>} : vector<96x32xbf16>, vector<32x32xbf16>, vector<96x32xf32> -> vector<96x32xf32>
    %c0_142 = arith.constant 0 : index
    %c0_143 = arith.constant 0 : index
    %631 = vector.load %arg11[%c0_142, %c0_143] : memref<1x32xf32, #tpu.memory_space<vmem>>, vector<1x32xf32>
    %632 = vector.broadcast %631 : vector<1x32xf32> to vector<96x32xf32>
    %633 = arith.addf %630, %632 : vector<96x32xf32>
    %cst_144 = arith.constant 0.000000e+00 : f32
    %634 = vector.broadcast %cst_144 : f32 to vector<96x32xf32>
    %635 = arith.cmpf ogt, %633, %634 : vector<96x32xf32>
    %cst_145 = arith.constant 0.000000e+00 : f32
    %636 = vector.broadcast %cst_145 : f32 to vector<96x32xf32>
    %637 = arith.minimumf %633, %636 : vector<96x32xf32>
    %638 = math.exp %637 : vector<96x32xf32>
    %cst_146 = arith.constant 1.000000e+00 : f32
    %639 = vector.broadcast %cst_146 : f32 to vector<96x32xf32>
    %640 = arith.subf %638, %639 : vector<96x32xf32>
    %641 = arith.select %635, %633, %640 : vector<96x32xi1>, vector<96x32xf32>
    %c0_147 = arith.constant 0 : index
    %c0_148 = arith.constant 0 : index
    %642 = vector.load %arg12[%c0_147, %c0_148] : memref<32x32xbf16, #tpu.memory_space<vmem>>, vector<32x32xbf16>
    %643 = arith.truncf %641 : vector<96x32xf32> to vector<96x32xbf16>
    %cst_149 = arith.constant dense<0.000000e+00> : vector<96x32xf32>
    %644 = tpu.matmul %643, %642, %cst_149 {dimension_numbers = #tpu.dot_dimension_numbers<[1], [0], [0], [1], [0, 0, 1, 1], [], []>} : vector<96x32xbf16>, vector<32x32xbf16>, vector<96x32xf32> -> vector<96x32xf32>
    %c0_150 = arith.constant 0 : index
    %c0_151 = arith.constant 0 : index
    %645 = vector.load %arg13[%c0_150, %c0_151] : memref<1x32xf32, #tpu.memory_space<vmem>>, vector<1x32xf32>
    %646 = vector.broadcast %645 : vector<1x32xf32> to vector<96x32xf32>
    %647 = arith.addf %644, %646 : vector<96x32xf32>
    %cst_152 = arith.constant 0.000000e+00 : f32
    %648 = vector.broadcast %cst_152 : f32 to vector<96x32xf32>
    %649 = arith.cmpf ogt, %647, %648 : vector<96x32xf32>
    %cst_153 = arith.constant 0.000000e+00 : f32
    %650 = vector.broadcast %cst_153 : f32 to vector<96x32xf32>
    %651 = arith.minimumf %647, %650 : vector<96x32xf32>
    %652 = math.exp %651 : vector<96x32xf32>
    %cst_154 = arith.constant 1.000000e+00 : f32
    %653 = vector.broadcast %cst_154 : f32 to vector<96x32xf32>
    %654 = arith.subf %652, %653 : vector<96x32xf32>
    %655 = arith.select %649, %647, %654 : vector<96x32xi1>, vector<96x32xf32>
    %c0_155 = arith.constant 0 : index
    %c0_156 = arith.constant 0 : index
    %656 = vector.load %arg14[%c0_155, %c0_156] : memref<32x128xbf16, #tpu.memory_space<vmem>>, vector<32x128xbf16>
    %657 = arith.truncf %655 : vector<96x32xf32> to vector<96x32xbf16>
    %cst_157 = arith.constant dense<0.000000e+00> : vector<96x128xf32>
    %658 = tpu.matmul %657, %656, %cst_157 {dimension_numbers = #tpu.dot_dimension_numbers<[1], [0], [0], [1], [0, 0, 1, 1], [], []>} : vector<96x32xbf16>, vector<32x128xbf16>, vector<96x128xf32> -> vector<96x128xf32>
    %c0_158 = arith.constant 0 : index
    %c0_159 = arith.constant 0 : index
    %659 = vector.load %arg15[%c0_158, %c0_159] : memref<1x128xf32, #tpu.memory_space<vmem>>, vector<1x128xf32>
    %660 = vector.broadcast %659 : vector<1x128xf32> to vector<96x128xf32>
    %661 = arith.addf %658, %660 : vector<96x128xf32>
    %cst_160 = arith.constant 0.000000e+00 : f32
    %662 = vector.broadcast %cst_160 : f32 to vector<96x128xf32>
    %663 = arith.maximumf %661, %662 : vector<96x128xf32>
    %664 = math.absf %661 : vector<96x128xf32>
    %cst_161 = arith.constant 0.000000e+00 : f32
    %665 = vector.broadcast %cst_161 : f32 to vector<96x128xf32>
    %666 = arith.subf %665, %664 : vector<96x128xf32>
    %667 = math.exp %666 : vector<96x128xf32>
    %cst_162 = arith.constant 1.000000e+00 : f32
    %668 = vector.broadcast %cst_162 : f32 to vector<96x128xf32>
    %669 = arith.addf %668, %667 : vector<96x128xf32>
    %670 = math.log %669 : vector<96x128xf32>
    %671 = arith.addf %663, %670 : vector<96x128xf32>
    %c0_163 = arith.constant 0 : index
    %c0_164 = arith.constant 0 : index
    %672 = vector.load %arg16[%c0_163, %c0_164] : memref<96x128xf32, #tpu.memory_space<vmem>>, vector<96x128xf32>
    tpu.vector_store %arg16[%c0_163, %c0_164], %671 {strides = array<i32>} : memref<96x128xf32, #tpu.memory_space<vmem>>, vector<96x128xf32>,
    return
  }
}

</mosaic_0001>

<llo_original>
// kernel: tlae_forward.1
$region0: #{tlae_forward.1}
  #allocation0 [shape = 'u32[]', space=smem, size = 0x4, offset = 0x4, fixed_abs, tag = 'smem constant byte address 0x4 - core index']
  #allocation1 [shape = 'u32[144,128]{1,0:T(1,128)}', space=vmem, size = 0x12000, scoped, tag = 'internal scratch']
  %s0 = inlined_call_operand.vmem [shape: f32[8,8,16], index: 0, kind: input, shape index: {}]
  %s1 = inlined_call_operand.vmem [shape: f32[4,8,32], index: 1, kind: input, shape index: {}]
  %s2 = inlined_call_operand.vmem [shape: bf16[16,32], index: 2, kind: input, shape index: {}]
  %s3 = inlined_call_operand.vmem [shape: f32[1,32], index: 3, kind: input, shape index: {}]
  %s4 = inlined_call_operand.vmem [shape: bf16[32,32], index: 4, kind: input, shape index: {}]
  %s5 = inlined_call_operand.vmem [shape: f32[1,32], index: 5, kind: input, shape index: {}]
  %s6 = inlined_call_operand.vmem [shape: bf16[32,32], index: 6, kind: input, shape index: {}]
  %s7 = inlined_call_operand.vmem [shape: f32[1,32], index: 7, kind: input, shape index: {}]
  %s8 = inlined_call_operand.vmem [shape: bf16[2,64,128], index: 8, kind: input, shape index: {}]
  %s9 = inlined_call_operand.vmem [shape: f32[2,1,128], index: 9, kind: input, shape index: {}]
  %s10 = inlined_call_operand.vmem [shape: bf16[32,32], index: 10, kind: input, shape index: {}]
  %s11 = inlined_call_operand.vmem [shape: f32[1,32], index: 11, kind: input, shape index: {}]
  %s12 = inlined_call_operand.vmem [shape: bf16[32,32], index: 12, kind: input, shape index: {}]
  %s13 = inlined_call_operand.vmem [shape: f32[1,32], index: 13, kind: input, shape index: {}]
  %s14 = inlined_call_operand.vmem [shape: bf16[32,128], index: 14, kind: input, shape index: {}]
  %s15 = inlined_call_operand.vmem [shape: f32[1,128], index: 15, kind: input, shape index: {}]
  %s16 = inlined_call_operand.vmem [shape: f32[96,128], index: 16, kind: output, shape index: {0}]
  %s17 = inlined_call_operand.vmem [shape: f32[8,128], index: 17, kind: output, shape index: {1}]
  %s18 = inlined_call_operand.vmem [shape: f32[8,128], index: 18, kind: output, shape index: {2}]
  %19 = xla_tuple %s16, %s17, %s18
  %s20 = sld [smem:[#allocation0]]
  $region90: #{tlae_forward.1} parent=0
    _
  %s22 = ssub.s32 1, %s20
  %s23 = scalar_select 0, %s22, %s20
  // Predicated region
  $region2: #{tlae_forward.1} parent=0 // pred_check
    _
  $region3: #{tlae_forward.1} parent=0 // pred_check_branch
    %25 = sbr.rel (0) target = $region5
  $region4: #{tlae_forward.1} parent=0 // pred_region
    _
  $region5: #{tlae_forward.1} parent=0 // pred_fallthru
    _
  // Predicated region
  $region6: #{tlae_forward.1} parent=0 // pred_check
    _
  $region7: #{tlae_forward.1} parent=0 // pred_check_branch
    %27 = sbr.rel (0) target = $region9
  $region8: #{tlae_forward.1} parent=0 // pred_region
    _
  $region9: #{tlae_forward.1} parent=0 // pred_fallthru
    _
  // Predicated region
  $region10: #{tlae_forward.1} parent=0 // pred_check
    _
  $region11: #{tlae_forward.1} parent=0 // pred_check_branch
    %29 = sbr.rel (0) target = $region13
  $region12: #{tlae_forward.1} parent=0 // pred_region
    _
  $region13: #{tlae_forward.1} parent=0 // pred_fallthru
    _
  // Predicated region
  $region14: #{tlae_forward.1} parent=0 // pred_check
    _
  $region15: #{tlae_forward.1} parent=0 // pred_check_branch
    %31 = sbr.rel (0) target = $region17
  $region16: #{tlae_forward.1} parent=0 // pred_region
    _
  $region17: #{tlae_forward.1} parent=0 // pred_fallthru
    _
  // Predicated region
  $region18: #{tlae_forward.1} parent=0 // pred_check
    _
  $region19: #{tlae_forward.1} parent=0 // pred_check_branch
    %33 = sbr.rel (0) target = $region21
  $region20: #{tlae_forward.1} parent=0 // pred_region
    _
  $region21: #{tlae_forward.1} parent=0 // pred_fallthru
    _
  // Predicated region
  $region22: #{tlae_forward.1} parent=0 // pred_check
    _
  $region23: #{tlae_forward.1} parent=0 // pred_check_branch
    %35 = sbr.rel (0) target = $region25
  $region24: #{tlae_forward.1} parent=0 // pred_region
    _
  $region25: #{tlae_forward.1} parent=0 // pred_fallthru
    _
  // Predicated region
  $region26: #{tlae_forward.1} parent=0 // pred_check
    _
  $region27: #{tlae_forward.1} parent=0 // pred_check_branch
    %37 = sbr.rel (0) target = $region29
  $region28: #{tlae_forward.1} parent=0 // pred_region
    _
  $region29: #{tlae_forward.1} parent=0 // pred_fallthru
    _
  // Predicated region
  $region30: #{tlae_forward.1} parent=0 // pred_check
    _
  $region31: #{tlae_forward.1} parent=0 // pred_check_branch
    %39 = sbr.rel (0) target = $region33
  $region32: #{tlae_forward.1} parent=0 // pred_region
    _
  $region33: #{tlae_forward.1} parent=0 // pred_fallthru
    _
  // Predicated region
  $region34: #{tlae_forward.1} parent=0 // pred_check
    _
  $region35: #{tlae_forward.1} parent=0 // pred_check_branch
    %41 = sbr.rel (0) target = $region37
  $region36: #{tlae_forward.1} parent=0 // pred_region
    _
  $region37: #{tlae_forward.1} parent=0 // pred_fallthru
    _
  // Predicated region
  $region38: #{tlae_forward.1} parent=0 // pred_check
    _
  $region39: #{tlae_forward.1} parent=0 // pred_check_branch
    %43 = sbr.rel (0) target = $region41
  $region40: #{tlae_forward.1} parent=0 // pred_region
    _
  $region41: #{tlae_forward.1} parent=0 // pred_fallthru
    _
  // Predicated region
  $region42: #{tlae_forward.1} parent=0 // pred_check
    _
  $region43: #{tlae_forward.1} parent=0 // pred_check_branch
    %45 = sbr.rel (0) target = $region45
  $region44: #{tlae_forward.1} parent=0 // pred_region
    _
  $region45: #{tlae_forward.1} parent=0 // pred_fallthru
    _
  // Predicated region
  $region46: #{tlae_forward.1} parent=0 // pred_check
    _
  $region47: #{tlae_forward.1} parent=0 // pred_check_branch
    %47 = sbr.rel (0) target = $region49
  $region48: #{tlae_forward.1} parent=0 // pred_region
    _
  $region49: #{tlae_forward.1} parent=0 // pred_fallthru
    _
  // Predicated region
  $region50: #{tlae_forward.1} parent=0 // pred_check
    _
  $region51: #{tlae_forward.1} parent=0 // pred_check_branch
    %49 = sbr.rel (0) target = $region53
  $region52: #{tlae_forward.1} parent=0 // pred_region
    _
  $region53: #{tlae_forward.1} parent=0 // pred_fallthru
    _
  // Predicated region
  $region54: #{tlae_forward.1} parent=0 // pred_check
    _
  $region55: #{tlae_forward.1} parent=0 // pred_check_branch
    %51 = sbr.rel (0) target = $region57
  $region56: #{tlae_forward.1} parent=0 // pred_region
    _
  $region57: #{tlae_forward.1} parent=0 // pred_fallthru
    _
  // Predicated region
  $region58: #{tlae_forward.1} parent=0 // pred_check
    _
  $region59: #{tlae_forward.1} parent=0 // pred_check_branch
    %53 = sbr.rel (0) target = $region61
  $region60: #{tlae_forward.1} parent=0 // pred_region
    _
  $region61: #{tlae_forward.1} parent=0 // pred_fallthru
    _
  // Predicated region
  $region62: #{tlae_forward.1} parent=0 // pred_check
    _
  $region63: #{tlae_forward.1} parent=0 // pred_check_branch
    %55 = sbr.rel (0) target = $region65
  $region64: #{tlae_forward.1} parent=0 // pred_region
    _
  $region65: #{tlae_forward.1} parent=0 // pred_fallthru
    _
  %v57 = vld [vmem:[%s0] sm:$0xff]
  %v58 = vld [vmem:[%s0 + $0x8] sm:$0xff]
  %v59 = vld [vmem:[%s0 + $0x10] sm:$0xff]
  %v60 = vld [vmem:[%s0 + $0x18] sm:$0xff]
  %v61 = vld [vmem:[%s0 + $0x20] sm:$0xff]
  %v62 = vld [vmem:[%s0 + $0x28] sm:$0xff]
  %v63 = vld [vmem:[%s0 + $0x30] sm:$0xff]
  %v64 = vld [vmem:[%s0 + $0x38] sm:$0xff]
  %v65 = vld [vmem:[%s2] sm:$0xf]
  %v66 = vld [vmem:[%s2 + $0x4] sm:$0xf]
  %v67 = vpack.c.bf16 %v58, %v57
  %v68 = vpack.c.bf16 %v60, %v59
  %v69 = vpack.c.bf16 %v62, %v61
  %v70 = vpack.c.bf16 %v64, %v63
  %v71 = vld [vmem:[%s3] sm:$0x1]
  %v73 = vlaneseq
  %v74 = vshrl.u32 %v73, 7
  %v75 = vsub.s32 0, %v74
  %v76 = vrot.slane %v71, %v75
  %v80 = vunpack.c.l.b16 %v65
  %v81 = vunpack.c.l.b16 %v66
  %v82 = vpack.c.b16 %v81, %v80
  %vm84 = vcmask 130048
  %v86 = vsel %vm84, %v67, 0
  %v89 = vsel %vm84, %v68, 0
  %v92 = vsel %vm84, %v69, 0
  %v95 = vsel %vm84, %v70, 0
  %97 = vmatprep.subr.bf16.mxu0 0
  %98 = vmatpush1.bf16.msra.mxu0 %v82
  %99 = vmatprep.subr.bf16.mxu0 0
  %100 = vmatpush1.bf16.msra.mxu0 0
  %101 = vmatprep.subr.bf16.mxu0 0
  %102 = vmatpush1.bf16.msra.mxu0 0
  %103 = vmatprep.subr.bf16.mxu0 0
  %104 = vmatpush1.bf16.msra.mxu0 0
  %105 = vmatprep.subr.bf16.mxu0 0
  %106 = vmatpush1.bf16.msra.mxu0 0
  %107 = vmatprep.subr.bf16.mxu0 0
  %108 = vmatpush1.bf16.msra.mxu0 0
  %109 = vmatprep.subr.bf16.mxu0 0
  %110 = vmatpush1.bf16.msra.mxu0 0
  %111 = vmatprep.subr.bf16.mxu0 0
  %112 = vmatpush1.bf16.msra.mxu0 0
  %113 = vmatprep.subr.bf16.mxu0 0
  %114 = vmatpush1.bf16.msra.mxu0 0
  %115 = vmatprep.subr.bf16.mxu0 0
  %116 = vmatpush1.bf16.msra.mxu0 0
  %117 = vmatprep.subr.bf16.mxu0 0
  %118 = vmatpush1.bf16.msra.mxu0 0
  %119 = vmatprep.subr.bf16.mxu0 0
  %120 = vmatpush1.bf16.msra.mxu0 0
  %121 = vmatprep.subr.bf16.mxu0 0
  %122 = vmatpush1.bf16.msra.mxu0 0
  %123 = vmatprep.subr.bf16.mxu0 0
  %124 = vmatpush1.bf16.msra.mxu0 0
  %125 = vmatprep.subr.bf16.mxu0 0
  %126 = vmatpush1.bf16.msra.mxu0 0
  %127 = vmatprep.subr.bf16.mxu0 0
  %128 = vmatpush1.bf16.msra.mxu0 0
  %129 = vmatprep.mubr.bf16.mxu0 0
  %130 = vmatmul.mubr.bf16.gmra.mrb[0].mxu0 %v86
  %v131 = vpop.f32.mrb[0].mxu0
  %v132 = vadd.f32 %v76, %v131
  %v133 = vpop.f32.mrb[0].mxu0
  %v134 = vpop.f32.mrb[0].mxu0
  %v135 = vadd.f32 %v76, %v134
  %v136 = vpop.f32.mrb[0].mxu0
  %137 = vmatprep.mubr.bf16.mxu0 0
  %138 = vmatmul.mubr.bf16.gmra.mrb[0].mxu0 %v89
  %v139 = vpop.f32.mrb[0].mxu0
  %v140 = vadd.f32 %v76, %v139
  %v141 = vpop.f32.mrb[0].mxu0
  %v142 = vpop.f32.mrb[0].mxu0
  %v143 = vadd.f32 %v76, %v142
  %v144 = vpop.f32.mrb[0].mxu0
  %145 = vmatprep.mubr.bf16.mxu0 0
  %146 = vmatmul.mubr.bf16.gmra.mrb[0].mxu0 %v92
  %v147 = vpop.f32.mrb[0].mxu0
  %v148 = vadd.f32 %v76, %v147
  %v149 = vpop.f32.mrb[0].mxu0
  %v150 = vpop.f32.mrb[0].mxu0
  %v151 = vadd.f32 %v76, %v150
  %v152 = vpop.f32.mrb[0].mxu0
  %153 = vmatprep.mubr.bf16.mxu0 0
  %154 = vmatmul.mubr.bf16.gmra.mrb[0].mxu0 %v95
  %v155 = vpop.f32.mrb[0].mxu0
  %v156 = vadd.f32 %v76, %v155
  %v157 = vpop.f32.mrb[0].mxu0
  %v158 = vpop.f32.mrb[0].mxu0
  %v159 = vadd.f32 %v76, %v158
  %v160 = vpop.f32.mrb[0].mxu0
  %161 = vdwg.mxu0
  %vm162 = vcmp.gt.f32.partialorder %v132, 0.0
  %vm163 = vcmp.gt.f32.partialorder %v135, 0.0
  %vm164 = vcmp.gt.f32.partialorder %v140, 0.0
  %vm165 = vcmp.gt.f32.partialorder %v143, 0.0
  %vm166 = vcmp.gt.f32.partialorder %v148, 0.0
  %vm167 = vcmp.gt.f32.partialorder %v151, 0.0
  %vm168 = vcmp.gt.f32.partialorder %v156, 0.0
  %vm169 = vcmp.gt.f32.partialorder %v159, 0.0
  %v170 = vmin.f32 %v132, 0.0
  %v171 = vmin.f32 %v135, 0.0
  %v172 = vmin.f32 %v140, 0.0
  %v173 = vmin.f32 %v143, 0.0
  %v174 = vmin.f32 %v148, 0.0
  %v175 = vmin.f32 %v151, 0.0
  %v176 = vmin.f32 %v156, 0.0
  %v177 = vmin.f32 %v159, 0.0
  %v178 = vmul.f32 %v170, 1.442695
  %v179 = vpow.pop %v178
  %v180 = vmul.f32 %v171, 1.442695
  %v181 = vpow.pop %v180
  %v182 = vmul.f32 %v172, 1.442695
  %v183 = vpow.pop %v182
  %v184 = vmul.f32 %v173, 1.442695
  %v185 = vpow.pop %v184
  %v186 = vmul.f32 %v174, 1.442695
  %v187 = vpow.pop %v186
  %v188 = vmul.f32 %v175, 1.442695
  %v189 = vpow.pop %v188
  %v190 = vmul.f32 %v176, 1.442695
  %v191 = vpow.pop %v190
  %v192 = vmul.f32 %v177, 1.442695
  %v193 = vpow.pop %v192
  %v194 = vsub.f32 %v179, 1.0
  %v195 = vsub.f32 %v181, 1.0
  %v196 = vsub.f32 %v183, 1.0
  %v197 = vsub.f32 %v185, 1.0
  %v198 = vsub.f32 %v187, 1.0
  %v199 = vsub.f32 %v189, 1.0
  %v200 = vsub.f32 %v191, 1.0
  %v201 = vsub.f32 %v193, 1.0
  %v202 = vsel %vm162, %v132, %v194
  %v203 = vsel %vm163, %v135, %v195
  %v204 = vsel %vm164, %v140, %v196
  %v205 = vsel %vm165, %v143, %v197
  %v206 = vsel %vm166, %v148, %v198
  %v207 = vsel %vm167, %v151, %v199
  %v208 = vsel %vm168, %v156, %v200
  %v209 = vsel %vm169, %v159, %v201
  %v210 = vld [vmem:[%s4] sm:$0xf]
  %v211 = vld [vmem:[%s4 + $0x4] sm:$0xf]
  %v212 = vld [vmem:[%s4 + $0x8] sm:$0xf]
  %v213 = vld [vmem:[%s4 + $0xc] sm:$0xf]
  %v214 = vpack.c.bf16 %v203, %v202
  %v215 = vpack.c.bf16 %v205, %v204
  %v216 = vpack.c.bf16 %v207, %v206
  %v217 = vpack.c.bf16 %v209, %v208
  %v218 = vld [vmem:[%s5] sm:$0x1]
  %v220 = vlaneseq
  %v221 = vshrl.u32 %v220, 7
  %v222 = vsub.s32 0, %v221
  %v223 = vrot.slane %v218, %v222
  %v229 = vunpack.c.l.b16 %v210
  %v230 = vunpack.c.l.b16 %v211
  %v231 = vunpack.c.l.b16 %v212
  %v232 = vunpack.c.l.b16 %v213
  %v233 = vpack.c.b16 %v230, %v229
  %v234 = vpack.c.b16 %v232, %v231
  %vm237 = vcmask 261120
  %v239 = vsel %vm237, %v214, 0
  %v242 = vsel %vm237, %v215, 0
  %v245 = vsel %vm237, %v216, 0
  %v248 = vsel %vm237, %v217, 0
  %250 = vmatprep.subr.bf16.mxu0 0
  %251 = vmatpush1.bf16.msra.mxu0 %v233
  %252 = vmatprep.subr.bf16.mxu0 0
  %253 = vmatpush1.bf16.msra.mxu0 %v234
  %254 = vmatprep.subr.bf16.mxu0 0
  %255 = vmatpush1.bf16.msra.mxu0 0
  %256 = vmatprep.subr.bf16.mxu0 0
  %257 = vmatpush1.bf16.msra.mxu0 0
  %258 = vmatprep.subr.bf16.mxu0 0
  %259 = vmatpush1.bf16.msra.mxu0 0
  %260 = vmatprep.subr.bf16.mxu0 0
  %261 = vmatpush1.bf16.msra.mxu0 0
  %262 = vmatprep.subr.bf16.mxu0 0
  %263 = vmatpush1.bf16.msra.mxu0 0
  %264 = vmatprep.subr.bf16.mxu0 0
  %265 = vmatpush1.bf16.msra.mxu0 0
  %266 = vmatprep.subr.bf16.mxu0 0
  %267 = vmatpush1.bf16.msra.mxu0 0
  %268 = vmatprep.subr.bf16.mxu0 0
  %269 = vmatpush1.bf16.msra.mxu0 0
  %270 = vmatprep.subr.bf16.mxu0 0
  %271 = vmatpush1.bf16.msra.mxu0 0
  %272 = vmatprep.subr.bf16.mxu0 0
  %273 = vmatpush1.bf16.msra.mxu0 0
  %274 = vmatprep.subr.bf16.mxu0 0
  %275 = vmatpush1.bf16.msra.mxu0 0
  %276 = vmatprep.subr.bf16.mxu0 0
  %277 = vmatpush1.bf16.msra.mxu0 0
  %278 = vmatprep.subr.bf16.mxu0 0
  %279 = vmatpush1.bf16.msra.mxu0 0
  %280 = vmatprep.subr.bf16.mxu0 0
  %281 = vmatpush1.bf16.msra.mxu0 0
  %282 = vmatprep.mubr.bf16.mxu0 0
  %283 = vmatmul.mubr.bf16.gmra.mrb[0].mxu0 %v239
  %v284 = vpop.f32.mrb[0].mxu0
  %v285 = vadd.f32 %v223, %v284
  %v286 = vpop.f32.mrb[0].mxu0
  %v287 = vpop.f32.mrb[0].mxu0
  %v288 = vadd.f32 %v223, %v287
  %v289 = vpop.f32.mrb[0].mxu0
  %290 = vmatprep.mubr.bf16.mxu0 0
  %291 = vmatmul.mubr.bf16.gmra.mrb[0].mxu0 %v242
  %v292 = vpop.f32.mrb[0].mxu0
  %v293 = vadd.f32 %v223, %v292
  %v294 = vpop.f32.mrb[0].mxu0
  %v295 = vpop.f32.mrb[0].mxu0
  %v296 = vadd.f32 %v223, %v295
  %v297 = vpop.f32.mrb[0].mxu0
  %298 = vmatprep.mubr.bf16.mxu0 0
  %299 = vmatmul.mubr.bf16.gmra.mrb[0].mxu0 %v245
  %v300 = vpop.f32.mrb[0].mxu0
  %v301 = vadd.f32 %v223, %v300
  %v302 = vpop.f32.mrb[0].mxu0
  %v303 = vpop.f32.mrb[0].mxu0
  %v304 = vadd.f32 %v223, %v303
  %v305 = vpop.f32.mrb[0].mxu0
  %306 = vmatprep.mubr.bf16.mxu0 0
  %307 = vmatmul.mubr.bf16.gmra.mrb[0].mxu0 %v248
  %v308 = vpop.f32.mrb[0].mxu0
  %v309 = vadd.f32 %v223, %v308
  %v310 = vpop.f32.mrb[0].mxu0
  %v311 = vpop.f32.mrb[0].mxu0
  %v312 = vadd.f32 %v223, %v311
  %v313 = vpop.f32.mrb[0].mxu0
  %314 = vdwg.mxu0
  %vm315 = vcmp.gt.f32.partialorder %v285, 0.0
  %vm316 = vcmp.gt.f32.partialorder %v288, 0.0
  %vm317 = vcmp.gt.f32.partialorder %v293, 0.0
  %vm318 = vcmp.gt.f32.partialorder %v296, 0.0
  %vm319 = vcmp.gt.f32.partialorder %v301, 0.0
  %vm320 = vcmp.gt.f32.partialorder %v304, 0.0
  %vm321 = vcmp.gt.f32.partialorder %v309, 0.0
  %vm322 = vcmp.gt.f32.partialorder %v312, 0.0
  %v323 = vmin.f32 %v285, 0.0
  %v324 = vmin.f32 %v288, 0.0
  %v325 = vmin.f32 %v293, 0.0
  %v326 = vmin.f32 %v296, 0.0
  %v327 = vmin.f32 %v301, 0.0
  %v328 = vmin.f32 %v304, 0.0
  %v329 = vmin.f32 %v309, 0.0
  %v330 = vmin.f32 %v312, 0.0
  %v331 = vmul.f32 %v323, 1.442695
  %v332 = vpow.pop %v331
  %v333 = vmul.f32 %v324, 1.442695
  %v334 = vpow.pop %v333
  %v335 = vmul.f32 %v325, 1.442695
  %v336 = vpow.pop %v335
  %v337 = vmul.f32 %v326, 1.442695
  %v338 = vpow.pop %v337
  %v339 = vmul.f32 %v327, 1.442695
  %v340 = vpow.pop %v339
  %v341 = vmul.f32 %v328, 1.442695
  %v342 = vpow.pop %v341
  %v343 = vmul.f32 %v329, 1.442695
  %v344 = vpow.pop %v343
  %v345 = vmul.f32 %v330, 1.442695
  %v346 = vpow.pop %v345
  %v347 = vsub.f32 %v332, 1.0
  %v348 = vsub.f32 %v334, 1.0
  %v349 = vsub.f32 %v336, 1.0
  %v350 = vsub.f32 %v338, 1.0
  %v351 = vsub.f32 %v340, 1.0
  %v352 = vsub.f32 %v342, 1.0
  %v353 = vsub.f32 %v344, 1.0
  %v354 = vsub.f32 %v346, 1.0
  %v355 = vsel %vm315, %v285, %v347
  %v356 = vsel %vm316, %v288, %v348
  %v357 = vsel %vm317, %v293, %v349
  %v358 = vsel %vm318, %v296, %v350
  %v359 = vsel %vm319, %v301, %v351
  %v360 = vsel %vm320, %v304, %v352
  %v361 = vsel %vm321, %v309, %v353
  %v362 = vsel %vm322, %v312, %v354
  %v363 = vld [vmem:[%s6] sm:$0xf]
  %v364 = vld [vmem:[%s6 + $0x4] sm:$0xf]
  %v365 = vld [vmem:[%s6 + $0x8] sm:$0xf]
  %v366 = vld [vmem:[%s6 + $0xc] sm:$0xf]
  %v367 = vpack.c.bf16 %v356, %v355
  %v368 = vpack.c.bf16 %v358, %v357
  %v369 = vpack.c.bf16 %v360, %v359
  %v370 = vpack.c.bf16 %v362, %v361
  %v371 = vld [vmem:[%s7] sm:$0x1]
  %v373 = vlaneseq
  %v374 = vshrl.u32 %v373, 7
  %v375 = vsub.s32 0, %v374
  %v376 = vrot.slane %v371, %v375
  %v382 = vunpack.c.l.b16 %v363
  %v383 = vunpack.c.l.b16 %v364
  %v384 = vunpack.c.l.b16 %v365
  %v385 = vunpack.c.l.b16 %v366
  %v386 = vpack.c.b16 %v383, %v382
  %v387 = vpack.c.b16 %v385, %v384
  %v391 = vsel %vm237, %v367, 0
  %v394 = vsel %vm237, %v368, 0
  %v397 = vsel %vm237, %v369, 0
  %v400 = vsel %vm237, %v370, 0
  %402 = vmatprep.subr.bf16.mxu0 0
  %403 = vmatpush1.bf16.msra.mxu0 %v386
  %404 = vmatprep.subr.bf16.mxu0 0
  %405 = vmatpush1.bf16.msra.mxu0 %v387
  %406 = vmatprep.subr.bf16.mxu0 0
  %407 = vmatpush1.bf16.msra.mxu0 0
  %408 = vmatprep.subr.bf16.mxu0 0
  %409 = vmatpush1.bf16.msra.mxu0 0
  %410 = vmatprep.subr.bf16.mxu0 0
  %411 = vmatpush1.bf16.msra.mxu0 0
  %412 = vmatprep.subr.bf16.mxu0 0
  %413 = vmatpush1.bf16.msra.mxu0 0
  %414 = vmatprep.subr.bf16.mxu0 0
  %415 = vmatpush1.bf16.msra.mxu0 0
  %416 = vmatprep.subr.bf16.mxu0 0
  %417 = vmatpush1.bf16.msra.mxu0 0
  %418 = vmatprep.subr.bf16.mxu0 0
  %419 = vmatpush1.bf16.msra.mxu0 0
  %420 = vmatprep.subr.bf16.mxu0 0
  %421 = vmatpush1.bf16.msra.mxu0 0
  %422 = vmatprep.subr.bf16.mxu0 0
  %423 = vmatpush1.bf16.msra.mxu0 0
  %424 = vmatprep.subr.bf16.mxu0 0
  %425 = vmatpush1.bf16.msra.mxu0 0
  %426 = vmatprep.subr.bf16.mxu0 0
  %427 = vmatpush1.bf16.msra.mxu0 0
  %428 = vmatprep.subr.bf16.mxu0 0
  %429 = vmatpush1.bf16.msra.mxu0 0
  %430 = vmatprep.subr.bf16.mxu0 0
  %431 = vmatpush1.bf16.msra.mxu0 0
  %432 = vmatprep.subr.bf16.mxu0 0
  %433 = vmatpush1.bf16.msra.mxu0 0
  %434 = vmatprep.mubr.bf16.mxu0 0
  %435 = vmatmul.mubr.bf16.gmra.mrb[0].mxu0 %v391
  %v436 = vpop.f32.mrb[0].mxu0
  %v437 = vadd.f32 %v376, %v436
  %v438 = vpop.f32.mrb[0].mxu0
  %v439 = vpop.f32.mrb[0].mxu0
  %v440 = vadd.f32 %v376, %v439
  %v441 = vpop.f32.mrb[0].mxu0
  %442 = vmatprep.mubr.bf16.mxu0 0
  %443 = vmatmul.mubr.bf16.gmra.mrb[0].mxu0 %v394
  %v444 = vpop.f32.mrb[0].mxu0
  %v445 = vadd.f32 %v376, %v444
  %v446 = vpop.f32.mrb[0].mxu0
  %v447 = vpop.f32.mrb[0].mxu0
  %v448 = vadd.f32 %v376, %v447
  %v449 = vpop.f32.mrb[0].mxu0
  %450 = vmatprep.mubr.bf16.mxu0 0
  %451 = vmatmul.mubr.bf16.gmra.mrb[0].mxu0 %v397
  %v452 = vpop.f32.mrb[0].mxu0
  %v453 = vadd.f32 %v376, %v452
  %v454 = vpop.f32.mrb[0].mxu0
  %v455 = vpop.f32.mrb[0].mxu0
  %v456 = vadd.f32 %v376, %v455
  %v457 = vpop.f32.mrb[0].mxu0
  %458 = vmatprep.mubr.bf16.mxu0 0
  %459 = vmatmul.mubr.bf16.gmra.mrb[0].mxu0 %v400
  %v460 = vpop.f32.mrb[0].mxu0
  %v461 = vadd.f32 %v376, %v460
  %v462 = vpop.f32.mrb[0].mxu0
  %v463 = vpop.f32.mrb[0].mxu0
  %v464 = vadd.f32 %v376, %v463
  %v465 = vpop.f32.mrb[0].mxu0
  %466 = vdwg.mxu0
  %v467 = vld [vmem:[%s8] sm:$0xf]
  %v468 = vld [vmem:[%s8 + $0x4] sm:$0xf]
  %v469 = vld [vmem:[%s8 + $0x8] sm:$0xf]
  %v470 = vld [vmem:[%s8 + $0xc] sm:$0xf]
  %v471 = vld [vmem:[%s8 + $0x10] sm:$0xf]
  %v472 = vld [vmem:[%s8 + $0x14] sm:$0xf]
  %v473 = vld [vmem:[%s8 + $0x18] sm:$0xf]
  %v474 = vld [vmem:[%s8 + $0x1c] sm:$0xf]
  %s475 = scalar_lea.vmem %s8, 32
  %v476 = vld [vmem:[%s475] sm:$0xf]
  %v477 = vld [vmem:[%s475 + $0x4] sm:$0xf]
  %v478 = vld [vmem:[%s475 + $0x8] sm:$0xf]
  %v479 = vld [vmem:[%s475 + $0xc] sm:$0xf]
  %v480 = vld [vmem:[%s475 + $0x10] sm:$0xf]
  %v481 = vld [vmem:[%s475 + $0x14] sm:$0xf]
  %v482 = vld [vmem:[%s475 + $0x18] sm:$0xf]
  %v483 = vld [vmem:[%s475 + $0x1c] sm:$0xf]
  %v484 = vld [vmem:[%s9] sm:$0x1]
  %s485 = scalar_lea.vmem %s9, 1
  %v486 = vld [vmem:[%s485] sm:$0x1]
  %v487 = vlaneseq
  %v488 = vand.u32 %v487, 127
  %vm489 = vcmp.ge.s32.totalorder %v488, 64
  %vm490 = vcmp.lt.s32.totalorder %v488, 96
  %vm491 = vmand %vm489, %vm490
  %v492 = vsel %vm491, 2.0, 1.0
  %v493 = vpack.c.bf16 %v440, %v437
  %v494 = vpack.c.bf16 %v448, %v445
  %v495 = vpack.c.bf16 %v456, %v453
  %v496 = vpack.c.bf16 %v464, %v461
  %v498 = vlaneseq
  %v499 = vshrl.u32 %v498, 7
  %v500 = vsub.s32 0, %v499
  %v501 = vrot.slane %v484, %v500
  %v507 = vunpack.c.l.b16 %v467
  %v508 = vunpack.c.l.b16 %v468
  %v509 = vunpack.c.l.b16 %v469
  %v510 = vunpack.c.l.b16 %v470
  %v511 = vpack.c.b16 %v508, %v507
  %v512 = vpack.c.b16 %v510, %v509
  %v516 = vsel %vm237, %v493, 0
  %v519 = vsel %vm237, %v494, 0
  %v522 = vsel %vm237, %v495, 0
  %v525 = vsel %vm237, %v496, 0
  %527 = vmatprep.subr.bf16.mxu0 0
  %528 = vmatpush1.bf16.msra.mxu0 %v511
  %529 = vmatprep.subr.bf16.mxu0 0
  %530 = vmatpush1.bf16.msra.mxu0 %v512
  %531 = vmatprep.subr.bf16.mxu0 0
  %532 = vmatpush1.bf16.msra.mxu0 0
  %533 = vmatprep.subr.bf16.mxu0 0
  %534 = vmatpush1.bf16.msra.mxu0 0
  %535 = vmatprep.subr.bf16.mxu0 0
  %536 = vmatpush1.bf16.msra.mxu0 0
  %537 = vmatprep.subr.bf16.mxu0 0
  %538 = vmatpush1.bf16.msra.mxu0 0
  %539 = vmatprep.subr.bf16.mxu0 0
  %540 = vmatpush1.bf16.msra.mxu0 0
  %541 = vmatprep.subr.bf16.mxu0 0
  %542 = vmatpush1.bf16.msra.mxu0 0
  %543 = vmatprep.subr.bf16.mxu0 0
  %544 = vmatpush1.bf16.msra.mxu0 0
  %545 = vmatprep.subr.bf16.mxu0 0
  %546 = vmatpush1.bf16.msra.mxu0 0
  %547 = vmatprep.subr.bf16.mxu0 0
  %548 = vmatpush1.bf16.msra.mxu0 0
  %549 = vmatprep.subr.bf16.mxu0 0
  %550 = vmatpush1.bf16.msra.mxu0 0
  %551 = vmatprep.subr.bf16.mxu0 0
  %552 = vmatpush1.bf16.msra.mxu0 0
  %553 = vmatprep.subr.bf16.mxu0 0
  %554 = vmatpush1.bf16.msra.mxu0 0
  %555 = vmatprep.subr.bf16.mxu0 0
  %556 = vmatpush1.bf16.msra.mxu0 0
  %557 = vmatprep.subr.bf16.mxu0 0
  %558 = vmatpush1.bf16.msra.mxu0 0
  %559 = vmatprep.mubr.bf16.mxu0 0
  %560 = vmatmul.mubr.bf16.gmra.mrb[0].mxu0 %v516
  %v561 = vpop.f32.mrb[0].mxu0
  %v562 = vadd.f32 %v501, %v561
  %v563 = vpop.f32.mrb[0].mxu0
  %v564 = vpop.f32.mrb[0].mxu0
  %v565 = vadd.f32 %v501, %v564
  %v566 = vpop.f32.mrb[0].mxu0
  %567 = vmatprep.mubr.bf16.mxu0 0
  %568 = vmatmul.mubr.bf16.gmra.mrb[0].mxu0 %v519
  %v569 = vpop.f32.mrb[0].mxu0
  %v570 = vadd.f32 %v501, %v569
  %v571 = vpop.f32.mrb[0].mxu0
  %v572 = vpop.f32.mrb[0].mxu0
  %v573 = vadd.f32 %v501, %v572
  %v574 = vpop.f32.mrb[0].mxu0
  %575 = vmatprep.mubr.bf16.mxu0 0
  %576 = vmatmul.mubr.bf16.gmra.mrb[0].mxu0 %v522
  %v577 = vpop.f32.mrb[0].mxu0
  %v578 = vadd.f32 %v501, %v577
  %v579 = vpop.f32.mrb[0].mxu0
  %v580 = vpop.f32.mrb[0].mxu0
  %v581 = vadd.f32 %v501, %v580
  %v582 = vpop.f32.mrb[0].mxu0
  %583 = vmatprep.mubr.bf16.mxu0 0
  %584 = vmatmul.mubr.bf16.gmra.mrb[0].mxu0 %v525
  %v585 = vpop.f32.mrb[0].mxu0
  %v586 = vadd.f32 %v501, %v585
  %v587 = vpop.f32.mrb[0].mxu0
  %v588 = vpop.f32.mrb[0].mxu0
  %v589 = vadd.f32 %v501, %v588
  %v590 = vpop.f32.mrb[0].mxu0
  %591 = vdwg.mxu0
  %v596 = vunpack.c.l.b16 %v471
  %v597 = vunpack.c.l.b16 %v472
  %v598 = vunpack.c.l.b16 %v473
  %v599 = vunpack.c.l.b16 %v474
  %v600 = vpack.c.b16 %v597, %v596
  %v601 = vpack.c.b16 %v599, %v598
  %v605 = vsel %vm237, 0, 0
  %607 = vmatprep.subr.bf16.mxu0 0
  %608 = vmatpush1.bf16.msra.mxu0 %v600
  %609 = vmatprep.subr.bf16.mxu0 0
  %610 = vmatpush1.bf16.msra.mxu0 %v601
  %611 = vmatprep.subr.bf16.mxu0 0
  %612 = vmatpush1.bf16.msra.mxu0 0
  %613 = vmatprep.subr.bf16.mxu0 0
  %614 = vmatpush1.bf16.msra.mxu0 0
  %615 = vmatprep.subr.bf16.mxu0 0
  %616 = vmatpush1.bf16.msra.mxu0 0
  %617 = vmatprep.subr.bf16.mxu0 0
  %618 = vmatpush1.bf16.msra.mxu0 0
  %619 = vmatprep.subr.bf16.mxu0 0
  %620 = vmatpush1.bf16.msra.mxu0 0
  %621 = vmatprep.subr.bf16.mxu0 0
  %622 = vmatpush1.bf16.msra.mxu0 0
  %623 = vmatprep.subr.bf16.mxu0 0
  %624 = vmatpush1.bf16.msra.mxu0 0
  %625 = vmatprep.subr.bf16.mxu0 0
  %626 = vmatpush1.bf16.msra.mxu0 0
  %627 = vmatprep.subr.bf16.mxu0 0
  %628 = vmatpush1.bf16.msra.mxu0 0
  %629 = vmatprep.subr.bf16.mxu0 0
  %630 = vmatpush1.bf16.msra.mxu0 0
  %631 = vmatprep.subr.bf16.mxu0 0
  %632 = vmatpush1.bf16.msra.mxu0 0
  %633 = vmatprep.subr.bf16.mxu0 0
  %634 = vmatpush1.bf16.msra.mxu0 0
  %635 = vmatprep.subr.bf16.mxu0 0
  %636 = vmatpush1.bf16.msra.mxu0 0
  %637 = vmatprep.subr.bf16.mxu0 0
  %638 = vmatpush1.bf16.msra.mxu0 0
  %639 = vmatprep.mubr.bf16.mxu0 0
  %640 = vmatmul.mubr.bf16.gmra.mrb[0].mxu0 %v605
  %v641 = vpop.f32.mrb[0].mxu0
  %v642 = vadd.f32 0.0, %v641
  %v643 = vpop.f32.mrb[0].mxu0
  %v644 = vpop.f32.mrb[0].mxu0
  %v645 = vpop.f32.mrb[0].mxu0
  %646 = vdwg.mxu0
  %v647 = vadd.f32 %v562, %v642
  %v648 = vmul.f32 %v647, %v492
  %v649 = vxor.u32 %v648, 2147483648
  %v650 = vmul.f32 %v649, 1.442695
  %v651 = vpow.pop %v650
  %v652 = vadd.f32 %v651, 1.0
  %v653 = vrcp.pop %v652
  %v654 = vmul.f32 1.0, %v653
  %v655 = vmul.f32 %v654, 2.0
  %v656 = vsub.f32 %v655, 1.0
  %v657 = vmul.f32 %v654, 0.0
  %659 = vrot.lane.b32.xlu0 %v656, 64
  %v660 = vpop.permute.xlu0 %659
  %v662 = vmul.f32 %v654, %v660
  %664 = vrot.lane.b32.xlu0 %v662, 32
  %v665 = vpop.permute.xlu0 %664
  %v667 = vadd.f32 %v657, %v665
  %v668 = vtanh.pop %v667
  %670 = vrot.lane.b32.xlu0 %v668, 64
  %v671 = vpop.permute.xlu0 %670
  %v673 = vmul.f32 %v654, %v671
  %675 = vrot.lane.b32.xlu0 %v673, 32
  %v676 = vpop.permute.xlu0 %675
  %v678 = vsel %vm237, %v676, 0.0
  %v679 = vpack.c.bf16 %v678, %v678
  %v681 = vlaneseq
  %v682 = vshrl.u32 %v681, 7
  %v683 = vsub.s32 0, %v682
  %v684 = vrot.slane %v486, %v683
  %v694 = vunpack.c.l.b16 %v476
  %v695 = vunpack.c.l.b16 %v477
  %v696 = vunpack.c.l.b16 %v478
  %v697 = vunpack.c.l.b16 %v479
  %v698 = vunpack.c.l.b16 %v480
  %v699 = vunpack.c.l.b16 %v481
  %v700 = vunpack.c.l.b16 %v482
  %v701 = vunpack.c.l.b16 %v483
  %v702 = vpack.c.b16 %v695, %v694
  %v703 = vpack.c.b16 %v697, %v696
  %v704 = vpack.c.b16 %v699, %v698
  %v705 = vpack.c.b16 %v701, %v700
  %vm710 = vcmask 523264
  %v712 = vsel %vm710, %v679, 0
  %714 = vmatprep.subr.bf16.mxu0 0
  %715 = vmatpush1.bf16.msra.mxu0 %v702
  %716 = vmatprep.subr.bf16.mxu0 0
  %717 = vmatpush1.bf16.msra.mxu0 %v703
  %718 = vmatprep.subr.bf16.mxu0 0
  %719 = vmatpush1.bf16.msra.mxu0 %v704
  %720 = vmatprep.subr.bf16.mxu0 0
  %721 = vmatpush1.bf16.msra.mxu0 %v705
  %722 = vmatprep.subr.bf16.mxu0 0
  %723 = vmatpush1.bf16.msra.mxu0 0
  %724 = vmatprep.subr.bf16.mxu0 0
  %725 = vmatpush1.bf16.msra.mxu0 0
  %726 = vmatprep.subr.bf16.mxu0 0
  %727 = vmatpush1.bf16.msra.mxu0 0
  %728 = vmatprep.subr.bf16.mxu0 0
  %729 = vmatpush1.bf16.msra.mxu0 0
  %730 = vmatprep.subr.bf16.mxu0 0
  %731 = vmatpush1.bf16.msra.mxu0 0
  %732 = vmatprep.subr.bf16.mxu0 0
  %733 = vmatpush1.bf16.msra.mxu0 0
  %734 = vmatprep.subr.bf16.mxu0 0
  %735 = vmatpush1.bf16.msra.mxu0 0
  %736 = vmatprep.subr.bf16.mxu0 0
  %737 = vmatpush1.bf16.msra.mxu0 0
  %738 = vmatprep.subr.bf16.mxu0 0
  %739 = vmatpush1.bf16.msra.mxu0 0
  %740 = vmatprep.subr.bf16.mxu0 0
  %741 = vmatpush1.bf16.msra.mxu0 0
  %742 = vmatprep.subr.bf16.mxu0 0
  %743 = vmatpush1.bf16.msra.mxu0 0
  %744 = vmatprep.subr.bf16.mxu0 0
  %745 = vmatpush1.bf16.msra.mxu0 0
  %746 = vmatprep.mubr.bf16.mxu0 0
  %747 = vmatmul.mubr.bf16.gmra.mrb[0].mxu0 %v712
  %v748 = vpop.f32.mrb[0].mxu0
  %v749 = vadd.f32 %v684, %v748
  %v750 = vpop.f32.mrb[0].mxu0
  %v751 = vpop.f32.mrb[0].mxu0
  %v752 = vpop.f32.mrb[0].mxu0
  %753 = vdwg.mxu0
  %v754 = vmul.f32 %v749, %v492
  %v755 = vxor.u32 %v754, 2147483648
  %v756 = vmul.f32 %v755, 1.442695
  %v757 = vpow.pop %v756
  %v758 = vadd.f32 %v757, 1.0
  %v759 = vrcp.pop %v758
  %v760 = vmul.f32 1.0, %v759
  %v761 = vmul.f32 %v760, 2.0
  %v762 = vsub.f32 %v761, 1.0
  %v763 = vmul.f32 %v760, 0.0
  %765 = vrot.lane.b32.xlu0 %v762, 64
  %v766 = vpop.permute.xlu0 %765
  %v768 = vmul.f32 %v760, %v766
  %770 = vrot.lane.b32.xlu0 %v768, 32
  %v771 = vpop.permute.xlu0 %770
  %v773 = vadd.f32 %v763, %v771
  %v774 = vtanh.pop %v773
  %776 = vrot.lane.b32.xlu0 %v774, 64
  %v777 = vpop.permute.xlu0 %776
  %v779 = vmul.f32 %v760, %v777
  %v780 = vpack.c.bf16 %v673, %v673
  %782 = vrot.lane.b32.xlu0 %v780, 32
  %v783 = vpop.permute.xlu0 %782
  %v785 = vsel %vm237, %v783, 0
  %787 = vmatprep.subr.bf16.mxu0 0
  %788 = vmatpush1.bf16.msra.mxu0 %v600
  %789 = vmatprep.subr.bf16.mxu0 0
  %790 = vmatpush1.bf16.msra.mxu0 %v601
  %791 = vmatprep.subr.bf16.mxu0 0
  %792 = vmatpush1.bf16.msra.mxu0 0
  %793 = vmatprep.subr.bf16.mxu0 0
  %794 = vmatpush1.bf16.msra.mxu0 0
  %795 = vmatprep.subr.bf16.mxu0 0
  %796 = vmatpush1.bf16.msra.mxu0 0
  %797 = vmatprep.subr.bf16.mxu0 0
  %798 = vmatpush1.bf16.msra.mxu0 0
  %799 = vmatprep.subr.bf16.mxu0 0
  %800 = vmatpush1.bf16.msra.mxu0 0
  %801 = vmatprep.subr.bf16.mxu0 0
  %802 = vmatpush1.bf16.msra.mxu0 0
  %803 = vmatprep.subr.bf16.mxu0 0
  %804 = vmatpush1.bf16.msra.mxu0 0
  %805 = vmatprep.subr.bf16.mxu0 0
  %806 = vmatpush1.bf16.msra.mxu0 0
  %807 = vmatprep.subr.bf16.mxu0 0
  %808 = vmatpush1.bf16.msra.mxu0 0
  %809 = vmatprep.subr.bf16.mxu0 0
  %810 = vmatpush1.bf16.msra.mxu0 0
  %811 = vmatprep.subr.bf16.mxu0 0
  %812 = vmatpush1.bf16.msra.mxu0 0
  %813 = vmatprep.subr.bf16.mxu0 0
  %814 = vmatpush1.bf16.msra.mxu0 0
  %815 = vmatprep.subr.bf16.mxu0 0
  %816 = vmatpush1.bf16.msra.mxu0 0
  %817 = vmatprep.subr.bf16.mxu0 0
  %818 = vmatpush1.bf16.msra.mxu0 0
  %819 = vmatprep.mubr.bf16.mxu0 0
  %820 = vmatmul.mubr.bf16.gmra.mrb[0].mxu0 %v785
  %v821 = vpop.f32.mrb[0].mxu0
  %v822 = vadd.f32 0.0, %v821
  %v823 = vpop.f32.mrb[0].mxu0
  %v824 = vpop.f32.mrb[0].mxu0
  %v825 = vpop.f32.mrb[0].mxu0
  %826 = vdwg.mxu0
  %v827 = vadd.f32 %v565, %v822
  %v828 = vmul.f32 %v827, %v492
  %v829 = vxor.u32 %v828, 2147483648
  %v830 = vmul.f32 %v829, 1.442695
  %v831 = vpow.pop %v830
  %v832 = vadd.f32 %v831, 1.0
  %v833 = vrcp.pop %v832
  %v834 = vmul.f32 1.0, %v833
  %v835 = vmul.f32 %v834, 2.0
  %v836 = vsub.f32 %v835, 1.0
  %v837 = vmul.f32 %v834, %v667
  %839 = vrot.lane.b32.xlu0 %v836, 64
  %v840 = vpop.permute.xlu0 %839
  %v842 = vmul.f32 %v834, %v840
  %844 = vrot.lane.b32.xlu0 %v842, 32
  %v845 = vpop.permute.xlu0 %844
  %v847 = vadd.f32 %v837, %v845
  %v848 = vtanh.pop %v847
  %850 = vrot.lane.b32.xlu0 %v848, 64
  %v851 = vpop.permute.xlu0 %850
  %v853 = vmul.f32 %v834, %v851
  %855 = vrot.lane.b32.xlu0 %v853, 32
  %v856 = vpop.permute.xlu0 %855
  %859 = vrot.lane.b32.xlu0 %v779, 64
  %v860 = vpop.permute.xlu0 %859
  %v862 = vsel %vm237, %v856, %v860
  %v863 = vpack.c.bf16 %v862, %v862
  %v865 = vsel %vm710, %v863, 0
  %867 = vmatprep.subr.bf16.mxu0 0
  %868 = vmatpush1.bf16.msra.mxu0 %v702
  %869 = vmatprep.subr.bf16.mxu0 0
  %870 = vmatpush1.bf16.msra.mxu0 %v703
  %871 = vmatprep.subr.bf16.mxu0 0
  %872 = vmatpush1.bf16.msra.mxu0 %v704
  %873 = vmatprep.subr.bf16.mxu0 0
  %874 = vmatpush1.bf16.msra.mxu0 %v705
  %875 = vmatprep.subr.bf16.mxu0 0
  %876 = vmatpush1.bf16.msra.mxu0 0
  %877 = vmatprep.subr.bf16.mxu0 0
  %878 = vmatpush1.bf16.msra.mxu0 0
  %879 = vmatprep.subr.bf16.mxu0 0
  %880 = vmatpush1.bf16.msra.mxu0 0
  %881 = vmatprep.subr.bf16.mxu0 0
  %882 = vmatpush1.bf16.msra.mxu0 0
  %883 = vmatprep.subr.bf16.mxu0 0
  %884 = vmatpush1.bf16.msra.mxu0 0
  %885 = vmatprep.subr.bf16.mxu0 0
  %886 = vmatpush1.bf16.msra.mxu0 0
  %887 = vmatprep.subr.bf16.mxu0 0
  %888 = vmatpush1.bf16.msra.mxu0 0
  %889 = vmatprep.subr.bf16.mxu0 0
  %890 = vmatpush1.bf16.msra.mxu0 0
  %891 = vmatprep.subr.bf16.mxu0 0
  %892 = vmatpush1.bf16.msra.mxu0 0
  %893 = vmatprep.subr.bf16.mxu0 0
  %894 = vmatpush1.bf16.msra.mxu0 0
  %895 = vmatprep.subr.bf16.mxu0 0
  %896 = vmatpush1.bf16.msra.mxu0 0
  %897 = vmatprep.subr.bf16.mxu0 0
  %898 = vmatpush1.bf16.msra.mxu0 0
  %899 = vmatprep.mubr.bf16.mxu0 0
  %900 = vmatmul.mubr.bf16.gmra.mrb[0].mxu0 %v865
  %v901 = vpop.f32.mrb[0].mxu0
  %v902 = vadd.f32 %v684, %v901
  %v903 = vpop.f32.mrb[0].mxu0
  %v904 = vpop.f32.mrb[0].mxu0
  %v905 = vpop.f32.mrb[0].mxu0
  %906 = vdwg.mxu0
  %v907 = vmul.f32 %v902, %v492
  %v908 = vxor.u32 %v907, 2147483648
  %v909 = vmul.f32 %v908, 1.442695
  %v910 = vpow.pop %v909
  %v911 = vadd.f32 %v910, 1.0
  %v912 = vrcp.pop %v911
  %v913 = vmul.f32 1.0, %v912
  %v914 = vmul.f32 %v913, 2.0
  %v915 = vsub.f32 %v914, 1.0
  %v916 = vmul.f32 %v913, %v773
  %918 = vrot.lane.b32.xlu0 %v915, 64
  %v919 = vpop.permute.xlu0 %918
  %v921 = vmul.f32 %v913, %v919
  %923 = vrot.lane.b32.xlu0 %v921, 32
  %v924 = vpop.permute.xlu0 %923
  %v926 = vadd.f32 %v916, %v924
  %v927 = vtanh.pop %v926
  %929 = vrot.lane.b32.xlu0 %v927, 64
  %v930 = vpop.permute.xlu0 %929
  %v932 = vmul.f32 %v913, %v930
  %v933 = vpack.c.bf16 %v853, %v853
  %935 = vrot.lane.b32.xlu0 %v933, 32
  %v936 = vpop.permute.xlu0 %935
  %v938 = vsel %vm237, %v936, 0
  %940 = vmatprep.subr.bf16.mxu0 0
  %941 = vmatpush1.bf16.msra.mxu0 %v600
  %942 = vmatprep.subr.bf16.mxu0 0
  %943 = vmatpush1.bf16.msra.mxu0 %v601
  %944 = vmatprep.subr.bf16.mxu0 0
  %945 = vmatpush1.bf16.msra.mxu0 0
  %946 = vmatprep.subr.bf16.mxu0 0
  %947 = vmatpush1.bf16.msra.mxu0 0
  %948 = vmatprep.subr.bf16.mxu0 0
  %949 = vmatpush1.bf16.msra.mxu0 0
  %950 = vmatprep.subr.bf16.mxu0 0
  %951 = vmatpush1.bf16.msra.mxu0 0
  %952 = vmatprep.subr.bf16.mxu0 0
  %953 = vmatpush1.bf16.msra.mxu0 0
  %954 = vmatprep.subr.bf16.mxu0 0
  %955 = vmatpush1.bf16.msra.mxu0 0
  %956 = vmatprep.subr.bf16.mxu0 0
  %957 = vmatpush1.bf16.msra.mxu0 0
  %958 = vmatprep.subr.bf16.mxu0 0
  %959 = vmatpush1.bf16.msra.mxu0 0
  %960 = vmatprep.subr.bf16.mxu0 0
  %961 = vmatpush1.bf16.msra.mxu0 0
  %962 = vmatprep.subr.bf16.mxu0 0
  %963 = vmatpush1.bf16.msra.mxu0 0
  %964 = vmatprep.subr.bf16.mxu0 0
  %965 = vmatpush1.bf16.msra.mxu0 0
  %966 = vmatprep.subr.bf16.mxu0 0
  %967 = vmatpush1.bf16.msra.mxu0 0
  %968 = vmatprep.subr.bf16.mxu0 0
  %969 = vmatpush1.bf16.msra.mxu0 0
  %970 = vmatprep.subr.bf16.mxu0 0
  %971 = vmatpush1.bf16.msra.mxu0 0
  %972 = vmatprep.mubr.bf16.mxu0 0
  %973 = vmatmul.mubr.bf16.gmra.mrb[0].mxu0 %v938
  %v974 = vpop.f32.mrb[0].mxu0
  %v975 = vadd.f32 0.0, %v974
  %v976 = vpop.f32.mrb[0].mxu0
  %v977 = vpop.f32.mrb[0].mxu0
  %v978 = vpop.f32.mrb[0].mxu0
  %979 = vdwg.mxu0
  %v980 = vadd.f32 %v570, %v975
  %v981 = vmul.f32 %v980, %v492
  %v982 = vxor.u32 %v981, 2147483648
  %v983 = vmul.f32 %v982, 1.442695
  %v984 = vpow.pop %v983
  %v985 = vadd.f32 %v984, 1.0
  %v986 = vrcp.pop %v985
  %v987 = vmul.f32 1.0, %v986
  %v988 = vmul.f32 %v987, 2.0
  %v989 = vsub.f32 %v988, 1.0
  %v990 = vmul.f32 %v987, %v847
  %992 = vrot.lane.b32.xlu0 %v989, 64
  %v993 = vpop.permute.xlu0 %992
  %v995 = vmul.f32 %v987, %v993
  %997 = vrot.lane.b32.xlu0 %v995, 32
  %v998 = vpop.permute.xlu0 %997
  %v1000 = vadd.f32 %v990, %v998
  %v1001 = vtanh.pop %v1000
  %1003 = vrot.lane.b32.xlu0 %v1001, 64
  %v1004 = vpop.permute.xlu0 %1003
  %v1006 = vmul.f32 %v987, %v1004
  %1008 = vrot.lane.b32.xlu0 %v1006, 32
  %v1009 = vpop.permute.xlu0 %1008
  %1012 = vrot.lane.b32.xlu0 %v932, 64
  %v1013 = vpop.permute.xlu0 %1012
  %v1015 = vsel %vm237, %v1009, %v1013
  %v1016 = vpack.c.bf16 %v1015, %v1015
  %v1018 = vsel %vm710, %v1016, 0
  %1020 = vmatprep.subr.bf16.mxu0 0
  %1021 = vmatpush1.bf16.msra.mxu0 %v702
  %1022 = vmatprep.subr.bf16.mxu0 0
  %1023 = vmatpush1.bf16.msra.mxu0 %v703
  %1024 = vmatprep.subr.bf16.mxu0 0
  %1025 = vmatpush1.bf16.msra.mxu0 %v704
  %1026 = vmatprep.subr.bf16.mxu0 0
  %1027 = vmatpush1.bf16.msra.mxu0 %v705
  %1028 = vmatprep.subr.bf16.mxu0 0
  %1029 = vmatpush1.bf16.msra.mxu0 0
  %1030 = vmatprep.subr.bf16.mxu0 0
  %1031 = vmatpush1.bf16.msra.mxu0 0
  %1032 = vmatprep.subr.bf16.mxu0 0
  %1033 = vmatpush1.bf16.msra.mxu0 0
  %1034 = vmatprep.subr.bf16.mxu0 0
  %1035 = vmatpush1.bf16.msra.mxu0 0
  %1036 = vmatprep.subr.bf16.mxu0 0
  %1037 = vmatpush1.bf16.msra.mxu0 0
  %1038 = vmatprep.subr.bf16.mxu0 0
  %1039 = vmatpush1.bf16.msra.mxu0 0
  %1040 = vmatprep.subr.bf16.mxu0 0
  %1041 = vmatpush1.bf16.msra.mxu0 0
  %1042 = vmatprep.subr.bf16.mxu0 0
  %1043 = vmatpush1.bf16.msra.mxu0 0
  %1044 = vmatprep.subr.bf16.mxu0 0
  %1045 = vmatpush1.bf16.msra.mxu0 0
  %1046 = vmatprep.subr.bf16.mxu0 0
  %1047 = vmatpush1.bf16.msra.mxu0 0
  %1048 = vmatprep.subr.bf16.mxu0 0
  %1049 = vmatpush1.bf16.msra.mxu0 0
  %1050 = vmatprep.subr.bf16.mxu0 0
  %1051 = vmatpush1.bf16.msra.mxu0 0
  %1052 = vmatprep.mubr.bf16.mxu0 0
  %1053 = vmatmul.mubr.bf16.gmra.mrb[0].mxu0 %v1018
  %v1054 = vpop.f32.mrb[0].mxu0
  %v1055 = vadd.f32 %v684, %v1054
  %v1056 = vpop.f32.mrb[0].mxu0
  %v1057 = vpop.f32.mrb[0].mxu0
  %v1058 = vpop.f32.mrb[0].mxu0
  %1059 = vdwg.mxu0
  %v1060 = vmul.f32 %v1055, %v492
  %v1061 = vxor.u32 %v1060, 2147483648
  %v1062 = vmul.f32 %v1061, 1.442695
  %v1063 = vpow.pop %v1062
  %v1064 = vadd.f32 %v1063, 1.0
  %v1065 = vrcp.pop %v1064
  %v1066 = vmul.f32 1.0, %v1065
  %v1067 = vmul.f32 %v1066, 2.0
  %v1068 = vsub.f32 %v1067, 1.0
  %v1069 = vmul.f32 %v1066, %v926
  %1071 = vrot.lane.b32.xlu0 %v1068, 64
  %v1072 = vpop.permute.xlu0 %1071
  %v1074 = vmul.f32 %v1066, %v1072
  %1076 = vrot.lane.b32.xlu0 %v1074, 32
  %v1077 = vpop.permute.xlu0 %1076
  %v1079 = vadd.f32 %v1069, %v1077
  %v1080 = vtanh.pop %v1079
  %1082 = vrot.lane.b32.xlu0 %v1080, 64
  %v1083 = vpop.permute.xlu0 %1082
  %v1085 = vmul.f32 %v1066, %v1083
  %v1086 = vpack.c.bf16 %v1006, %v1006
  %1088 = vrot.lane.b32.xlu0 %v1086, 32
  %v1089 = vpop.permute.xlu0 %1088
  %v1091 = vsel %vm237, %v1089, 0
  %1093 = vmatprep.subr.bf16.mxu0 0
  %1094 = vmatpush1.bf16.msra.mxu0 %v600
  %1095 = vmatprep.subr.bf16.mxu0 0
  %1096 = vmatpush1.bf16.msra.mxu0 %v601
  %1097 = vmatprep.subr.bf16.mxu0 0
  %1098 = vmatpush1.bf16.msra.mxu0 0
  %1099 = vmatprep.subr.bf16.mxu0 0
  %1100 = vmatpush1.bf16.msra.mxu0 0
  %1101 = vmatprep.subr.bf16.mxu0 0
  %1102 = vmatpush1.bf16.msra.mxu0 0
  %1103 = vmatprep.subr.bf16.mxu0 0
  %1104 = vmatpush1.bf16.msra.mxu0 0
  %1105 = vmatprep.subr.bf16.mxu0 0
  %1106 = vmatpush1.bf16.msra.mxu0 0
  %1107 = vmatprep.subr.bf16.mxu0 0
  %1108 = vmatpush1.bf16.msra.mxu0 0
  %1109 = vmatprep.subr.bf16.mxu0 0
  %1110 = vmatpush1.bf16.msra.mxu0 0
  %1111 = vmatprep.subr.bf16.mxu0 0
  %1112 = vmatpush1.bf16.msra.mxu0 0
  %1113 = vmatprep.subr.bf16.mxu0 0
  %1114 = vmatpush1.bf16.msra.mxu0 0
  %1115 = vmatprep.subr.bf16.mxu0 0
  %1116 = vmatpush1.bf16.msra.mxu0 0
  %1117 = vmatprep.subr.bf16.mxu0 0
  %1118 = vmatpush1.bf16.msra.mxu0 0
  %1119 = vmatprep.subr.bf16.mxu0 0
  %1120 = vmatpush1.bf16.msra.mxu0 0
  %1121 = vmatprep.subr.bf16.mxu0 0
  %1122 = vmatpush1.bf16.msra.mxu0 0
  %1123 = vmatprep.subr.bf16.mxu0 0
  %1124 = vmatpush1.bf16.msra.mxu0 0
  %1125 = vmatprep.mubr.bf16.mxu0 0
  %1126 = vmatmul.mubr.bf16.gmra.mrb[0].mxu0 %v1091
  %v1127 = vpop.f32.mrb[0].mxu0
  %v1128 = vadd.f32 0.0, %v1127
  %v1129 = vpop.f32.mrb[0].mxu0
  %v1130 = vpop.f32.mrb[0].mxu0
  %v1131 = vpop.f32.mrb[0].mxu0
  %1132 = vdwg.mxu0
  %v1133 = vadd.f32 %v573, %v1128
  %v1134 = vmul.f32 %v1133, %v492
  %v1135 = vxor.u32 %v1134, 2147483648
  %v1136 = vmul.f32 %v1135, 1.442695
  %v1137 = vpow.pop %v1136
  %v1138 = vadd.f32 %v1137, 1.0
  %v1139 = vrcp.pop %v1138
  %v1140 = vmul.f32 1.0, %v1139
  %v1141 = vmul.f32 %v1140, 2.0
  %v1142 = vsub.f32 %v1141, 1.0
  %v1143 = vmul.f32 %v1140, %v1000
  %1145 = vrot.lane.b32.xlu0 %v1142, 64
  %v1146 = vpop.permute.xlu0 %1145
  %v1148 = vmul.f32 %v1140, %v1146
  %1150 = vrot.lane.b32.xlu0 %v1148, 32
  %v1151 = vpop.permute.xlu0 %1150
  %v1153 = vadd.f32 %v1143, %v1151
  %v1154 = vtanh.pop %v1153
  %1156 = vrot.lane.b32.xlu0 %v1154, 64
  %v1157 = vpop.permute.xlu0 %1156
  %v1159 = vmul.f32 %v1140, %v1157
  %1161 = vrot.lane.b32.xlu0 %v1159, 32
  %v1162 = vpop.permute.xlu0 %1161
  %1165 = vrot.lane.b32.xlu0 %v1085, 64
  %v1166 = vpop.permute.xlu0 %1165
  %v1168 = vsel %vm237, %v1162, %v1166
  %v1169 = vpack.c.bf16 %v1168, %v1168
  %v1171 = vsel %vm710, %v1169, 0
  %1173 = vmatprep.subr.bf16.mxu0 0
  %1174 = vmatpush1.bf16.msra.mxu0 %v702
  %1175 = vmatprep.subr.bf16.mxu0 0
  %1176 = vmatpush1.bf16.msra.mxu0 %v703
  %1177 = vmatprep.subr.bf16.mxu0 0
  %1178 = vmatpush1.bf16.msra.mxu0 %v704
  %1179 = vmatprep.subr.bf16.mxu0 0
  %1180 = vmatpush1.bf16.msra.mxu0 %v705
  %1181 = vmatprep.subr.bf16.mxu0 0
  %1182 = vmatpush1.bf16.msra.mxu0 0
  %1183 = vmatprep.subr.bf16.mxu0 0
  %1184 = vmatpush1.bf16.msra.mxu0 0
  %1185 = vmatprep.subr.bf16.mxu0 0
  %1186 = vmatpush1.bf16.msra.mxu0 0
  %1187 = vmatprep.subr.bf16.mxu0 0
  %1188 = vmatpush1.bf16.msra.mxu0 0
  %1189 = vmatprep.subr.bf16.mxu0 0
  %1190 = vmatpush1.bf16.msra.mxu0 0
  %1191 = vmatprep.subr.bf16.mxu0 0
  %1192 = vmatpush1.bf16.msra.mxu0 0
  %1193 = vmatprep.subr.bf16.mxu0 0
  %1194 = vmatpush1.bf16.msra.mxu0 0
  %1195 = vmatprep.subr.bf16.mxu0 0
  %1196 = vmatpush1.bf16.msra.mxu0 0
  %1197 = vmatprep.subr.bf16.mxu0 0
  %1198 = vmatpush1.bf16.msra.mxu0 0
  %1199 = vmatprep.subr.bf16.mxu0 0
  %1200 = vmatpush1.bf16.msra.mxu0 0
  %1201 = vmatprep.subr.bf16.mxu0 0
  %1202 = vmatpush1.bf16.msra.mxu0 0
  %1203 = vmatprep.subr.bf16.mxu0 0
  %1204 = vmatpush1.bf16.msra.mxu0 0
  %1205 = vmatprep.mubr.bf16.mxu0 0
  %1206 = vmatmul.mubr.bf16.gmra.mrb[0].mxu0 %v1171
  %v1207 = vpop.f32.mrb[0].mxu0
  %v1208 = vadd.f32 %v684, %v1207
  %v1209 = vpop.f32.mrb[0].mxu0
  %v1210 = vpop.f32.mrb[0].mxu0
  %v1211 = vpop.f32.mrb[0].mxu0
  %1212 = vdwg.mxu0
  %v1213 = vmul.f32 %v1208, %v492
  %v1214 = vxor.u32 %v1213, 2147483648
  %v1215 = vmul.f32 %v1214, 1.442695
  %v1216 = vpow.pop %v1215
  %v1217 = vadd.f32 %v1216, 1.0
  %v1218 = vrcp.pop %v1217
  %v1219 = vmul.f32 1.0, %v1218
  %v1220 = vmul.f32 %v1219, 2.0
  %v1221 = vsub.f32 %v1220, 1.0
  %v1222 = vmul.f32 %v1219, %v1079
  %1224 = vrot.lane.b32.xlu0 %v1221, 64
  %v1225 = vpop.permute.xlu0 %1224
  %v1227 = vmul.f32 %v1219, %v1225
  %1229 = vrot.lane.b32.xlu0 %v1227, 32
  %v1230 = vpop.permute.xlu0 %1229
  %v1232 = vadd.f32 %v1222, %v1230
  %v1233 = vtanh.pop %v1232
  %1235 = vrot.lane.b32.xlu0 %v1233, 64
  %v1236 = vpop.permute.xlu0 %1235
  %v1238 = vmul.f32 %v1219, %v1236
  %v1239 = vpack.c.bf16 %v1159, %v1159
  %1241 = vrot.lane.b32.xlu0 %v1239, 32
  %v1242 = vpop.permute.xlu0 %1241
  %v1244 = vsel %vm237, %v1242, 0
  %1246 = vmatprep.subr.bf16.mxu0 0
  %1247 = vmatpush1.bf16.msra.mxu0 %v600
  %1248 = vmatprep.subr.bf16.mxu0 0
  %1249 = vmatpush1.bf16.msra.mxu0 %v601
  %1250 = vmatprep.subr.bf16.mxu0 0
  %1251 = vmatpush1.bf16.msra.mxu0 0
  %1252 = vmatprep.subr.bf16.mxu0 0
  %1253 = vmatpush1.bf16.msra.mxu0 0
  %1254 = vmatprep.subr.bf16.mxu0 0
  %1255 = vmatpush1.bf16.msra.mxu0 0
  %1256 = vmatprep.subr.bf16.mxu0 0
  %1257 = vmatpush1.bf16.msra.mxu0 0
  %1258 = vmatprep.subr.bf16.mxu0 0
  %1259 = vmatpush1.bf16.msra.mxu0 0
  %1260 = vmatprep.subr.bf16.mxu0 0
  %1261 = vmatpush1.bf16.msra.mxu0 0
  %1262 = vmatprep.subr.bf16.mxu0 0
  %1263 = vmatpush1.bf16.msra.mxu0 0
  %1264 = vmatprep.subr.bf16.mxu0 0
  %1265 = vmatpush1.bf16.msra.mxu0 0
  %1266 = vmatprep.subr.bf16.mxu0 0
  %1267 = vmatpush1.bf16.msra.mxu0 0
  %1268 = vmatprep.subr.bf16.mxu0 0
  %1269 = vmatpush1.bf16.msra.mxu0 0
  %1270 = vmatprep.subr.bf16.mxu0 0
  %1271 = vmatpush1.bf16.msra.mxu0 0
  %1272 = vmatprep.subr.bf16.mxu0 0
  %1273 = vmatpush1.bf16.msra.mxu0 0
  %1274 = vmatprep.subr.bf16.mxu0 0
  %1275 = vmatpush1.bf16.msra.mxu0 0
  %1276 = vmatprep.subr.bf16.mxu0 0
  %1277 = vmatpush1.bf16.msra.mxu0 0
  %1278 = vmatprep.mubr.bf16.mxu0 0
  %1279 = vmatmul.mubr.bf16.gmra.mrb[0].mxu0 %v1244
  %v1280 = vpop.f32.mrb[0].mxu0
  %v1281 = vadd.f32 0.0, %v1280
  %v1282 = vpop.f32.mrb[0].mxu0
  %v1283 = vpop.f32.mrb[0].mxu0
  %v1284 = vpop.f32.mrb[0].mxu0
  %1285 = vdwg.mxu0
  %v1286 = vadd.f32 %v578, %v1281
  %v1287 = vmul.f32 %v1286, %v492
  %v1288 = vxor.u32 %v1287, 2147483648
  %v1289 = vmul.f32 %v1288, 1.442695
  %v1290 = vpow.pop %v1289
  %v1291 = vadd.f32 %v1290, 1.0
  %v1292 = vrcp.pop %v1291
  %v1293 = vmul.f32 1.0, %v1292
  %v1294 = vmul.f32 %v1293, 2.0
  %v1295 = vsub.f32 %v1294, 1.0
  %v1296 = vmul.f32 %v1293, %v1153
  %1298 = vrot.lane.b32.xlu0 %v1295, 64
  %v1299 = vpop.permute.xlu0 %1298
  %v1301 = vmul.f32 %v1293, %v1299
  %1303 = vrot.lane.b32.xlu0 %v1301, 32
  %v1304 = vpop.permute.xlu0 %1303
  %v1306 = vadd.f32 %v1296, %v1304
  %v1307 = vtanh.pop %v1306
  %1309 = vrot.lane.b32.xlu0 %v1307, 64
  %v1310 = vpop.permute.xlu0 %1309
  %v1312 = vmul.f32 %v1293, %v1310
  %1314 = vrot.lane.b32.xlu0 %v1312, 32
  %v1315 = vpop.permute.xlu0 %1314
  %1318 = vrot.lane.b32.xlu0 %v1238, 64
  %v1319 = vpop.permute.xlu0 %1318
  %v1321 = vsel %vm237, %v1315, %v1319
  %v1322 = vpack.c.bf16 %v1321, %v1321
  %v1324 = vsel %vm710, %v1322, 0
  %1326 = vmatprep.subr.bf16.mxu0 0
  %1327 = vmatpush1.bf16.msra.mxu0 %v702
  %1328 = vmatprep.subr.bf16.mxu0 0
  %1329 = vmatpush1.bf16.msra.mxu0 %v703
  %1330 = vmatprep.subr.bf16.mxu0 0
  %1331 = vmatpush1.bf16.msra.mxu0 %v704
  %1332 = vmatprep.subr.bf16.mxu0 0
  %1333 = vmatpush1.bf16.msra.mxu0 %v705
  %1334 = vmatprep.subr.bf16.mxu0 0
  %1335 = vmatpush1.bf16.msra.mxu0 0
  %1336 = vmatprep.subr.bf16.mxu0 0
  %1337 = vmatpush1.bf16.msra.mxu0 0
  %1338 = vmatprep.subr.bf16.mxu0 0
  %1339 = vmatpush1.bf16.msra.mxu0 0
  %1340 = vmatprep.subr.bf16.mxu0 0
  %1341 = vmatpush1.bf16.msra.mxu0 0
  %1342 = vmatprep.subr.bf16.mxu0 0
  %1343 = vmatpush1.bf16.msra.mxu0 0
  %1344 = vmatprep.subr.bf16.mxu0 0
  %1345 = vmatpush1.bf16.msra.mxu0 0
  %1346 = vmatprep.subr.bf16.mxu0 0
  %1347 = vmatpush1.bf16.msra.mxu0 0
  %1348 = vmatprep.subr.bf16.mxu0 0
  %1349 = vmatpush1.bf16.msra.mxu0 0
  %1350 = vmatprep.subr.bf16.mxu0 0
  %1351 = vmatpush1.bf16.msra.mxu0 0
  %1352 = vmatprep.subr.bf16.mxu0 0
  %1353 = vmatpush1.bf16.msra.mxu0 0
  %1354 = vmatprep.subr.bf16.mxu0 0
  %1355 = vmatpush1.bf16.msra.mxu0 0
  %1356 = vmatprep.subr.bf16.mxu0 0
  %1357 = vmatpush1.bf16.msra.mxu0 0
  %1358 = vmatprep.mubr.bf16.mxu0 0
  %1359 = vmatmul.mubr.bf16.gmra.mrb[0].mxu0 %v1324
  %v1360 = vpop.f32.mrb[0].mxu0
  %v1361 = vadd.f32 %v684, %v1360
  %v1362 = vpop.f32.mrb[0].mxu0
  %v1363 = vpop.f32.mrb[0].mxu0
  %v1364 = vpop.f32.mrb[0].mxu0
  %1365 = vdwg.mxu0
  %v1366 = vmul.f32 %v1361, %v492
  %v1367 = vxor.u32 %v1366, 2147483648
  %v1368 = vmul.f32 %v1367, 1.442695
  %v1369 = vpow.pop %v1368
  %v1370 = vadd.f32 %v1369, 1.0
  %v1371 = vrcp.pop %v1370
  %v1372 = vmul.f32 1.0, %v1371
  %v1373 = vmul.f32 %v1372, 2.0
  %v1374 = vsub.f32 %v1373, 1.0
  %v1375 = vmul.f32 %v1372, %v1232
  %1377 = vrot.lane.b32.xlu0 %v1374, 64
  %v1378 = vpop.permute.xlu0 %1377
  %v1380 = vmul.f32 %v1372, %v1378
  %1382 = vrot.lane.b32.xlu0 %v1380, 32
  %v1383 = vpop.permute.xlu0 %1382
  %v1385 = vadd.f32 %v1375, %v1383
  %v1386 = vtanh.pop %v1385
  %1388 = vrot.lane.b32.xlu0 %v1386, 64
  %v1389 = vpop.permute.xlu0 %1388
  %v1391 = vmul.f32 %v1372, %v1389
  %v1392 = vpack.c.bf16 %v1312, %v1312
  %1394 = vrot.lane.b32.xlu0 %v1392, 32
  %v1395 = vpop.permute.xlu0 %1394
  %v1397 = vsel %vm237, %v1395, 0
  %1399 = vmatprep.subr.bf16.mxu0 0
  %1400 = vmatpush1.bf16.msra.mxu0 %v600
  %1401 = vmatprep.subr.bf16.mxu0 0
  %1402 = vmatpush1.bf16.msra.mxu0 %v601
  %1403 = vmatprep.subr.bf16.mxu0 0
  %1404 = vmatpush1.bf16.msra.mxu0 0
  %1405 = vmatprep.subr.bf16.mxu0 0
  %1406 = vmatpush1.bf16.msra.mxu0 0
  %1407 = vmatprep.subr.bf16.mxu0 0
  %1408 = vmatpush1.bf16.msra.mxu0 0
  %1409 = vmatprep.subr.bf16.mxu0 0
  %1410 = vmatpush1.bf16.msra.mxu0 0
  %1411 = vmatprep.subr.bf16.mxu0 0
  %1412 = vmatpush1.bf16.msra.mxu0 0
  %1413 = vmatprep.subr.bf16.mxu0 0
  %1414 = vmatpush1.bf16.msra.mxu0 0
  %1415 = vmatprep.subr.bf16.mxu0 0
  %1416 = vmatpush1.bf16.msra.mxu0 0
  %1417 = vmatprep.subr.bf16.mxu0 0
  %1418 = vmatpush1.bf16.msra.mxu0 0
  %1419 = vmatprep.subr.bf16.mxu0 0
  %1420 = vmatpush1.bf16.msra.mxu0 0
  %1421 = vmatprep.subr.bf16.mxu0 0
  %1422 = vmatpush1.bf16.msra.mxu0 0
  %1423 = vmatprep.subr.bf16.mxu0 0
  %1424 = vmatpush1.bf16.msra.mxu0 0
  %1425 = vmatprep.subr.bf16.mxu0 0
  %1426 = vmatpush1.bf16.msra.mxu0 0
  %1427 = vmatprep.subr.bf16.mxu0 0
  %1428 = vmatpush1.bf16.msra.mxu0 0
  %1429 = vmatprep.subr.bf16.mxu0 0
  %1430 = vmatpush1.bf16.msra.mxu0 0
  %1431 = vmatprep.mubr.bf16.mxu0 0
  %1432 = vmatmul.mubr.bf16.gmra.mrb[0].mxu0 %v1397
  %v1433 = vpop.f32.mrb[0].mxu0
  %v1434 = vadd.f32 0.0, %v1433
  %v1435 = vpop.f32.mrb[0].mxu0
  %v1436 = vpop.f32.mrb[0].mxu0
  %v1437 = vpop.f32.mrb[0].mxu0
  %1438 = vdwg.mxu0
  %v1439 = vadd.f32 %v581, %v1434
  %v1440 = vmul.f32 %v1439, %v492
  %v1441 = vxor.u32 %v1440, 2147483648
  %v1442 = vmul.f32 %v1441, 1.442695
  %v1443 = vpow.pop %v1442
  %v1444 = vadd.f32 %v1443, 1.0
  %v1445 = vrcp.pop %v1444
  %v1446 = vmul.f32 1.0, %v1445
  %v1447 = vmul.f32 %v1446, 2.0
  %v1448 = vsub.f32 %v1447, 1.0
  %v1449 = vmul.f32 %v1446, %v1306
  %1451 = vrot.lane.b32.xlu0 %v1448, 64
  %v1452 = vpop.permute.xlu0 %1451
  %v1454 = vmul.f32 %v1446, %v1452
  %1456 = vrot.lane.b32.xlu0 %v1454, 32
  %v1457 = vpop.permute.xlu0 %1456
  %v1459 = vadd.f32 %v1449, %v1457
  %v1460 = vtanh.pop %v1459
  %1462 = vrot.lane.b32.xlu0 %v1460, 64
  %v1463 = vpop.permute.xlu0 %1462
  %v1465 = vmul.f32 %v1446, %v1463
  %1467 = vrot.lane.b32.xlu0 %v1465, 32
  %v1468 = vpop.permute.xlu0 %1467
  %1471 = vrot.lane.b32.xlu0 %v1391, 64
  %v1472 = vpop.permute.xlu0 %1471
  %v1474 = vsel %vm237, %v1468, %v1472
  %v1475 = vpack.c.bf16 %v1474, %v1474
  %v1477 = vsel %vm710, %v1475, 0
  %1479 = vmatprep.subr.bf16.mxu0 0
  %1480 = vmatpush1.bf16.msra.mxu0 %v702
  %1481 = vmatprep.subr.bf16.mxu0 0
  %1482 = vmatpush1.bf16.msra.mxu0 %v703
  %1483 = vmatprep.subr.bf16.mxu0 0
  %1484 = vmatpush1.bf16.msra.mxu0 %v704
  %1485 = vmatprep.subr.bf16.mxu0 0
  %1486 = vmatpush1.bf16.msra.mxu0 %v705
  %1487 = vmatprep.subr.bf16.mxu0 0
  %1488 = vmatpush1.bf16.msra.mxu0 0
  %1489 = vmatprep.subr.bf16.mxu0 0
  %1490 = vmatpush1.bf16.msra.mxu0 0
  %1491 = vmatprep.subr.bf16.mxu0 0
  %1492 = vmatpush1.bf16.msra.mxu0 0
  %1493 = vmatprep.subr.bf16.mxu0 0
  %1494 = vmatpush1.bf16.msra.mxu0 0
  %1495 = vmatprep.subr.bf16.mxu0 0
  %1496 = vmatpush1.bf16.msra.mxu0 0
  %1497 = vmatprep.subr.bf16.mxu0 0
  %1498 = vmatpush1.bf16.msra.mxu0 0
  %1499 = vmatprep.subr.bf16.mxu0 0
  %1500 = vmatpush1.bf16.msra.mxu0 0
  %1501 = vmatprep.subr.bf16.mxu0 0
  %1502 = vmatpush1.bf16.msra.mxu0 0
  %1503 = vmatprep.subr.bf16.mxu0 0
  %1504 = vmatpush1.bf16.msra.mxu0 0
  %1505 = vmatprep.subr.bf16.mxu0 0
  %1506 = vmatpush1.bf16.msra.mxu0 0
  %1507 = vmatprep.subr.bf16.mxu0 0
  %1508 = vmatpush1.bf16.msra.mxu0 0
  %1509 = vmatprep.subr.bf16.mxu0 0
  %1510 = vmatpush1.bf16.msra.mxu0 0
  %1511 = vmatprep.mubr.bf16.mxu0 0
  %1512 = vmatmul.mubr.bf16.gmra.mrb[0].mxu0 %v1477
  %v1513 = vpop.f32.mrb[0].mxu0
  %v1514 = vadd.f32 %v684, %v1513
  %v1515 = vpop.f32.mrb[0].mxu0
  %v1516 = vpop.f32.mrb[0].mxu0
  %v1517 = vpop.f32.mrb[0].mxu0
  %1518 = vdwg.mxu0
  %v1519 = vmul.f32 %v1514, %v492
  %v1520 = vxor.u32 %v1519, 2147483648
  %v1521 = vmul.f32 %v1520, 1.442695
  %v1522 = vpow.pop %v1521
  %v1523 = vadd.f32 %v1522, 1.0
  %v1524 = vrcp.pop %v1523
  %v1525 = vmul.f32 1.0, %v1524
  %v1526 = vmul.f32 %v1525, 2.0
  %v1527 = vsub.f32 %v1526, 1.0
  %v1528 = vmul.f32 %v1525, %v1385
  %1530 = vrot.lane.b32.xlu0 %v1527, 64
  %v1531 = vpop.permute.xlu0 %1530
  %v1533 = vmul.f32 %v1525, %v1531
  %1535 = vrot.lane.b32.xlu0 %v1533, 32
  %v1536 = vpop.permute.xlu0 %1535
  %v1538 = vadd.f32 %v1528, %v1536
  %v1539 = vtanh.pop %v1538
  %1541 = vrot.lane.b32.xlu0 %v1539, 64
  %v1542 = vpop.permute.xlu0 %1541
  %v1544 = vmul.f32 %v1525, %v1542
  %v1545 = vpack.c.bf16 %v1465, %v1465
  %1547 = vrot.lane.b32.xlu0 %v1545, 32
  %v1548 = vpop.permute.xlu0 %1547
  %v1550 = vsel %vm237, %v1548, 0
  %1552 = vmatprep.subr.bf16.mxu0 0
  %1553 = vmatpush1.bf16.msra.mxu0 %v600
  %1554 = vmatprep.subr.bf16.mxu0 0
  %1555 = vmatpush1.bf16.msra.mxu0 %v601
  %1556 = vmatprep.subr.bf16.mxu0 0
  %1557 = vmatpush1.bf16.msra.mxu0 0
  %1558 = vmatprep.subr.bf16.mxu0 0
  %1559 = vmatpush1.bf16.msra.mxu0 0
  %1560 = vmatprep.subr.bf16.mxu0 0
  %1561 = vmatpush1.bf16.msra.mxu0 0
  %1562 = vmatprep.subr.bf16.mxu0 0
  %1563 = vmatpush1.bf16.msra.mxu0 0
  %1564 = vmatprep.subr.bf16.mxu0 0
  %1565 = vmatpush1.bf16.msra.mxu0 0
  %1566 = vmatprep.subr.bf16.mxu0 0
  %1567 = vmatpush1.bf16.msra.mxu0 0
  %1568 = vmatprep.subr.bf16.mxu0 0
  %1569 = vmatpush1.bf16.msra.mxu0 0
  %1570 = vmatprep.subr.bf16.mxu0 0
  %1571 = vmatpush1.bf16.msra.mxu0 0
  %1572 = vmatprep.subr.bf16.mxu0 0
  %1573 = vmatpush1.bf16.msra.mxu0 0
  %1574 = vmatprep.subr.bf16.mxu0 0
  %1575 = vmatpush1.bf16.msra.mxu0 0
  %1576 = vmatprep.subr.bf16.mxu0 0
  %1577 = vmatpush1.bf16.msra.mxu0 0
  %1578 = vmatprep.subr.bf16.mxu0 0
  %1579 = vmatpush1.bf16.msra.mxu0 0
  %1580 = vmatprep.subr.bf16.mxu0 0
  %1581 = vmatpush1.bf16.msra.mxu0 0
  %1582 = vmatprep.subr.bf16.mxu0 0
  %1583 = vmatpush1.bf16.msra.mxu0 0
  %1584 = vmatprep.mubr.bf16.mxu0 0
  %1585 = vmatmul.mubr.bf16.gmra.mrb[0].mxu0 %v1550
  %v1586 = vpop.f32.mrb[0].mxu0
  %v1587 = vadd.f32 0.0, %v1586
  %v1588 = vpop.f32.mrb[0].mxu0
  %v1589 = vpop.f32.mrb[0].mxu0
  %v1590 = vpop.f32.mrb[0].mxu0
  %1591 = vdwg.mxu0
  %v1592 = vadd.f32 %v586, %v1587
  %v1593 = vmul.f32 %v1592, %v492
  %v1594 = vxor.u32 %v1593, 2147483648
  %v1595 = vmul.f32 %v1594, 1.442695
  %v1596 = vpow.pop %v1595
  %v1597 = vadd.f32 %v1596, 1.0
  %v1598 = vrcp.pop %v1597
  %v1599 = vmul.f32 1.0, %v1598
  %v1600 = vmul.f32 %v1599, 2.0
  %v1601 = vsub.f32 %v1600, 1.0
  %v1602 = vmul.f32 %v1599, %v1459
  %1604 = vrot.lane.b32.xlu0 %v1601, 64
  %v1605 = vpop.permute.xlu0 %1604
  %v1607 = vmul.f32 %v1599, %v1605
  %1609 = vrot.lane.b32.xlu0 %v1607, 32
  %v1610 = vpop.permute.xlu0 %1609
  %v1612 = vadd.f32 %v1602, %v1610
  %v1613 = vtanh.pop %v1612
  %1615 = vrot.lane.b32.xlu0 %v1613, 64
  %v1616 = vpop.permute.xlu0 %1615
  %v1618 = vmul.f32 %v1599, %v1616
  %1620 = vrot.lane.b32.xlu0 %v1618, 32
  %v1621 = vpop.permute.xlu0 %1620
  %1624 = vrot.lane.b32.xlu0 %v1544, 64
  %v1625 = vpop.permute.xlu0 %1624
  %v1627 = vsel %vm237, %v1621, %v1625
  %v1628 = vpack.c.bf16 %v1627, %v1627
  %v1630 = vsel %vm710, %v1628, 0
  %1632 = vmatprep.subr.bf16.mxu0 0
  %1633 = vmatpush1.bf16.msra.mxu0 %v702
  %1634 = vmatprep.subr.bf16.mxu0 0
  %1635 = vmatpush1.bf16.msra.mxu0 %v703
  %1636 = vmatprep.subr.bf16.mxu0 0
  %1637 = vmatpush1.bf16.msra.mxu0 %v704
  %1638 = vmatprep.subr.bf16.mxu0 0
  %1639 = vmatpush1.bf16.msra.mxu0 %v705
  %1640 = vmatprep.subr.bf16.mxu0 0
  %1641 = vmatpush1.bf16.msra.mxu0 0
  %1642 = vmatprep.subr.bf16.mxu0 0
  %1643 = vmatpush1.bf16.msra.mxu0 0
  %1644 = vmatprep.subr.bf16.mxu0 0
  %1645 = vmatpush1.bf16.msra.mxu0 0
  %1646 = vmatprep.subr.bf16.mxu0 0
  %1647 = vmatpush1.bf16.msra.mxu0 0
  %1648 = vmatprep.subr.bf16.mxu0 0
  %1649 = vmatpush1.bf16.msra.mxu0 0
  %1650 = vmatprep.subr.bf16.mxu0 0
  %1651 = vmatpush1.bf16.msra.mxu0 0
  %1652 = vmatprep.subr.bf16.mxu0 0
  %1653 = vmatpush1.bf16.msra.mxu0 0
  %1654 = vmatprep.subr.bf16.mxu0 0
  %1655 = vmatpush1.bf16.msra.mxu0 0
  %1656 = vmatprep.subr.bf16.mxu0 0
  %1657 = vmatpush1.bf16.msra.mxu0 0
  %1658 = vmatprep.subr.bf16.mxu0 0
  %1659 = vmatpush1.bf16.msra.mxu0 0
  %1660 = vmatprep.subr.bf16.mxu0 0
  %1661 = vmatpush1.bf16.msra.mxu0 0
  %1662 = vmatprep.subr.bf16.mxu0 0
  %1663 = vmatpush1.bf16.msra.mxu0 0
  %1664 = vmatprep.mubr.bf16.mxu0 0
  %1665 = vmatmul.mubr.bf16.gmra.mrb[0].mxu0 %v1630
  %v1666 = vpop.f32.mrb[0].mxu0
  %v1667 = vadd.f32 %v684, %v1666
  %v1668 = vpop.f32.mrb[0].mxu0
  %v1669 = vpop.f32.mrb[0].mxu0
  %v1670 = vpop.f32.mrb[0].mxu0
  %1671 = vdwg.mxu0
  %v1672 = vmul.f32 %v1667, %v492
  %v1673 = vxor.u32 %v1672, 2147483648
  %v1674 = vmul.f32 %v1673, 1.442695
  %v1675 = vpow.pop %v1674
  %v1676 = vadd.f32 %v1675, 1.0
  %v1677 = vrcp.pop %v1676
  %v1678 = vmul.f32 1.0, %v1677
  %v1679 = vmul.f32 %v1678, 2.0
  %v1680 = vsub.f32 %v1679, 1.0
  %v1681 = vmul.f32 %v1678, %v1538
  %1683 = vrot.lane.b32.xlu0 %v1680, 64
  %v1684 = vpop.permute.xlu0 %1683
  %v1686 = vmul.f32 %v1678, %v1684
  %1688 = vrot.lane.b32.xlu0 %v1686, 32
  %v1689 = vpop.permute.xlu0 %1688
  %v1691 = vadd.f32 %v1681, %v1689
  %v1692 = vtanh.pop %v1691
  %1694 = vrot.lane.b32.xlu0 %v1692, 64
  %v1695 = vpop.permute.xlu0 %1694
  %v1697 = vmul.f32 %v1678, %v1695
  %v1698 = vpack.c.bf16 %v1618, %v1618
  %1700 = vrot.lane.b32.xlu0 %v1698, 32
  %v1701 = vpop.permute.xlu0 %1700
  %v1703 = vsel %vm237, %v1701, 0
  %1705 = vmatprep.subr.bf16.mxu0 0
  %1706 = vmatpush1.bf16.msra.mxu0 %v600
  %1707 = vmatprep.subr.bf16.mxu0 0
  %1708 = vmatpush1.bf16.msra.mxu0 %v601
  %1709 = vmatprep.subr.bf16.mxu0 0
  %1710 = vmatpush1.bf16.msra.mxu0 0
  %1711 = vmatprep.subr.bf16.mxu0 0
  %1712 = vmatpush1.bf16.msra.mxu0 0
  %1713 = vmatprep.subr.bf16.mxu0 0
  %1714 = vmatpush1.bf16.msra.mxu0 0
  %1715 = vmatprep.subr.bf16.mxu0 0
  %1716 = vmatpush1.bf16.msra.mxu0 0
  %1717 = vmatprep.subr.bf16.mxu0 0
  %1718 = vmatpush1.bf16.msra.mxu0 0
  %1719 = vmatprep.subr.bf16.mxu0 0
  %1720 = vmatpush1.bf16.msra.mxu0 0
  %1721 = vmatprep.subr.bf16.mxu0 0
  %1722 = vmatpush1.bf16.msra.mxu0 0
  %1723 = vmatprep.subr.bf16.mxu0 0
  %1724 = vmatpush1.bf16.msra.mxu0 0
  %1725 = vmatprep.subr.bf16.mxu0 0
  %1726 = vmatpush1.bf16.msra.mxu0 0
  %1727 = vmatprep.subr.bf16.mxu0 0
  %1728 = vmatpush1.bf16.msra.mxu0 0
  %1729 = vmatprep.subr.bf16.mxu0 0
  %1730 = vmatpush1.bf16.msra.mxu0 0
  %1731 = vmatprep.subr.bf16.mxu0 0
  %1732 = vmatpush1.bf16.msra.mxu0 0
  %1733 = vmatprep.subr.bf16.mxu0 0
  %1734 = vmatpush1.bf16.msra.mxu0 0
  %1735 = vmatprep.subr.bf16.mxu0 0
  %1736 = vmatpush1.bf16.msra.mxu0 0
  %1737 = vmatprep.mubr.bf16.mxu0 0
  %1738 = vmatmul.mubr.bf16.gmra.mrb[0].mxu0 %v1703
  %v1739 = vpop.f32.mrb[0].mxu0
  %v1740 = vadd.f32 0.0, %v1739
  %v1741 = vpop.f32.mrb[0].mxu0
  %v1742 = vpop.f32.mrb[0].mxu0
  %v1743 = vpop.f32.mrb[0].mxu0
  %1744 = vdwg.mxu0
  %v1745 = vadd.f32 %v589, %v1740
  %v1746 = vmul.f32 %v1745, %v492
  %v1747 = vxor.u32 %v1746, 2147483648
  %v1748 = vmul.f32 %v1747, 1.442695
  %v1749 = vpow.pop %v1748
  %v1750 = vadd.f32 %v1749, 1.0
  %v1751 = vrcp.pop %v1750
  %v1752 = vmul.f32 1.0, %v1751
  %v1753 = vmul.f32 %v1752, 2.0
  %v1754 = vsub.f32 %v1753, 1.0
  %v1755 = vmul.f32 %v1752, %v1612
  %1757 = vrot.lane.b32.xlu0 %v1754, 64
  %v1758 = vpop.permute.xlu0 %1757
  %v1760 = vmul.f32 %v1752, %v1758
  %1762 = vrot.lane.b32.xlu0 %v1760, 32
  %v1763 = vpop.permute.xlu0 %1762
  %v1765 = vadd.f32 %v1755, %v1763
  %v1766 = vtanh.pop %v1765
  %1768 = vrot.lane.b32.xlu0 %v1766, 64
  %v1769 = vpop.permute.xlu0 %1768
  %v1771 = vmul.f32 %v1752, %v1769
  %1773 = vrot.lane.b32.xlu0 %v1771, 32
  %v1774 = vpop.permute.xlu0 %1773
  %1777 = vrot.lane.b32.xlu0 %v1697, 64
  %v1778 = vpop.permute.xlu0 %1777
  %v1780 = vsel %vm237, %v1774, %v1778
  %v1781 = vpack.c.bf16 %v1780, %v1780
  %v1783 = vsel %vm710, %v1781, 0
  %1785 = vmatprep.subr.bf16.mxu0 0
  %1786 = vmatpush1.bf16.msra.mxu0 %v702
  %1787 = vmatprep.subr.bf16.mxu0 0
  %1788 = vmatpush1.bf16.msra.mxu0 %v703
  %1789 = vmatprep.subr.bf16.mxu0 0
  %1790 = vmatpush1.bf16.msra.mxu0 %v704
  %1791 = vmatprep.subr.bf16.mxu0 0
  %1792 = vmatpush1.bf16.msra.mxu0 %v705
  %1793 = vmatprep.subr.bf16.mxu0 0
  %1794 = vmatpush1.bf16.msra.mxu0 0
  %1795 = vmatprep.subr.bf16.mxu0 0
  %1796 = vmatpush1.bf16.msra.mxu0 0
  %1797 = vmatprep.subr.bf16.mxu0 0
  %1798 = vmatpush1.bf16.msra.mxu0 0
  %1799 = vmatprep.subr.bf16.mxu0 0
  %1800 = vmatpush1.bf16.msra.mxu0 0
  %1801 = vmatprep.subr.bf16.mxu0 0
  %1802 = vmatpush1.bf16.msra.mxu0 0
  %1803 = vmatprep.subr.bf16.mxu0 0
  %1804 = vmatpush1.bf16.msra.mxu0 0
  %1805 = vmatprep.subr.bf16.mxu0 0
  %1806 = vmatpush1.bf16.msra.mxu0 0
  %1807 = vmatprep.subr.bf16.mxu0 0
  %1808 = vmatpush1.bf16.msra.mxu0 0
  %1809 = vmatprep.subr.bf16.mxu0 0
  %1810 = vmatpush1.bf16.msra.mxu0 0
  %1811 = vmatprep.subr.bf16.mxu0 0
  %1812 = vmatpush1.bf16.msra.mxu0 0
  %1813 = vmatprep.subr.bf16.mxu0 0
  %1814 = vmatpush1.bf16.msra.mxu0 0
  %1815 = vmatprep.subr.bf16.mxu0 0
  %1816 = vmatpush1.bf16.msra.mxu0 0
  %1817 = vmatprep.mubr.bf16.mxu0 0
  %1818 = vmatmul.mubr.bf16.gmra.mrb[0].mxu0 %v1783
  %v1819 = vpop.f32.mrb[0].mxu0
  %v1820 = vadd.f32 %v684, %v1819
  %v1821 = vpop.f32.mrb[0].mxu0
  %v1822 = vpop.f32.mrb[0].mxu0
  %v1823 = vpop.f32.mrb[0].mxu0
  %1824 = vdwg.mxu0
  %v1825 = vmul.f32 %v1820, %v492
  %v1826 = vxor.u32 %v1825, 2147483648
  %v1827 = vmul.f32 %v1826, 1.442695
  %v1828 = vpow.pop %v1827
  %v1829 = vadd.f32 %v1828, 1.0
  %v1830 = vrcp.pop %v1829
  %v1831 = vmul.f32 1.0, %v1830
  %v1832 = vmul.f32 %v1831, 2.0
  %v1833 = vsub.f32 %v1832, 1.0
  %v1834 = vmul.f32 %v1831, %v1691
  %1836 = vrot.lane.b32.xlu0 %v1833, 64
  %v1837 = vpop.permute.xlu0 %1836
  %v1839 = vmul.f32 %v1831, %v1837
  %1841 = vrot.lane.b32.xlu0 %v1839, 32
  %v1842 = vpop.permute.xlu0 %1841
  %v1844 = vadd.f32 %v1834, %v1842
  %v1845 = vtanh.pop %v1844
  %1847 = vrot.lane.b32.xlu0 %v1845, 64
  %v1848 = vpop.permute.xlu0 %1847
  %v1850 = vmul.f32 %v1831, %v1848
  %v1851 = vld [vmem:[%s1] sm:$0xff]
  %1853 = vrot.lane.b32.xlu0 %v1851, 96
  %v1854 = vpop.permute.xlu0 %1853
  %v1856 = vadd.f32 %v1850, %v1854
  %1858 = vrot.lane.b32.xlu0 %v1856, 32
  %v1859 = vpop.permute.xlu0 %1858
  %1861 = vrot.lane.b32.xlu0 %v1771, 64
  %v1862 = vpop.permute.xlu0 %1861
  %v1864 = vsel %vm237, %v1859, %v1862
  %v1865 = vpack.c.bf16 %v1864, %v1864
  %v1867 = vsel %vm710, %v1865, 0
  %1869 = vmatprep.subr.bf16.mxu0 0
  %1870 = vmatpush1.bf16.msra.mxu0 %v511
  %1871 = vmatprep.subr.bf16.mxu0 0
  %1872 = vmatpush1.bf16.msra.mxu0 %v512
  %1873 = vmatprep.subr.bf16.mxu0 0
  %1874 = vmatpush1.bf16.msra.mxu0 %v600
  %1875 = vmatprep.subr.bf16.mxu0 0
  %1876 = vmatpush1.bf16.msra.mxu0 %v601
  %1877 = vmatprep.subr.bf16.mxu0 0
  %1878 = vmatpush1.bf16.msra.mxu0 0
  %1879 = vmatprep.subr.bf16.mxu0 0
  %1880 = vmatpush1.bf16.msra.mxu0 0
  %1881 = vmatprep.subr.bf16.mxu0 0
  %1882 = vmatpush1.bf16.msra.mxu0 0
  %1883 = vmatprep.subr.bf16.mxu0 0
  %1884 = vmatpush1.bf16.msra.mxu0 0
  %1885 = vmatprep.subr.bf16.mxu0 0
  %1886 = vmatpush1.bf16.msra.mxu0 0
  %1887 = vmatprep.subr.bf16.mxu0 0
  %1888 = vmatpush1.bf16.msra.mxu0 0
  %1889 = vmatprep.subr.bf16.mxu0 0
  %1890 = vmatpush1.bf16.msra.mxu0 0
  %1891 = vmatprep.subr.bf16.mxu0 0
  %1892 = vmatpush1.bf16.msra.mxu0 0
  %1893 = vmatprep.subr.bf16.mxu0 0
  %1894 = vmatpush1.bf16.msra.mxu0 0
  %1895 = vmatprep.subr.bf16.mxu0 0
  %1896 = vmatpush1.bf16.msra.mxu0 0
  %1897 = vmatprep.subr.bf16.mxu0 0
  %1898 = vmatpush1.bf16.msra.mxu0 0
  %1899 = vmatprep.subr.bf16.mxu0 0
  %1900 = vmatpush1.bf16.msra.mxu0 0
  %1901 = vmatprep.mubr.bf16.mxu0 0
  %1902 = vmatmul.mubr.bf16.gmra.mrb[0].mxu0 %v1867
  %v1903 = vpop.f32.mrb[0].mxu0
  %v1904 = vadd.f32 %v501, %v1903
  %v1905 = vpop.f32.mrb[0].mxu0
  %v1906 = vpop.f32.mrb[0].mxu0
  %v1907 = vpop.f32.mrb[0].mxu0
  %1908 = vdwg.mxu0
  %v1909 = vmul.f32 %v1904, %v492
  %v1910 = vxor.u32 %v1909, 2147483648
  %v1911 = vmul.f32 %v1910, 1.442695
  %v1912 = vpow.pop %v1911
  %v1913 = vadd.f32 %v1912, 1.0
  %v1914 = vrcp.pop %v1913
  %v1915 = vmul.f32 1.0, %v1914
  %v1916 = vmul.f32 %v1915, 2.0
  %v1917 = vsub.f32 %v1916, 1.0
  %v1918 = vmul.f32 %v1915, %v1765
  %1920 = vrot.lane.b32.xlu0 %v1917, 64
  %v1921 = vpop.permute.xlu0 %1920
  %v1923 = vmul.f32 %v1915, %v1921
  %1925 = vrot.lane.b32.xlu0 %v1923, 32
  %v1926 = vpop.permute.xlu0 %1925
  %v1928 = vadd.f32 %v1918, %v1926
  %v1929 = vtanh.pop %v1928
  %1931 = vrot.lane.b32.xlu0 %v1929, 64
  %v1932 = vpop.permute.xlu0 %1931
  %v1934 = vmul.f32 %v1915, %v1932
  %1936 = vrot.lane.b32.xlu0 %v1934, 32
  %v1937 = vpop.permute.xlu0 %1936
  %1940 = vrot.lane.b32.xlu0 %v1850, 64
  %v1941 = vpop.permute.xlu0 %1940
  %v1943 = vsel %vm237, %v1937, %v1941
  %v1944 = vpack.c.bf16 %v1943, %v1943
  %v1946 = vsel %vm710, %v1944, 0
  %1948 = vmatprep.subr.bf16.mxu0 0
  %1949 = vmatpush1.bf16.msra.mxu0 %v702
  %1950 = vmatprep.subr.bf16.mxu0 0
  %1951 = vmatpush1.bf16.msra.mxu0 %v703
  %1952 = vmatprep.subr.bf16.mxu0 0
  %1953 = vmatpush1.bf16.msra.mxu0 %v704
  %1954 = vmatprep.subr.bf16.mxu0 0
  %1955 = vmatpush1.bf16.msra.mxu0 %v705
  %1956 = vmatprep.subr.bf16.mxu0 0
  %1957 = vmatpush1.bf16.msra.mxu0 0
  %1958 = vmatprep.subr.bf16.mxu0 0
  %1959 = vmatpush1.bf16.msra.mxu0 0
  %1960 = vmatprep.subr.bf16.mxu0 0
  %1961 = vmatpush1.bf16.msra.mxu0 0
  %1962 = vmatprep.subr.bf16.mxu0 0
  %1963 = vmatpush1.bf16.msra.mxu0 0
  %1964 = vmatprep.subr.bf16.mxu0 0
  %1965 = vmatpush1.bf16.msra.mxu0 0
  %1966 = vmatprep.subr.bf16.mxu0 0
  %1967 = vmatpush1.bf16.msra.mxu0 0
  %1968 = vmatprep.subr.bf16.mxu0 0
  %1969 = vmatpush1.bf16.msra.mxu0 0
  %1970 = vmatprep.subr.bf16.mxu0 0
  %1971 = vmatpush1.bf16.msra.mxu0 0
  %1972 = vmatprep.subr.bf16.mxu0 0
  %1973 = vmatpush1.bf16.msra.mxu0 0
  %1974 = vmatprep.subr.bf16.mxu0 0
  %1975 = vmatpush1.bf16.msra.mxu0 0
  %1976 = vmatprep.subr.bf16.mxu0 0
  %1977 = vmatpush1.bf16.msra.mxu0 0
  %1978 = vmatprep.subr.bf16.mxu0 0
  %1979 = vmatpush1.bf16.msra.mxu0 0
  %1980 = vmatprep.mubr.bf16.mxu0 0
  %1981 = vmatmul.mubr.bf16.gmra.mrb[0].mxu0 %v1946
  %v1982 = vpop.f32.mrb[0].mxu0
  %v1983 = vadd.f32 %v684, %v1982
  %v1984 = vpop.f32.mrb[0].mxu0
  %v1985 = vpop.f32.mrb[0].mxu0
  %v1986 = vpop.f32.mrb[0].mxu0
  %1987 = vdwg.mxu0
  %v1988 = vmul.f32 %v1983, %v492
  %v1989 = vxor.u32 %v1988, 2147483648
  %v1990 = vmul.f32 %v1989, 1.442695
  %v1991 = vpow.pop %v1990
  %v1992 = vadd.f32 %v1991, 1.0
  %v1993 = vrcp.pop %v1992
  %v1994 = vmul.f32 1.0, %v1993
  %v1995 = vmul.f32 %v1994, 2.0
  %v1996 = vsub.f32 %v1995, 1.0
  %v1997 = vmul.f32 %v1994, %v1844
  %1999 = vrot.lane.b32.xlu0 %v1996, 64
  %v2000 = vpop.permute.xlu0 %1999
  %v2002 = vmul.f32 %v1994, %v2000
  %2004 = vrot.lane.b32.xlu0 %v2002, 32
  %v2005 = vpop.permute.xlu0 %2004
  %v2007 = vadd.f32 %v1997, %v2005
  %v2008 = vtanh.pop %v2007
  %2010 = vrot.lane.b32.xlu0 %v2008, 64
  %v2011 = vpop.permute.xlu0 %2010
  %v2013 = vmul.f32 %v1994, %v2011
  %s2014 = scalar_lea.vmem %s1, 8
  %v2015 = vld [vmem:[%s2014] sm:$0xff]
  %2017 = vrot.lane.b32.xlu0 %v2015, 96
  %v2018 = vpop.permute.xlu0 %2017
  %v2020 = vadd.f32 %v2013, %v2018
  %2022 = vrot.lane.b32.xlu0 %v2020, 32
  %v2023 = vpop.permute.xlu0 %2022
  %2025 = vrot.lane.b32.xlu0 %v1934, 64
  %v2026 = vpop.permute.xlu0 %2025
  %v2028 = vsel %vm237, %v2023, %v2026
  %v2029 = vpack.c.bf16 %v2028, %v2028
  %v2031 = vsel %vm710, %v2029, 0
  %2033 = vmatprep.subr.bf16.mxu0 0
  %2034 = vmatpush1.bf16.msra.mxu0 %v511
  %2035 = vmatprep.subr.bf16.mxu0 0
  %2036 = vmatpush1.bf16.msra.mxu0 %v512
  %2037 = vmatprep.subr.bf16.mxu0 0
  %2038 = vmatpush1.bf16.msra.mxu0 %v600
  %2039 = vmatprep.subr.bf16.mxu0 0
  %2040 = vmatpush1.bf16.msra.mxu0 %v601
  %2041 = vmatprep.subr.bf16.mxu0 0
  %2042 = vmatpush1.bf16.msra.mxu0 0
  %2043 = vmatprep.subr.bf16.mxu0 0
  %2044 = vmatpush1.bf16.msra.mxu0 0
  %2045 = vmatprep.subr.bf16.mxu0 0
  %2046 = vmatpush1.bf16.msra.mxu0 0
  %2047 = vmatprep.subr.bf16.mxu0 0
  %2048 = vmatpush1.bf16.msra.mxu0 0
  %2049 = vmatprep.subr.bf16.mxu0 0
  %2050 = vmatpush1.bf16.msra.mxu0 0
  %2051 = vmatprep.subr.bf16.mxu0 0
  %2052 = vmatpush1.bf16.msra.mxu0 0
  %2053 = vmatprep.subr.bf16.mxu0 0
  %2054 = vmatpush1.bf16.msra.mxu0 0
  %2055 = vmatprep.subr.bf16.mxu0 0
  %2056 = vmatpush1.bf16.msra.mxu0 0
  %2057 = vmatprep.subr.bf16.mxu0 0
  %2058 = vmatpush1.bf16.msra.mxu0 0
  %2059 = vmatprep.subr.bf16.mxu0 0
  %2060 = vmatpush1.bf16.msra.mxu0 0
  %2061 = vmatprep.subr.bf16.mxu0 0
  %2062 = vmatpush1.bf16.msra.mxu0 0
  %2063 = vmatprep.subr.bf16.mxu0 0
  %2064 = vmatpush1.bf16.msra.mxu0 0
  %2065 = vmatprep.mubr.bf16.mxu0 0
  %2066 = vmatmul.mubr.bf16.gmra.mrb[0].mxu0 %v2031
  %v2067 = vpop.f32.mrb[0].mxu0
  %v2068 = vadd.f32 %v501, %v2067
  %v2069 = vpop.f32.mrb[0].mxu0
  %v2070 = vpop.f32.mrb[0].mxu0
  %v2071 = vpop.f32.mrb[0].mxu0
  %2072 = vdwg.mxu0
  %v2073 = vmul.f32 %v2068, %v492
  %v2074 = vxor.u32 %v2073, 2147483648
  %v2075 = vmul.f32 %v2074, 1.442695
  %v2076 = vpow.pop %v2075
  %v2077 = vadd.f32 %v2076, 1.0
  %v2078 = vrcp.pop %v2077
  %v2079 = vmul.f32 1.0, %v2078
  %v2080 = vmul.f32 %v2079, 2.0
  %v2081 = vsub.f32 %v2080, 1.0
  %v2082 = vmul.f32 %v2079, %v1928
  %2084 = vrot.lane.b32.xlu0 %v2081, 64
  %v2085 = vpop.permute.xlu0 %2084
  %v2087 = vmul.f32 %v2079, %v2085
  %2089 = vrot.lane.b32.xlu0 %v2087, 32
  %v2090 = vpop.permute.xlu0 %2089
  %v2092 = vadd.f32 %v2082, %v2090
  %v2093 = vtanh.pop %v2092
  %2095 = vrot.lane.b32.xlu0 %v2093, 64
  %v2096 = vpop.permute.xlu0 %2095
  %v2098 = vmul.f32 %v2079, %v2096
  %2100 = vrot.lane.b32.xlu0 %v2098, 32
  %v2101 = vpop.permute.xlu0 %2100
  %2104 = vrot.lane.b32.xlu0 %v2013, 64
  %v2105 = vpop.permute.xlu0 %2104
  %v2107 = vsel %vm237, %v2101, %v2105
  %v2108 = vpack.c.bf16 %v2107, %v2107
  %v2110 = vsel %vm710, %v2108, 0
  %2112 = vmatprep.subr.bf16.mxu0 0
  %2113 = vmatpush1.bf16.msra.mxu0 %v702
  %2114 = vmatprep.subr.bf16.mxu0 0
  %2115 = vmatpush1.bf16.msra.mxu0 %v703
  %2116 = vmatprep.subr.bf16.mxu0 0
  %2117 = vmatpush1.bf16.msra.mxu0 %v704
  %2118 = vmatprep.subr.bf16.mxu0 0
  %2119 = vmatpush1.bf16.msra.mxu0 %v705
  %2120 = vmatprep.subr.bf16.mxu0 0
  %2121 = vmatpush1.bf16.msra.mxu0 0
  %2122 = vmatprep.subr.bf16.mxu0 0
  %2123 = vmatpush1.bf16.msra.mxu0 0
  %2124 = vmatprep.subr.bf16.mxu0 0
  %2125 = vmatpush1.bf16.msra.mxu0 0
  %2126 = vmatprep.subr.bf16.mxu0 0
  %2127 = vmatpush1.bf16.msra.mxu0 0
  %2128 = vmatprep.subr.bf16.mxu0 0
  %2129 = vmatpush1.bf16.msra.mxu0 0
  %2130 = vmatprep.subr.bf16.mxu0 0
  %2131 = vmatpush1.bf16.msra.mxu0 0
  %2132 = vmatprep.subr.bf16.mxu0 0
  %2133 = vmatpush1.bf16.msra.mxu0 0
  %2134 = vmatprep.subr.bf16.mxu0 0
  %2135 = vmatpush1.bf16.msra.mxu0 0
  %2136 = vmatprep.subr.bf16.mxu0 0
  %2137 = vmatpush1.bf16.msra.mxu0 0
  %2138 = vmatprep.subr.bf16.mxu0 0
  %2139 = vmatpush1.bf16.msra.mxu0 0
  %2140 = vmatprep.subr.bf16.mxu0 0
  %2141 = vmatpush1.bf16.msra.mxu0 0
  %2142 = vmatprep.subr.bf16.mxu0 0
  %2143 = vmatpush1.bf16.msra.mxu0 0
  %2144 = vmatprep.mubr.bf16.mxu0 0
  %2145 = vmatmul.mubr.bf16.gmra.mrb[0].mxu0 %v2110
  %v2146 = vpop.f32.mrb[0].mxu0
  %v2147 = vadd.f32 %v684, %v2146
  %v2148 = vpop.f32.mrb[0].mxu0
  %v2149 = vpop.f32.mrb[0].mxu0
  %v2150 = vpop.f32.mrb[0].mxu0
  %2151 = vdwg.mxu0
  %v2152 = vmul.f32 %v2147, %v492
  %v2153 = vxor.u32 %v2152, 2147483648
  %v2154 = vmul.f32 %v2153, 1.442695
  %v2155 = vpow.pop %v2154
  %v2156 = vadd.f32 %v2155, 1.0
  %v2157 = vrcp.pop %v2156
  %v2158 = vmul.f32 1.0, %v2157
  %v2159 = vmul.f32 %v2158, 2.0
  %v2160 = vsub.f32 %v2159, 1.0
  %v2161 = vmul.f32 %v2158, %v2007
  %2163 = vrot.lane.b32.xlu0 %v2160, 64
  %v2164 = vpop.permute.xlu0 %2163
  %v2166 = vmul.f32 %v2158, %v2164
  %2168 = vrot.lane.b32.xlu0 %v2166, 32
  %v2169 = vpop.permute.xlu0 %2168
  %v2171 = vadd.f32 %v2161, %v2169
  %v2172 = vtanh.pop %v2171
  %2174 = vrot.lane.b32.xlu0 %v2172, 64
  %v2175 = vpop.permute.xlu0 %2174
  %v2177 = vmul.f32 %v2158, %v2175
  %s2178 = scalar_lea.vmem %s1, 16
  %v2179 = vld [vmem:[%s2178] sm:$0xff]
  %2181 = vrot.lane.b32.xlu0 %v2179, 96
  %v2182 = vpop.permute.xlu0 %2181
  %v2184 = vadd.f32 %v2177, %v2182
  %2186 = vrot.lane.b32.xlu0 %v2184, 32
  %v2187 = vpop.permute.xlu0 %2186
  %2189 = vrot.lane.b32.xlu0 %v2098, 64
  %v2190 = vpop.permute.xlu0 %2189
  %v2192 = vsel %vm237, %v2187, %v2190
  %v2193 = vpack.c.bf16 %v2192, %v2192
  %v2195 = vsel %vm710, %v2193, 0
  %2197 = vmatprep.subr.bf16.mxu0 0
  %2198 = vmatpush1.bf16.msra.mxu0 %v511
  %2199 = vmatprep.subr.bf16.mxu0 0
  %2200 = vmatpush1.bf16.msra.mxu0 %v512
  %2201 = vmatprep.subr.bf16.mxu0 0
  %2202 = vmatpush1.bf16.msra.mxu0 %v600
  %2203 = vmatprep.subr.bf16.mxu0 0
  %2204 = vmatpush1.bf16.msra.mxu0 %v601
  %2205 = vmatprep.subr.bf16.mxu0 0
  %2206 = vmatpush1.bf16.msra.mxu0 0
  %2207 = vmatprep.subr.bf16.mxu0 0
  %2208 = vmatpush1.bf16.msra.mxu0 0
  %2209 = vmatprep.subr.bf16.mxu0 0
  %2210 = vmatpush1.bf16.msra.mxu0 0
  %2211 = vmatprep.subr.bf16.mxu0 0
  %2212 = vmatpush1.bf16.msra.mxu0 0
  %2213 = vmatprep.subr.bf16.mxu0 0
  %2214 = vmatpush1.bf16.msra.mxu0 0
  %2215 = vmatprep.subr.bf16.mxu0 0
  %2216 = vmatpush1.bf16.msra.mxu0 0
  %2217 = vmatprep.subr.bf16.mxu0 0
  %2218 = vmatpush1.bf16.msra.mxu0 0
  %2219 = vmatprep.subr.bf16.mxu0 0
  %2220 = vmatpush1.bf16.msra.mxu0 0
  %2221 = vmatprep.subr.bf16.mxu0 0
  %2222 = vmatpush1.bf16.msra.mxu0 0
  %2223 = vmatprep.subr.bf16.mxu0 0
  %2224 = vmatpush1.bf16.msra.mxu0 0
  %2225 = vmatprep.subr.bf16.mxu0 0
  %2226 = vmatpush1.bf16.msra.mxu0 0
  %2227 = vmatprep.subr.bf16.mxu0 0
  %2228 = vmatpush1.bf16.msra.mxu0 0
  %2229 = vmatprep.mubr.bf16.mxu0 0
  %2230 = vmatmul.mubr.bf16.gmra.mrb[0].mxu0 %v2195
  %v2231 = vpop.f32.mrb[0].mxu0
  %v2232 = vadd.f32 %v501, %v2231
  %v2233 = vpop.f32.mrb[0].mxu0
  %v2234 = vpop.f32.mrb[0].mxu0
  %v2235 = vpop.f32.mrb[0].mxu0
  %2236 = vdwg.mxu0
  %v2237 = vmul.f32 %v2232, %v492
  %v2238 = vxor.u32 %v2237, 2147483648
  %v2239 = vmul.f32 %v2238, 1.442695
  %v2240 = vpow.pop %v2239
  %v2241 = vadd.f32 %v2240, 1.0
  %v2242 = vrcp.pop %v2241
  %v2243 = vmul.f32 1.0, %v2242
  %v2244 = vmul.f32 %v2243, 2.0
  %v2245 = vsub.f32 %v2244, 1.0
  %v2246 = vmul.f32 %v2243, %v2092
  %2248 = vrot.lane.b32.xlu0 %v2245, 64
  %v2249 = vpop.permute.xlu0 %2248
  %v2251 = vmul.f32 %v2243, %v2249
  %2253 = vrot.lane.b32.xlu0 %v2251, 32
  %v2254 = vpop.permute.xlu0 %2253
  %v2256 = vadd.f32 %v2246, %v2254
  %v2257 = vtanh.pop %v2256
  %2259 = vrot.lane.b32.xlu0 %v2257, 64
  %v2260 = vpop.permute.xlu0 %2259
  %v2262 = vmul.f32 %v2243, %v2260
  %2264 = vrot.lane.b32.xlu0 %v2262, 32
  %v2265 = vpop.permute.xlu0 %2264
  %2268 = vrot.lane.b32.xlu0 %v2177, 64
  %v2269 = vpop.permute.xlu0 %2268
  %v2271 = vsel %vm237, %v2265, %v2269
  %v2272 = vpack.c.bf16 %v2271, %v2271
  %v2274 = vsel %vm710, %v2272, 0
  %2276 = vmatprep.subr.bf16.mxu0 0
  %2277 = vmatpush1.bf16.msra.mxu0 %v702
  %2278 = vmatprep.subr.bf16.mxu0 0
  %2279 = vmatpush1.bf16.msra.mxu0 %v703
  %2280 = vmatprep.subr.bf16.mxu0 0
  %2281 = vmatpush1.bf16.msra.mxu0 %v704
  %2282 = vmatprep.subr.bf16.mxu0 0
  %2283 = vmatpush1.bf16.msra.mxu0 %v705
  %2284 = vmatprep.subr.bf16.mxu0 0
  %2285 = vmatpush1.bf16.msra.mxu0 0
  %2286 = vmatprep.subr.bf16.mxu0 0
  %2287 = vmatpush1.bf16.msra.mxu0 0
  %2288 = vmatprep.subr.bf16.mxu0 0
  %2289 = vmatpush1.bf16.msra.mxu0 0
  %2290 = vmatprep.subr.bf16.mxu0 0
  %2291 = vmatpush1.bf16.msra.mxu0 0
  %2292 = vmatprep.subr.bf16.mxu0 0
  %2293 = vmatpush1.bf16.msra.mxu0 0
  %2294 = vmatprep.subr.bf16.mxu0 0
  %2295 = vmatpush1.bf16.msra.mxu0 0
  %2296 = vmatprep.subr.bf16.mxu0 0
  %2297 = vmatpush1.bf16.msra.mxu0 0
  %2298 = vmatprep.subr.bf16.mxu0 0
  %2299 = vmatpush1.bf16.msra.mxu0 0
  %2300 = vmatprep.subr.bf16.mxu0 0
  %2301 = vmatpush1.bf16.msra.mxu0 0
  %2302 = vmatprep.subr.bf16.mxu0 0
  %2303 = vmatpush1.bf16.msra.mxu0 0
  %2304 = vmatprep.subr.bf16.mxu0 0
  %2305 = vmatpush1.bf16.msra.mxu0 0
  %2306 = vmatprep.subr.bf16.mxu0 0
  %2307 = vmatpush1.bf16.msra.mxu0 0
  %2308 = vmatprep.mubr.bf16.mxu0 0
  %2309 = vmatmul.mubr.bf16.gmra.mrb[0].mxu0 %v2274
  %v2310 = vpop.f32.mrb[0].mxu0
  %v2311 = vadd.f32 %v684, %v2310
  %v2312 = vpop.f32.mrb[0].mxu0
  %v2313 = vpop.f32.mrb[0].mxu0
  %v2314 = vpop.f32.mrb[0].mxu0
  %2315 = vdwg.mxu0
  %v2316 = vmul.f32 %v2311, %v492
  %v2317 = vxor.u32 %v2316, 2147483648
  %v2318 = vmul.f32 %v2317, 1.442695
  %v2319 = vpow.pop %v2318
  %v2320 = vadd.f32 %v2319, 1.0
  %v2321 = vrcp.pop %v2320
  %v2322 = vmul.f32 1.0, %v2321
  %v2323 = vmul.f32 %v2322, 2.0
  %v2324 = vsub.f32 %v2323, 1.0
  %v2325 = vmul.f32 %v2322, %v2171
  %2327 = vrot.lane.b32.xlu0 %v2324, 64
  %v2328 = vpop.permute.xlu0 %2327
  %v2330 = vmul.f32 %v2322, %v2328
  %2332 = vrot.lane.b32.xlu0 %v2330, 32
  %v2333 = vpop.permute.xlu0 %2332
  %v2335 = vadd.f32 %v2325, %v2333
  %v2336 = vtanh.pop %v2335
  %2338 = vrot.lane.b32.xlu0 %v2336, 64
  %v2339 = vpop.permute.xlu0 %2338
  %v2341 = vmul.f32 %v2322, %v2339
  %s2342 = scalar_lea.vmem %s1, 24
  %v2343 = vld [vmem:[%s2342] sm:$0xff]
  %2345 = vrot.lane.b32.xlu0 %v2343, 96
  %v2346 = vpop.permute.xlu0 %2345
  %v2348 = vadd.f32 %v2341, %v2346
  %2349 = vrot.lane.b32.xlu0 %v1850, 32
  %v2350 = vpop.permute.xlu0 %2349
  %2352 = vrot.lane.b32.xlu0 %v2177, 96
  %v2353 = vpop.permute.xlu0 %2352
  %v2355 = vsel %vm237, %v2350, %v2105
  %v2356 = vsel %vm710, %v2355, %v2353
  %vm2357 = vcmask 785408
  %v2358 = vsel %vm2357, %v2356, %v2341
  %2359 = vst [vmem:[%s17] sm:$0xff] %v2358
  %2360 = vrot.lane.b32.xlu0 %v2020, 64
  %v2361 = vpop.permute.xlu0 %2360
  %2363 = vrot.lane.b32.xlu0 %v2184, 96
  %v2364 = vpop.permute.xlu0 %2363
  %v2366 = vsel %vm237, %v1859, %v2361
  %v2367 = vsel %vm710, %v2366, %v2364
  %v2368 = vsel %vm2357, %v2367, %v2348
  %2369 = vst [vmem:[%s18] sm:$0xff] %v2368
  %2371 = vrot.lane.b32.xlu0 %v2348, 32
  %v2372 = vpop.permute.xlu0 %2371
  %v2374 = vld [vmem:[%s10] sm:$0xf]
  %v2375 = vld [vmem:[%s10 + $0x4] sm:$0xf]
  %v2376 = vld [vmem:[%s10 + $0x8] sm:$0xf]
  %v2377 = vld [vmem:[%s10 + $0xc] sm:$0xf]
  %v2378 = vpack.c.bf16 %v2023, %v1859
  %v2379 = vpack.c.bf16 %v2372, %v2187
  %v2380 = vld [vmem:[%s11] sm:$0x1]
  %v2382 = vlaneseq
  %v2383 = vshrl.u32 %v2382, 7
  %v2384 = vsub.s32 0, %v2383
  %v2385 = vrot.slane %v2380, %v2384
  %v2391 = vunpack.c.l.b16 %v2374
  %v2392 = vunpack.c.l.b16 %v2375
  %v2393 = vunpack.c.l.b16 %v2376
  %v2394 = vunpack.c.l.b16 %v2377
  %v2395 = vpack.c.b16 %v2392, %v2391
  %v2396 = vpack.c.b16 %v2394, %v2393
  %v2400 = vsel %vm237, %v2378, 0
  %v2403 = vsel %vm237, %v2379, 0
  %2405 = vmatprep.subr.bf16.mxu0 0
  %2406 = vmatpush1.bf16.msra.mxu0 %v2395
  %2407 = vmatprep.subr.bf16.mxu0 0
  %2408 = vmatpush1.bf16.msra.mxu0 %v2396
  %2409 = vmatprep.subr.bf16.mxu0 0
  %2410 = vmatpush1.bf16.msra.mxu0 0
  %2411 = vmatprep.subr.bf16.mxu0 0
  %2412 = vmatpush1.bf16.msra.mxu0 0
  %2413 = vmatprep.subr.bf16.mxu0 0
  %2414 = vmatpush1.bf16.msra.mxu0 0
  %2415 = vmatprep.subr.bf16.mxu0 0
  %2416 = vmatpush1.bf16.msra.mxu0 0
  %2417 = vmatprep.subr.bf16.mxu0 0
  %2418 = vmatpush1.bf16.msra.mxu0 0
  %2419 = vmatprep.subr.bf16.mxu0 0
  %2420 = vmatpush1.bf16.msra.mxu0 0
  %2421 = vmatprep.subr.bf16.mxu0 0
  %2422 = vmatpush1.bf16.msra.mxu0 0
  %2423 = vmatprep.subr.bf16.mxu0 0
  %2424 = vmatpush1.bf16.msra.mxu0 0
  %2425 = vmatprep.subr.bf16.mxu0 0
  %2426 = vmatpush1.bf16.msra.mxu0 0
  %2427 = vmatprep.subr.bf16.mxu0 0
  %2428 = vmatpush1.bf16.msra.mxu0 0
  %2429 = vmatprep.subr.bf16.mxu0 0
  %2430 = vmatpush1.bf16.msra.mxu0 0
  %2431 = vmatprep.subr.bf16.mxu0 0
  %2432 = vmatpush1.bf16.msra.mxu0 0
  %2433 = vmatprep.subr.bf16.mxu0 0
  %2434 = vmatpush1.bf16.msra.mxu0 0
  %2435 = vmatprep.subr.bf16.mxu0 0
  %2436 = vmatpush1.bf16.msra.mxu0 0
  %2437 = vmatprep.mubr.bf16.mxu0 0
  %2438 = vmatmul.mubr.bf16.gmra.mrb[0].mxu0 %v516
  %v2439 = vpop.f32.mrb[0].mxu0
  %v2440 = vadd.f32 %v2385, %v2439
  %v2441 = vpop.f32.mrb[0].mxu0
  %v2442 = vpop.f32.mrb[0].mxu0
  %v2443 = vadd.f32 %v2385, %v2442
  %v2444 = vpop.f32.mrb[0].mxu0
  %2445 = vmatprep.mubr.bf16.mxu0 0
  %2446 = vmatmul.mubr.bf16.gmra.mrb[0].mxu0 %v519
  %v2447 = vpop.f32.mrb[0].mxu0
  %v2448 = vadd.f32 %v2385, %v2447
  %v2449 = vpop.f32.mrb[0].mxu0
  %v2450 = vpop.f32.mrb[0].mxu0
  %v2451 = vadd.f32 %v2385, %v2450
  %v2452 = vpop.f32.mrb[0].mxu0
  %2453 = vmatprep.mubr.bf16.mxu0 0
  %2454 = vmatmul.mubr.bf16.gmra.mrb[0].mxu0 %v522
  %v2455 = vpop.f32.mrb[0].mxu0
  %v2456 = vadd.f32 %v2385, %v2455
  %v2457 = vpop.f32.mrb[0].mxu0
  %v2458 = vpop.f32.mrb[0].mxu0
  %v2459 = vadd.f32 %v2385, %v2458
  %v2460 = vpop.f32.mrb[0].mxu0
  %2461 = vmatprep.mubr.bf16.mxu0 0
  %2462 = vmatmul.mubr.bf16.gmra.mrb[0].mxu0 %v525
  %v2463 = vpop.f32.mrb[0].mxu0
  %v2464 = vadd.f32 %v2385, %v2463
  %v2465 = vpop.f32.mrb[0].mxu0
  %v2466 = vpop.f32.mrb[0].mxu0
  %v2467 = vadd.f32 %v2385, %v2466
  %v2468 = vpop.f32.mrb[0].mxu0
  %2469 = vmatprep.mubr.bf16.mxu0 0
  %2470 = vmatmul.mubr.bf16.gmra.mrb[0].mxu0 %v2400
  %v2471 = vpop.f32.mrb[0].mxu0
  %v2472 = vadd.f32 %v2385, %v2471
  %v2473 = vpop.f32.mrb[0].mxu0
  %v2474 = vpop.f32.mrb[0].mxu0
  %v2475 = vadd.f32 %v2385, %v2474
  %v2476 = vpop.f32.mrb[0].mxu0
  %2477 = vmatprep.mubr.bf16.mxu0 0
  %2478 = vmatmul.mubr.bf16.gmra.mrb[0].mxu0 %v2403
  %v2479 = vpop.f32.mrb[0].mxu0
  %v2480 = vadd.f32 %v2385, %v2479
  %v2481 = vpop.f32.mrb[0].mxu0
  %v2482 = vpop.f32.mrb[0].mxu0
  %v2483 = vadd.f32 %v2385, %v2482
  %v2484 = vpop.f32.mrb[0].mxu0
  %2485 = vdwg.mxu0
  %vm2486 = vcmp.gt.f32.partialorder %v2440, 0.0
  %vm2487 = vcmp.gt.f32.partialorder %v2443, 0.0
  %vm2488 = vcmp.gt.f32.partialorder %v2448, 0.0
  %vm2489 = vcmp.gt.f32.partialorder %v2451, 0.0
  %vm2490 = vcmp.gt.f32.partialorder %v2456, 0.0
  %vm2491 = vcmp.gt.f32.partialorder %v2459, 0.0
  %vm2492 = vcmp.gt.f32.partialorder %v2464, 0.0
  %vm2493 = vcmp.gt.f32.partialorder %v2467, 0.0
  %vm2494 = vcmp.gt.f32.partialorder %v2472, 0.0
  %vm2495 = vcmp.gt.f32.partialorder %v2475, 0.0
  %vm2496 = vcmp.gt.f32.partialorder %v2480, 0.0
  %vm2497 = vcmp.gt.f32.partialorder %v2483, 0.0
  %v2498 = vmin.f32 %v2440, 0.0
  %v2499 = vmin.f32 %v2443, 0.0
  %v2500 = vmin.f32 %v2448, 0.0
  %v2501 = vmin.f32 %v2451, 0.0
  %v2502 = vmin.f32 %v2456, 0.0
  %v2503 = vmin.f32 %v2459, 0.0
  %v2504 = vmin.f32 %v2464, 0.0
  %v2505 = vmin.f32 %v2467, 0.0
  %v2506 = vmin.f32 %v2472, 0.0
  %v2507 = vmin.f32 %v2475, 0.0
  %v2508 = vmin.f32 %v2480, 0.0
  %v2509 = vmin.f32 %v2483, 0.0
  %v2510 = vmul.f32 %v2498, 1.442695
  %v2511 = vpow.pop %v2510
  %v2512 = vmul.f32 %v2499, 1.442695
  %v2513 = vpow.pop %v2512
  %v2514 = vmul.f32 %v2500, 1.442695
  %v2515 = vpow.pop %v2514
  %v2516 = vmul.f32 %v2501, 1.442695
  %v2517 = vpow.pop %v2516
  %v2518 = vmul.f32 %v2502, 1.442695
  %v2519 = vpow.pop %v2518
  %v2520 = vmul.f32 %v2503, 1.442695
  %v2521 = vpow.pop %v2520
  %v2522 = vmul.f32 %v2504, 1.442695
  %v2523 = vpow.pop %v2522
  %v2524 = vmul.f32 %v2505, 1.442695
  %v2525 = vpow.pop %v2524
  %v2526 = vmul.f32 %v2506, 1.442695
  %v2527 = vpow.pop %v2526
  %v2528 = vmul.f32 %v2507, 1.442695
  %v2529 = vpow.pop %v2528
  %v2530 = vmul.f32 %v2508, 1.442695
  %v2531 = vpow.pop %v2530
  %v2532 = vmul.f32 %v2509, 1.442695
  %v2533 = vpow.pop %v2532
  %v2534 = vsub.f32 %v2511, 1.0
  %v2535 = vsub.f32 %v2513, 1.0
  %v2536 = vsub.f32 %v2515, 1.0
  %v2537 = vsub.f32 %v2517, 1.0
  %v2538 = vsub.f32 %v2519, 1.0
  %v2539 = vsub.f32 %v2521, 1.0
  %v2540 = vsub.f32 %v2523, 1.0
  %v2541 = vsub.f32 %v2525, 1.0
  %v2542 = vsub.f32 %v2527, 1.0
  %v2543 = vsub.f32 %v2529, 1.0
  %v2544 = vsub.f32 %v2531, 1.0
  %v2545 = vsub.f32 %v2533, 1.0
  %v2546 = vsel %vm2486, %v2440, %v2534
  %v2547 = vsel %vm2487, %v2443, %v2535
  %v2548 = vsel %vm2488, %v2448, %v2536
  %v2549 = vsel %vm2489, %v2451, %v2537
  %v2550 = vsel %vm2490, %v2456, %v2538
  %v2551 = vsel %vm2491, %v2459, %v2539
  %v2552 = vsel %vm2492, %v2464, %v2540
  %v2553 = vsel %vm2493, %v2467, %v2541
  %v2554 = vsel %vm2494, %v2472, %v2542
  %v2555 = vsel %vm2495, %v2475, %v2543
  %v2556 = vsel %vm2496, %v2480, %v2544
  %v2557 = vsel %vm2497, %v2483, %v2545
  %v2558 = vld [vmem:[%s12] sm:$0xf]
  %v2559 = vld [vmem:[%s12 + $0x4] sm:$0xf]
  %v2560 = vld [vmem:[%s12 + $0x8] sm:$0xf]
  %v2561 = vld [vmem:[%s12 + $0xc] sm:$0xf]
  %v2562 = vpack.c.bf16 %v2547, %v2546
  %v2563 = vpack.c.bf16 %v2549, %v2548
  %v2564 = vpack.c.bf16 %v2551, %v2550
  %v2565 = vpack.c.bf16 %v2553, %v2552
  %v2566 = vpack.c.bf16 %v2555, %v2554
  %v2567 = vpack.c.bf16 %v2557, %v2556
  %v2568 = vld [vmem:[%s13] sm:$0x1]
  %v2570 = vlaneseq
  %v2571 = vshrl.u32 %v2570, 7
  %v2572 = vsub.s32 0, %v2571
  %v2573 = vrot.slane %v2568, %v2572
  %v2579 = vunpack.c.l.b16 %v2558
  %v2580 = vunpack.c.l.b16 %v2559
  %v2581 = vunpack.c.l.b16 %v2560
  %v2582 = vunpack.c.l.b16 %v2561
  %v2583 = vpack.c.b16 %v2580, %v2579
  %v2584 = vpack.c.b16 %v2582, %v2581
  %v2588 = vsel %vm237, %v2562, 0
  %v2591 = vsel %vm237, %v2563, 0
  %v2594 = vsel %vm237, %v2564, 0
  %v2597 = vsel %vm237, %v2565, 0
  %v2600 = vsel %vm237, %v2566, 0
  %v2603 = vsel %vm237, %v2567, 0
  %2605 = vmatprep.subr.bf16.mxu0 0
  %2606 = vmatpush1.bf16.msra.mxu0 %v2583
  %2607 = vmatprep.subr.bf16.mxu0 0
  %2608 = vmatpush1.bf16.msra.mxu0 %v2584
  %2609 = vmatprep.subr.bf16.mxu0 0
  %2610 = vmatpush1.bf16.msra.mxu0 0
  %2611 = vmatprep.subr.bf16.mxu0 0
  %2612 = vmatpush1.bf16.msra.mxu0 0
  %2613 = vmatprep.subr.bf16.mxu0 0
  %2614 = vmatpush1.bf16.msra.mxu0 0
  %2615 = vmatprep.subr.bf16.mxu0 0
  %2616 = vmatpush1.bf16.msra.mxu0 0
  %2617 = vmatprep.subr.bf16.mxu0 0
  %2618 = vmatpush1.bf16.msra.mxu0 0
  %2619 = vmatprep.subr.bf16.mxu0 0
  %2620 = vmatpush1.bf16.msra.mxu0 0
  %2621 = vmatprep.subr.bf16.mxu0 0
  %2622 = vmatpush1.bf16.msra.mxu0 0
  %2623 = vmatprep.subr.bf16.mxu0 0
  %2624 = vmatpush1.bf16.msra.mxu0 0
  %2625 = vmatprep.subr.bf16.mxu0 0
  %2626 = vmatpush1.bf16.msra.mxu0 0
  %2627 = vmatprep.subr.bf16.mxu0 0
  %2628 = vmatpush1.bf16.msra.mxu0 0
  %2629 = vmatprep.subr.bf16.mxu0 0
  %2630 = vmatpush1.bf16.msra.mxu0 0
  %2631 = vmatprep.subr.bf16.mxu0 0
  %2632 = vmatpush1.bf16.msra.mxu0 0
  %2633 = vmatprep.subr.bf16.mxu0 0
  %2634 = vmatpush1.bf16.msra.mxu0 0
  %2635 = vmatprep.subr.bf16.mxu0 0
  %2636 = vmatpush1.bf16.msra.mxu0 0
  %2637 = vmatprep.mubr.bf16.mxu0 0
  %2638 = vmatmul.mubr.bf16.gmra.mrb[0].mxu0 %v2588
  %v2639 = vpop.f32.mrb[0].mxu0
  %v2640 = vadd.f32 %v2573, %v2639
  %v2641 = vpop.f32.mrb[0].mxu0
  %v2642 = vpop.f32.mrb[0].mxu0
  %v2643 = vadd.f32 %v2573, %v2642
  %v2644 = vpop.f32.mrb[0].mxu0
  %2645 = vmatprep.mubr.bf16.mxu0 0
  %2646 = vmatmul.mubr.bf16.gmra.mrb[0].mxu0 %v2591
  %v2647 = vpop.f32.mrb[0].mxu0
  %v2648 = vadd.f32 %v2573, %v2647
  %v2649 = vpop.f32.mrb[0].mxu0
  %v2650 = vpop.f32.mrb[0].mxu0
  %v2651 = vadd.f32 %v2573, %v2650
  %v2652 = vpop.f32.mrb[0].mxu0
  %2653 = vmatprep.mubr.bf16.mxu0 0
  %2654 = vmatmul.mubr.bf16.gmra.mrb[0].mxu0 %v2594
  %v2655 = vpop.f32.mrb[0].mxu0
  %v2656 = vadd.f32 %v2573, %v2655
  %v2657 = vpop.f32.mrb[0].mxu0
  %v2658 = vpop.f32.mrb[0].mxu0
  %v2659 = vadd.f32 %v2573, %v2658
  %v2660 = vpop.f32.mrb[0].mxu0
  %2661 = vmatprep.mubr.bf16.mxu0 0
  %2662 = vmatmul.mubr.bf16.gmra.mrb[0].mxu0 %v2597
  %v2663 = vpop.f32.mrb[0].mxu0
  %v2664 = vadd.f32 %v2573, %v2663
  %v2665 = vpop.f32.mrb[0].mxu0
  %v2666 = vpop.f32.mrb[0].mxu0
  %v2667 = vadd.f32 %v2573, %v2666
  %v2668 = vpop.f32.mrb[0].mxu0
  %2669 = vmatprep.mubr.bf16.mxu0 0
  %2670 = vmatmul.mubr.bf16.gmra.mrb[0].mxu0 %v2600
  %v2671 = vpop.f32.mrb[0].mxu0
  %v2672 = vadd.f32 %v2573, %v2671
  %v2673 = vpop.f32.mrb[0].mxu0
  %v2674 = vpop.f32.mrb[0].mxu0
  %v2675 = vadd.f32 %v2573, %v2674
  %v2676 = vpop.f32.mrb[0].mxu0
  %2677 = vmatprep.mubr.bf16.mxu0 0
  %2678 = vmatmul.mubr.bf16.gmra.mrb[0].mxu0 %v2603
  %v2679 = vpop.f32.mrb[0].mxu0
  %v2680 = vadd.f32 %v2573, %v2679
  %v2681 = vpop.f32.mrb[0].mxu0
  %v2682 = vpop.f32.mrb[0].mxu0
  %v2683 = vadd.f32 %v2573, %v2682
  %v2684 = vpop.f32.mrb[0].mxu0
  %2685 = vdwg.mxu0
  %vm2686 = vcmp.gt.f32.partialorder %v2640, 0.0
  %vm2687 = vcmp.gt.f32.partialorder %v2643, 0.0
  %vm2688 = vcmp.gt.f32.partialorder %v2648, 0.0
  %vm2689 = vcmp.gt.f32.partialorder %v2651, 0.0
  %vm2690 = vcmp.gt.f32.partialorder %v2656, 0.0
  %vm2691 = vcmp.gt.f32.partialorder %v2659, 0.0
  %vm2692 = vcmp.gt.f32.partialorder %v2664, 0.0
  %vm2693 = vcmp.gt.f32.partialorder %v2667, 0.0
  %vm2694 = vcmp.gt.f32.partialorder %v2672, 0.0
  %vm2695 = vcmp.gt.f32.partialorder %v2675, 0.0
  %vm2696 = vcmp.gt.f32.partialorder %v2680, 0.0
  %vm2697 = vcmp.gt.f32.partialorder %v2683, 0.0
  %v2698 = vmin.f32 %v2640, 0.0
  %v2699 = vmin.f32 %v2643, 0.0
  %v2700 = vmin.f32 %v2648, 0.0
  %v2701 = vmin.f32 %v2651, 0.0
  %v2702 = vmin.f32 %v2656, 0.0
  %v2703 = vmin.f32 %v2659, 0.0
  %v2704 = vmin.f32 %v2664, 0.0
  %v2705 = vmin.f32 %v2667, 0.0
  %v2706 = vmin.f32 %v2672, 0.0
  %v2707 = vmin.f32 %v2675, 0.0
  %v2708 = vmin.f32 %v2680, 0.0
  %v2709 = vmin.f32 %v2683, 0.0
  %v2710 = vmul.f32 %v2698, 1.442695
  %v2711 = vpow.pop %v2710
  %v2712 = vmul.f32 %v2699, 1.442695
  %v2713 = vpow.pop %v2712
  %v2714 = vmul.f32 %v2700, 1.442695
  %v2715 = vpow.pop %v2714
  %v2716 = vmul.f32 %v2701, 1.442695
  %v2717 = vpow.pop %v2716
  %v2718 = vmul.f32 %v2702, 1.442695
  %v2719 = vpow.pop %v2718
  %v2720 = vmul.f32 %v2703, 1.442695
  %v2721 = vpow.pop %v2720
  %v2722 = vmul.f32 %v2704, 1.442695
  %v2723 = vpow.pop %v2722
  %v2724 = vmul.f32 %v2705, 1.442695
  %v2725 = vpow.pop %v2724
  %v2726 = vmul.f32 %v2706, 1.442695
  %v2727 = vpow.pop %v2726
  %v2728 = vmul.f32 %v2707, 1.442695
  %v2729 = vpow.pop %v2728
  %v2730 = vmul.f32 %v2708, 1.442695
  %v2731 = vpow.pop %v2730
  %v2732 = vmul.f32 %v2709, 1.442695
  %v2733 = vpow.pop %v2732
  %v2734 = vsub.f32 %v2711, 1.0
  %v2735 = vsub.f32 %v2713, 1.0
  %v2736 = vsub.f32 %v2715, 1.0
  %v2737 = vsub.f32 %v2717, 1.0
  %v2738 = vsub.f32 %v2719, 1.0
  %v2739 = vsub.f32 %v2721, 1.0
  %v2740 = vsub.f32 %v2723, 1.0
  %v2741 = vsub.f32 %v2725, 1.0
  %v2742 = vsub.f32 %v2727, 1.0
  %v2743 = vsub.f32 %v2729, 1.0
  %v2744 = vsub.f32 %v2731, 1.0
  %v2745 = vsub.f32 %v2733, 1.0
  %v2746 = vsel %vm2686, %v2640, %v2734
  %v2747 = vsel %vm2687, %v2643, %v2735
  %v2748 = vsel %vm2688, %v2648, %v2736
  %v2749 = vsel %vm2689, %v2651, %v2737
  %v2750 = vsel %vm2690, %v2656, %v2738
  %v2751 = vsel %vm2691, %v2659, %v2739
  %v2752 = vsel %vm2692, %v2664, %v2740
  %v2753 = vsel %vm2693, %v2667, %v2741
  %v2754 = vsel %vm2694, %v2672, %v2742
  %v2755 = vsel %vm2695, %v2675, %v2743
  %v2756 = vsel %vm2696, %v2680, %v2744
  %v2757 = vsel %vm2697, %v2683, %v2745
  %v2758 = vld [vmem:[%s14] sm:$0xf]
  %v2759 = vld [vmem:[%s14 + $0x4] sm:$0xf]
  %v2760 = vld [vmem:[%s14 + $0x8] sm:$0xf]
  %v2761 = vld [vmem:[%s14 + $0xc] sm:$0xf]
  %v2762 = vpack.c.bf16 %v2747, %v2746
  %v2763 = vpack.c.bf16 %v2749, %v2748
  %v2764 = vpack.c.bf16 %v2751, %v2750
  %v2765 = vpack.c.bf16 %v2753, %v2752
  %v2766 = vpack.c.bf16 %v2755, %v2754
  %v2767 = vpack.c.bf16 %v2757, %v2756
  %v2768 = vld [vmem:[%s15] sm:$0x1]
  %v2770 = vlaneseq
  %v2771 = vshrl.u32 %v2770, 7
  %v2772 = vsub.s32 0, %v2771
  %v2773 = vrot.slane %v2768, %v2772
  %v2779 = vunpack.c.l.b16 %v2758
  %v2780 = vunpack.c.l.b16 %v2759
  %v2781 = vunpack.c.l.b16 %v2760
  %v2782 = vunpack.c.l.b16 %v2761
  %v2783 = vpack.c.b16 %v2780, %v2779
  %v2784 = vpack.c.b16 %v2782, %v2781
  %v2788 = vsel %vm237, %v2762, 0
  %v2791 = vsel %vm237, %v2763, 0
  %v2794 = vsel %vm237, %v2764, 0
  %v2797 = vsel %vm237, %v2765, 0
  %v2800 = vsel %vm237, %v2766, 0
  %v2803 = vsel %vm237, %v2767, 0
  %2805 = vmatprep.subr.bf16.mxu0 0
  %2806 = vmatpush1.bf16.msra.mxu0 %v2783
  %2807 = vmatprep.subr.bf16.mxu0 0
  %2808 = vmatpush1.bf16.msra.mxu0 %v2784
  %2809 = vmatprep.subr.bf16.mxu0 0
  %2810 = vmatpush1.bf16.msra.mxu0 0
  %2811 = vmatprep.subr.bf16.mxu0 0
  %2812 = vmatpush1.bf16.msra.mxu0 0
  %2813 = vmatprep.subr.bf16.mxu0 0
  %2814 = vmatpush1.bf16.msra.mxu0 0
  %2815 = vmatprep.subr.bf16.mxu0 0
  %2816 = vmatpush1.bf16.msra.mxu0 0
  %2817 = vmatprep.subr.bf16.mxu0 0
  %2818 = vmatpush1.bf16.msra.mxu0 0
  %2819 = vmatprep.subr.bf16.mxu0 0
  %2820 = vmatpush1.bf16.msra.mxu0 0
  %2821 = vmatprep.subr.bf16.mxu0 0
  %2822 = vmatpush1.bf16.msra.mxu0 0
  %2823 = vmatprep.subr.bf16.mxu0 0
  %2824 = vmatpush1.bf16.msra.mxu0 0
  %2825 = vmatprep.subr.bf16.mxu0 0
  %2826 = vmatpush1.bf16.msra.mxu0 0
  %2827 = vmatprep.subr.bf16.mxu0 0
  %2828 = vmatpush1.bf16.msra.mxu0 0
  %2829 = vmatprep.subr.bf16.mxu0 0
  %2830 = vmatpush1.bf16.msra.mxu0 0
  %2831 = vmatprep.subr.bf16.mxu0 0
  %2832 = vmatpush1.bf16.msra.mxu0 0
  %2833 = vmatprep.subr.bf16.mxu0 0
  %2834 = vmatpush1.bf16.msra.mxu0 0
  %2835 = vmatprep.subr.bf16.mxu0 0
  %2836 = vmatpush1.bf16.msra.mxu0 0
  %2837 = vmatprep.mubr.bf16.mxu0 0
  %2838 = vmatmul.mubr.bf16.gmra.mrb[0].mxu0 %v2788
  %v2839 = vpop.f32.mrb[0].mxu0
  %v2840 = vadd.f32 %v2773, %v2839
  %v2841 = vpop.f32.mrb[0].mxu0
  %v2842 = vpop.f32.mrb[0].mxu0
  %v2843 = vadd.f32 %v2773, %v2842
  %v2844 = vpop.f32.mrb[0].mxu0
  %2845 = vmatprep.mubr.bf16.mxu0 0
  %2846 = vmatmul.mubr.bf16.gmra.mrb[0].mxu0 %v2791
  %v2847 = vpop.f32.mrb[0].mxu0
  %v2848 = vadd.f32 %v2773, %v2847
  %v2849 = vpop.f32.mrb[0].mxu0
  %v2850 = vpop.f32.mrb[0].mxu0
  %v2851 = vadd.f32 %v2773, %v2850
  %v2852 = vpop.f32.mrb[0].mxu0
  %2853 = vmatprep.mubr.bf16.mxu0 0
  %2854 = vmatmul.mubr.bf16.gmra.mrb[0].mxu0 %v2794
  %v2855 = vpop.f32.mrb[0].mxu0
  %v2856 = vadd.f32 %v2773, %v2855
  %v2857 = vpop.f32.mrb[0].mxu0
  %v2858 = vpop.f32.mrb[0].mxu0
  %v2859 = vadd.f32 %v2773, %v2858
  %v2860 = vpop.f32.mrb[0].mxu0
  %2861 = vmatprep.mubr.bf16.mxu0 0
  %2862 = vmatmul.mubr.bf16.gmra.mrb[0].mxu0 %v2797
  %v2863 = vpop.f32.mrb[0].mxu0
  %v2864 = vadd.f32 %v2773, %v2863
  %v2865 = vpop.f32.mrb[0].mxu0
  %v2866 = vpop.f32.mrb[0].mxu0
  %v2867 = vadd.f32 %v2773, %v2866
  %v2868 = vpop.f32.mrb[0].mxu0
  %2869 = vmatprep.mubr.bf16.mxu0 0
  %2870 = vmatmul.mubr.bf16.gmra.mrb[0].mxu0 %v2800
  %v2871 = vpop.f32.mrb[0].mxu0
  %v2872 = vadd.f32 %v2773, %v2871
  %v2873 = vpop.f32.mrb[0].mxu0
  %v2874 = vpop.f32.mrb[0].mxu0
  %v2875 = vadd.f32 %v2773, %v2874
  %v2876 = vpop.f32.mrb[0].mxu0
  %2877 = vmatprep.mubr.bf16.mxu0 0
  %2878 = vmatmul.mubr.bf16.gmra.mrb[0].mxu0 %v2803
  %v2879 = vpop.f32.mrb[0].mxu0
  %v2880 = vadd.f32 %v2773, %v2879
  %v2881 = vpop.f32.mrb[0].mxu0
  %v2882 = vpop.f32.mrb[0].mxu0
  %v2883 = vadd.f32 %v2773, %v2882
  %v2884 = vpop.f32.mrb[0].mxu0
  %2885 = vdwg.mxu0
  %v2886 = vmax.f32 %v2840, 0.0
  %v2887 = vmax.f32 %v2843, 0.0
  %v2888 = vmax.f32 %v2848, 0.0
  %v2889 = vmax.f32 %v2851, 0.0
  %v2890 = vmax.f32 %v2856, 0.0
  %v2891 = vmax.f32 %v2859, 0.0
  %v2892 = vmax.f32 %v2864, 0.0
  %v2893 = vmax.f32 %v2867, 0.0
  %v2894 = vmax.f32 %v2872, 0.0
  %v2895 = vmax.f32 %v2875, 0.0
  %v2896 = vmax.f32 %v2880, 0.0
  %v2897 = vmax.f32 %v2883, 0.0
  %v2898 = vand.u32 2147483647, %v2840
  %v2899 = vand.u32 2147483647, %v2843
  %v2900 = vand.u32 2147483647, %v2848
  %v2901 = vand.u32 2147483647, %v2851
  %v2902 = vand.u32 2147483647, %v2856
  %v2903 = vand.u32 2147483647, %v2859
  %v2904 = vand.u32 2147483647, %v2864
  %v2905 = vand.u32 2147483647, %v2867
  %v2906 = vand.u32 2147483647, %v2872
  %v2907 = vand.u32 2147483647, %v2875
  %v2908 = vand.u32 2147483647, %v2880
  %v2909 = vand.u32 2147483647, %v2883
  %v2910 = vsub.f32 0.0, %v2898
  %v2911 = vsub.f32 0.0, %v2899
  %v2912 = vsub.f32 0.0, %v2900
  %v2913 = vsub.f32 0.0, %v2901
  %v2914 = vsub.f32 0.0, %v2902
  %v2915 = vsub.f32 0.0, %v2903
  %v2916 = vsub.f32 0.0, %v2904
  %v2917 = vsub.f32 0.0, %v2905
  %v2918 = vsub.f32 0.0, %v2906
  %v2919 = vsub.f32 0.0, %v2907
  %v2920 = vsub.f32 0.0, %v2908
  %v2921 = vsub.f32 0.0, %v2909
  %v2922 = vmul.f32 %v2910, 1.442695
  %v2923 = vpow.pop %v2922
  %v2924 = vmul.f32 %v2911, 1.442695
  %v2925 = vpow.pop %v2924
  %v2926 = vmul.f32 %v2912, 1.442695
  %v2927 = vpow.pop %v2926
  %v2928 = vmul.f32 %v2913, 1.442695
  %v2929 = vpow.pop %v2928
  %v2930 = vmul.f32 %v2914, 1.442695
  %v2931 = vpow.pop %v2930
  %v2932 = vmul.f32 %v2915, 1.442695
  %v2933 = vpow.pop %v2932
  %v2934 = vmul.f32 %v2916, 1.442695
  %v2935 = vpow.pop %v2934
  %v2936 = vmul.f32 %v2917, 1.442695
  %v2937 = vpow.pop %v2936
  %v2938 = vmul.f32 %v2918, 1.442695
  %v2939 = vpow.pop %v2938
  %v2940 = vmul.f32 %v2919, 1.442695
  %v2941 = vpow.pop %v2940
  %v2942 = vmul.f32 %v2920, 1.442695
  %v2943 = vpow.pop %v2942
  %v2944 = vmul.f32 %v2921, 1.442695
  %v2945 = vpow.pop %v2944
  %v2946 = vadd.f32 %v2923, 1.0
  %v2947 = vadd.f32 %v2925, 1.0
  %v2948 = vadd.f32 %v2927, 1.0
  %v2949 = vadd.f32 %v2929, 1.0
  %v2950 = vadd.f32 %v2931, 1.0
  %v2951 = vadd.f32 %v2933, 1.0
  %v2952 = vadd.f32 %v2935, 1.0
  %v2953 = vadd.f32 %v2937, 1.0
  %v2954 = vadd.f32 %v2939, 1.0
  %v2955 = vadd.f32 %v2941, 1.0
  %v2956 = vadd.f32 %v2943, 1.0
  %v2957 = vadd.f32 %v2945, 1.0
  %v2958 = vlog2.pop %v2946
  %v2959 = vmul.f32 %v2958, 0.6931472
  %v2960 = vlog2.pop %v2947
  %v2961 = vmul.f32 %v2960, 0.6931472
  %v2962 = vlog2.pop %v2948
  %v2963 = vmul.f32 %v2962, 0.6931472
  %v2964 = vlog2.pop %v2949
  %v2965 = vmul.f32 %v2964, 0.6931472
  %v2966 = vlog2.pop %v2950
  %v2967 = vmul.f32 %v2966, 0.6931472
  %v2968 = vlog2.pop %v2951
  %v2969 = vmul.f32 %v2968, 0.6931472
  %v2970 = vlog2.pop %v2952
  %v2971 = vmul.f32 %v2970, 0.6931472
  %v2972 = vlog2.pop %v2953
  %v2973 = vmul.f32 %v2972, 0.6931472
  %v2974 = vlog2.pop %v2954
  %v2975 = vmul.f32 %v2974, 0.6931472
  %v2976 = vlog2.pop %v2955
  %v2977 = vmul.f32 %v2976, 0.6931472
  %v2978 = vlog2.pop %v2956
  %v2979 = vmul.f32 %v2978, 0.6931472
  %v2980 = vlog2.pop %v2957
  %v2981 = vmul.f32 %v2980, 0.6931472
  %v2982 = vadd.f32 %v2886, %v2959
  %v2983 = vadd.f32 %v2887, %v2961
  %v2984 = vadd.f32 %v2888, %v2963
  %v2985 = vadd.f32 %v2889, %v2965
  %v2986 = vadd.f32 %v2890, %v2967
  %v2987 = vadd.f32 %v2891, %v2969
  %v2988 = vadd.f32 %v2892, %v2971
  %v2989 = vadd.f32 %v2893, %v2973
  %v2990 = vadd.f32 %v2894, %v2975
  %v2991 = vadd.f32 %v2895, %v2977
  %v2992 = vadd.f32 %v2896, %v2979
  %v2993 = vadd.f32 %v2897, %v2981
  %2994 = vst [vmem:[%s16] sm:$0xff] %v2982
  %2995 = vst [vmem:[%s16 + $0x8] sm:$0xff] %v2983
  %2996 = vst [vmem:[%s16 + $0x10] sm:$0xff] %v2984
  %2997 = vst [vmem:[%s16 + $0x18] sm:$0xff] %v2985
  %2998 = vst [vmem:[%s16 + $0x20] sm:$0xff] %v2986
  %2999 = vst [vmem:[%s16 + $0x28] sm:$0xff] %v2987
  %3000 = vst [vmem:[%s16 + $0x30] sm:$0xff] %v2988
  %3001 = vst [vmem:[%s16 + $0x38] sm:$0xff] %v2989
  %3002 = vst [vmem:[%s16 + $0x40] sm:$0xff] %v2990
  %3003 = vst [vmem:[%s16 + $0x48] sm:$0xff] %v2991
  %3004 = vst [vmem:[%s16 + $0x50] sm:$0xff] %v2992
  %3005 = vst [vmem:[%s16 + $0x58] sm:$0xff] %v2993
  // Predicated region
  $region66: #{tlae_forward.1} parent=0 // pred_check
    _
  $region67: #{tlae_forward.1} parent=0 // pred_check_branch
    %3007 = sbr.rel (0) target = $region69
  $region68: #{tlae_forward.1} parent=0 // pred_region
    _
  $region69: #{tlae_forward.1} parent=0 // pred_fallthru
    _
  // Predicated region
  $region70: #{tlae_forward.1} parent=0 // pred_check
    _
  $region71: #{tlae_forward.1} parent=0 // pred_check_branch
    %3009 = sbr.rel (0) target = $region73
  $region72: #{tlae_forward.1} parent=0 // pred_region
    _
  $region73: #{tlae_forward.1} parent=0 // pred_fallthru
    _
  // Predicated region
  $region74: #{tlae_forward.1} parent=0 // pred_check
    _
  $region75: #{tlae_forward.1} parent=0 // pred_check_branch
    %3011 = sbr.rel (0) target = $region77
  $region76: #{tlae_forward.1} parent=0 // pred_region
    _
  $region77: #{tlae_forward.1} parent=0 // pred_fallthru
    _
  // Predicated region
  $region78: #{tlae_forward.1} parent=0 // pred_check
    _
  $region79: #{tlae_forward.1} parent=0 // pred_check_branch
    %3013 = sbr.rel (0) target = $region81
  $region80: #{tlae_forward.1} parent=0 // pred_region
    _
  $region81: #{tlae_forward.1} parent=0 // pred_fallthru
    _
  // Predicated region
  $region82: #{tlae_forward.1} parent=0 // pred_check
    _
  $region83: #{tlae_forward.1} parent=0 // pred_check_branch
    %3015 = sbr.rel (0) target = $region85
  $region84: #{tlae_forward.1} parent=0 // pred_region
    _
  $region85: #{tlae_forward.1} parent=0 // pred_fallthru
    _
  // Predicated region
  $region86: #{tlae_forward.1} parent=0 // pred_check
    _
  $region87: #{tlae_forward.1} parent=0 // pred_check_branch
    %3017 = sbr.rel (0) target = $region89
  $region88: #{tlae_forward.1} parent=0 // pred_region
    _
  $region89: #{tlae_forward.1} parent=0 // pred_fallthru
    _

</llo_original>
